<compile_context>
chip_gen: v7x
topology: tpu7x:2x2x1
jax: 0.10.0
libtpu: 0.0.40
codegen_flags: <defaults>
</compile_context>

<pallas_src>
import functools
from math import exp

import jax
import jax.numpy as jnp
from jax import lax
from jax.experimental import pallas as pl
from jax.experimental.pallas import tpu as pltpu

_C1 = 0.01 ** 2
_C2 = 0.03 ** 2


def _gaussian_1d(window_size: int, sigma: float) -> jnp.ndarray:
    g = jnp.array(
        [exp(-((x - window_size // 2) ** 2) / float(2 * sigma ** 2))
         for x in range(window_size)],
        dtype=jnp.float32,
    )
    return g / jnp.sum(g)


def _banded_conv_matrix(g: jnp.ndarray, n_out: int, window_size: int) -> jnp.ndarray:
    """Matrix A of shape (n_out + ws - 1, n_out) with A[j+b, j] = g[b]."""
    n_in = n_out + window_size - 1
    rows = jnp.arange(n_in)[:, None]
    cols = jnp.arange(n_out)[None, :]
    diff = rows - cols
    valid = (diff >= 0) & (diff < window_size)
    idx = jnp.clip(diff, 0, window_size - 1)
    return jnp.where(valid, g[idx], 0.0).astype(jnp.float32)


def _trimmed_conv_matrix(g: jnp.ndarray, n: int, window_size: int) -> jnp.ndarray:
    """Square (n, n) matrix M with (x @ M) == zero-padded 1-D Gaussian conv of x.

    The padded rows of the banded matrix only ever multiply zeros, so dropping
    them gives an exact square form (requires odd window_size)."""
    pad = window_size // 2
    full = _banded_conv_matrix(g, n, window_size)     # (n + ws - 1, n)
    return full[pad:pad + n, :]                       # (n, n)


def _vmem_limit_bytes() -> int:
    """Generation-aware VMEM limit (v5e/v6e: 128 MiB, v7x: 64 MiB physical)."""
    try:
        cap = int(pltpu.get_tpu_info().vmem_capacity_bytes)
    except Exception:
        cap = 64 * 1024 * 1024
    return min(cap * 3 // 4, 100 * 1024 * 1024)


def _plan_grouping(n_imgs: int, h: int, w: int, vmem_budget: int):
    """Pick G (images per grid step).

    GW is capped at 256: good across v5e (MXU-bound at larger GW) and within
    ~10% of the v6e/v7x optimum, while keeping blockdiag_G(Aw) <= 256 KiB.
    Also keeps nb >= 2 whenever possible so v7x's two TensorCores can split
    the "parallel" grid axis."""
    gw_cap = 256

    def fits(g):
        gw = g * w
        # inputs (2 arrays x 2 pipeline buffers) + (5H,GW) scratch + t + ~12
        # elementwise temps + both conv matrices (x2 buffers), all f32.
        vmem = 4 * (26 * h * gw + 2 * gw * gw + 2 * h * h)
        return gw <= gw_cap and vmem <= vmem_budget

    g = 1
    for cand in range(2, n_imgs + 1):
        if not fits(cand):
            break
        g = cand
    nb = -(-n_imgs // g)
    if nb < 2 and n_imgs > 1:
        # Ensure at least 2 grid steps (v7x has 2 TensorCores; ~free elsewhere).
        g = -(-n_imgs // 2)
        nb = -(-n_imgs // g)
    return g, nb


def _ssim_kernel(x1_ref, x2_ref, aw_ref, aht_ref, out_ref, s_ref, *, img_h):
    """One grid step: SSIM-map partial sum over one lane-packed image group.

    x1_ref/x2_ref: (1, H, G*W) slabs, images packed side-by-side along lanes.
    aw_ref : (GW, GW) block-diagonal row-conv matrix (G copies of Aw).
    aht_ref: (H, H) column-conv matrix (Ah^T), applied per product (no kron).
    out_ref: (1, 1, 128) lane-dense per-block partial sum.
    s_ref  : (5H, GW) VMEM scratch holding the 5 stacked products.
    """
    h = img_h
    x1 = x1_ref[0]                                    # (H, GW)
    x2 = x2_ref[0]

    # Stack the 5 products along sublanes directly into VMEM scratch.
    # TODO(synk): pad H to a multiple of 8 for non-multiple-of-8 heights to
    # keep these slices tile-aligned (H=16 here is already aligned).
    prods = (x1, x2, x1 * x1, x2 * x2, x1 * x2)
    for k, p in enumerate(prods):
        s_ref[pl.ds(k * h, h), :] = p

    # Row (width) pass: one MXU dot covers all 5 products and all G images.
    t = jnp.dot(s_ref[...], aw_ref[...], preferred_element_type=jnp.float32,
                precision=lax.Precision.HIGHEST)      # (5H, GW)

    # Column (height) pass, de-kron'ed: 5 small dots sharing the same (H, H)
    # matrix (5x fewer MACs and 25x smaller operand than blockdiag_5).
    ahT = aht_ref[...]
    mu1, mu2, e11, e22, e12 = [
        jnp.dot(ahT, t[k * h:(k + 1) * h, :],
                preferred_element_type=jnp.float32,
                precision=lax.Precision.HIGHEST)
        for k in range(5)
    ]

    mu1_sq = mu1 * mu1
    mu2_sq = mu2 * mu2
    mu1_mu2 = mu1 * mu2
    sigma1_sq = e11 - mu1_sq
    sigma2_sq = e22 - mu2_sq
    sigma12 = e12 - mu1_mu2

    num = (2.0 * mu1_mu2 + _C1) * (2.0 * sigma12 + _C2)
    den = (mu1_sq + mu2_sq + _C1) * (sigma1_sq + sigma2_sq + _C2)
    inv = pl.reciprocal(den, approx=True)             # EUP slot, ~free
    inv = inv * (2.0 - den * inv)                     # Newton -> ~f32 accuracy
    ssim = num * inv                                  # (H, GW), lane-dense

    out_ref[...] = jnp.broadcast_to(jnp.sum(ssim), (1, 1, 128)).astype(jnp.float32)


@functools.partial(jax.jit, static_argnames=("window_size", "sigma"))
def ssim_loss(image: jnp.ndarray, target: jnp.ndarray,
              window_size: int = 11, sigma: float = 1.5) -> jnp.ndarray:
    """1 - mean(SSIM(image, target)); image/target are NCHW float arrays."""
    # TODO(synk): size_average=False (per-image mean) variant of SSIMFunc is not
    # implemented; the module default (size_average=True) is what forward() uses.
    assert image.ndim == 4, "4 dimensions required (N, C, H, W)"
    assert window_size % 2 == 1, "odd window_size required"
    B, C, H, W = image.shape
    N = B * C

    g1 = _gaussian_1d(window_size, sigma)
    aw_sq = _trimmed_conv_matrix(g1, W, window_size)           # (W, W)
    aht_sq = _trimmed_conv_matrix(g1, H, window_size).T        # (H, H)

    vmem_limit = _vmem_limit_bytes()
    G, nb = _plan_grouping(N, H, W, vmem_budget=vmem_limit // 2)
    n_pad = nb * G
    gw = G * W

    # Block-diagonal row-conv matrix: G copies of Aw for the lane-packed images.
    aw_bd = jnp.kron(jnp.eye(G, dtype=jnp.float32), aw_sq)     # (gw, gw)

    def prep(x):
        x = x.astype(jnp.float32).reshape(N, H, W)
        if n_pad != N:
            x = jnp.pad(x, ((0, n_pad - N), (0, 0), (0, 0)))
        # (nb, G, H, W) -> (nb, H, G, W) -> (nb, H, G*W): lane-packed slabs.
        return x.reshape(nb, G, H, W).transpose(0, 2, 1, 3).reshape(nb, H, gw)

    x1 = prep(image)
    x2 = prep(target)

    kernel = functools.partial(_ssim_kernel, img_h=H)

    # Advisory cost estimate so XLA schedules the surrounding prep/reduction.
    flops = 2 * nb * (5 * H * gw * gw + 5 * H * H * gw) + 20 * nb * H * gw
    cost = pl.CostEstimate(
        flops=flops,
        transcendentals=nb * H * gw,
        bytes_accessed=(2 * n_pad * H * W + gw * gw + H * H + nb * 128) * 4,
    )

    partial_sums = pl.pallas_call(
        kernel,
        out_shape=jax.ShapeDtypeStruct((nb, 1, 128), jnp.float32),
        grid_spec=pltpu.PrefetchScalarGridSpec(
            num_scalar_prefetch=0,
            grid=(nb,),
            in_specs=[
                pl.BlockSpec((1, H, gw), lambda i: (i, 0, 0)),
                pl.BlockSpec((1, H, gw), lambda i: (i, 0, 0)),
                pl.BlockSpec((gw, gw), lambda i: (0, 0)),
                pl.BlockSpec((H, H), lambda i: (0, 0)),
            ],
            out_specs=pl.BlockSpec((1, 1, 128), lambda i: (i, 0, 0)),
            scratch_shapes=[pltpu.VMEM((5 * H, gw), jnp.float32)],
        ),
        compiler_params=pltpu.CompilerParams(
            dimension_semantics=("parallel",),
            vmem_limit_bytes=vmem_limit,
        ),
        cost_estimate=cost,
    )(x1, x2, aw_bd, aht_sq)

    total = jnp.sum(partial_sums[:, 0, 0])
    # Zero-padded dummy images are zero-vs-zero: ssim == 1 per pixel (den >=
    # C1*C2 > 0); subtract their exact pixel count instead of in-kernel masks.
    total = total - jnp.float32((n_pad - N) * H * W)
    mean_ssim = total / jnp.float32(N * H * W)
    return 1.0 - mean_ssim


def _ssim_loss_ref(image, target, window_size=11, sigma=1.5):
    """Pure-JAX reference (conv_general_dilated) mirroring the PyTorch code."""
    B, C, H, W = image.shape
    pad = window_size // 2
    g = _gaussian_1d(window_size, sigma)
    w2d = jnp.outer(g, g)
    window = jnp.broadcast_to(w2d, (C, 1, window_size, window_size))

    def conv(x):
        return lax.conv_general_dilated(
            x.astype(jnp.float32), window,
            window_strides=(1, 1), padding=[(pad, pad), (pad, pad)],
            dimension_numbers=("NCHW", "OIHW", "NCHW"),
            feature_group_count=C, precision=lax.Precision.HIGHEST)

    x1 = image.astype(jnp.float32)
    x2 = target.astype(jnp.float32)
    mu1, mu2 = conv(x1), conv(x2)
    mu1_sq, mu2_sq, mu1_mu2 = mu1 ** 2, mu2 ** 2, mu1 * mu2
    s1 = conv(x1 * x1) - mu1_sq
    s2 = conv(x2 * x2) - mu2_sq
    s12 = conv(x1 * x2) - mu1_mu2
    ssim_map = ((2 * mu1_mu2 + _C1) * (2 * s12 + _C2)) / (
        (mu1_sq + mu2_sq + _C1) * (s1 + s2 + _C2))
    return 1.0 - jnp.mean(ssim_map)


if __name__ == "__main__":
    key = jax.random.PRNGKey(0)
    k1, k2 = jax.random.split(key)
    # Small NCHW inputs: batch=2, channels=4, spatial=16x16.
    image = jax.random.uniform(k1, (2, 4, 16, 16), dtype=jnp.float32)
    target = jax.random.uniform(k2, (2, 4, 16, 16), dtype=jnp.float32)

    loss = ssim_loss(image, target)
    jax.block_until_ready(loss)

    ref = _ssim_loss_ref(image, target)
    assert jnp.allclose(loss, ref, atol=2e-3), (loss, ref)

    print("KERNEL_OK")
</pallas_src>

<mosaic_0001>
module attributes {stable_mosaic.version = 11 : i64} {
  func.func @_ssim_kernel(%arg0: i32, %arg1: memref<1x16x64xf32, #tpu.memory_space<vmem>>, %arg2: memref<1x16x64xf32, #tpu.memory_space<vmem>>, %arg3: memref<64x64xf32, #tpu.memory_space<vmem>>, %arg4: memref<16x16xf32, #tpu.memory_space<vmem>>, %arg5: memref<1x1x128xf32, #tpu.memory_space<vmem>>, %arg6: memref<80x64xf32, #tpu.memory_space<vmem>>) attributes {dimension_semantics = [#tpu.dimension_semantics<parallel>], iteration_bounds = array<i64: 2>, scalar_prefetch = 0 : i64, scratch_operands = 1 : i64, tpu.core_type = #tpu.core_type<tc>, window_params = [{transform_indices = @transform_0, window_bounds = array<i64: 1, 16, 64>}, {transform_indices = @transform_1, window_bounds = array<i64: 1, 16, 64>}, {pipeline_mode = #tpu.pipeline_mode<synchronous>, transform_indices = @transform_2, window_bounds = array<i64: 64, 64>}, {pipeline_mode = #tpu.pipeline_mode<synchronous>, transform_indices = @transform_3, window_bounds = array<i64: 16, 16>}, {transform_indices = @transform_4, window_bounds = array<i64: 1, 1, 128>}]} {
    %c0 = arith.constant 0 : index
    %c0_0 = arith.constant 0 : index
    %c0_1 = arith.constant 0 : index
    %0 = vector.load %arg1[%c0, %c0_0, %c0_1] : memref<1x16x64xf32, #tpu.memory_space<vmem>>, vector<1x16x64xf32>
    %1 = vector.shape_cast %0 : vector<1x16x64xf32> to vector<16x64xf32>
    %c0_2 = arith.constant 0 : index
    %c0_3 = arith.constant 0 : index
    %c0_4 = arith.constant 0 : index
    %2 = vector.load %arg2[%c0_2, %c0_3, %c0_4] : memref<1x16x64xf32, #tpu.memory_space<vmem>>, vector<1x16x64xf32>
    %3 = vector.shape_cast %2 : vector<1x16x64xf32> to vector<16x64xf32>
    %4 = arith.mulf %1, %1 : vector<16x64xf32>
    %5 = arith.mulf %3, %3 : vector<16x64xf32>
    %6 = arith.mulf %1, %3 : vector<16x64xf32>
    %c0_5 = arith.constant 0 : index
    %c0_6 = arith.constant 0 : index
    %7 = vector.load %arg6[%c0_5, %c0_6] : memref<80x64xf32, #tpu.memory_space<vmem>>, vector<16x64xf32>
    tpu.vector_store %arg6[%c0_5, %c0_6], %1 {strides = array<i32>} : memref<80x64xf32, #tpu.memory_space<vmem>>, vector<16x64xf32>,
    %c16 = arith.constant 16 : index
    %c0_7 = arith.constant 0 : index
    %8 = vector.load %arg6[%c16, %c0_7] : memref<80x64xf32, #tpu.memory_space<vmem>>, vector<16x64xf32>
    tpu.vector_store %arg6[%c16, %c0_7], %3 {strides = array<i32>} : memref<80x64xf32, #tpu.memory_space<vmem>>, vector<16x64xf32>,
    %c32 = arith.constant 32 : index
    %c0_8 = arith.constant 0 : index
    %9 = vector.load %arg6[%c32, %c0_8] : memref<80x64xf32, #tpu.memory_space<vmem>>, vector<16x64xf32>
    tpu.vector_store %arg6[%c32, %c0_8], %4 {strides = array<i32>} : memref<80x64xf32, #tpu.memory_space<vmem>>, vector<16x64xf32>,
    %c48 = arith.constant 48 : index
    %c0_9 = arith.constant 0 : index
    %10 = vector.load %arg6[%c48, %c0_9] : memref<80x64xf32, #tpu.memory_space<vmem>>, vector<16x64xf32>
    tpu.vector_store %arg6[%c48, %c0_9], %5 {strides = array<i32>} : memref<80x64xf32, #tpu.memory_space<vmem>>, vector<16x64xf32>,
    %c64 = arith.constant 64 : index
    %c0_10 = arith.constant 0 : index
    %11 = vector.load %arg6[%c64, %c0_10] : memref<80x64xf32, #tpu.memory_space<vmem>>, vector<16x64xf32>
    tpu.vector_store %arg6[%c64, %c0_10], %6 {strides = array<i32>} : memref<80x64xf32, #tpu.memory_space<vmem>>, vector<16x64xf32>,
    %c0_11 = arith.constant 0 : index
    %c0_12 = arith.constant 0 : index
    %12 = vector.load %arg6[%c0_11, %c0_12] : memref<80x64xf32, #tpu.memory_space<vmem>>, vector<80x64xf32>
    %c0_13 = arith.constant 0 : index
    %c0_14 = arith.constant 0 : index
    %13 = vector.load %arg3[%c0_13, %c0_14] : memref<64x64xf32, #tpu.memory_space<vmem>>, vector<64x64xf32>
    %cst = arith.constant dense<0.000000e+00> : vector<80x64xf32>
    %14 = tpu.matmul %12, %13, %cst {dimension_numbers = #tpu.dot_dimension_numbers<[1], [0], [0], [1], [0, 0, 1, 1], [], []>, precision = #tpu.contract_precision<fp32>} : vector<80x64xf32>, vector<64x64xf32>, vector<80x64xf32> -> vector<80x64xf32>
    %c0_15 = arith.constant 0 : index
    %c0_16 = arith.constant 0 : index
    %15 = vector.load %arg4[%c0_15, %c0_16] : memref<16x16xf32, #tpu.memory_space<vmem>>, vector<16x16xf32>
    %16 = vector.extract_strided_slice %14 {offsets = [0, 0], sizes = [16, 64], strides = [1, 1]} : vector<80x64xf32> to vector<16x64xf32>
    %cst_17 = arith.constant dense<0.000000e+00> : vector<16x64xf32>
    %17 = tpu.matmul %15, %16, %cst_17 {dimension_numbers = #tpu.dot_dimension_numbers<[1], [0], [0], [1], [0, 0, 1, 1], [], []>, precision = #tpu.contract_precision<fp32>} : vector<16x16xf32>, vector<16x64xf32>, vector<16x64xf32> -> vector<16x64xf32>
    %18 = vector.extract_strided_slice %14 {offsets = [16, 0], sizes = [16, 64], strides = [1, 1]} : vector<80x64xf32> to vector<16x64xf32>
    %cst_18 = arith.constant dense<0.000000e+00> : vector<16x64xf32>
    %19 = tpu.matmul %15, %18, %cst_18 {dimension_numbers = #tpu.dot_dimension_numbers<[1], [0], [0], [1], [0, 0, 1, 1], [], []>, precision = #tpu.contract_precision<fp32>} : vector<16x16xf32>, vector<16x64xf32>, vector<16x64xf32> -> vector<16x64xf32>
    %20 = vector.extract_strided_slice %14 {offsets = [32, 0], sizes = [16, 64], strides = [1, 1]} : vector<80x64xf32> to vector<16x64xf32>
    %cst_19 = arith.constant dense<0.000000e+00> : vector<16x64xf32>
    %21 = tpu.matmul %15, %20, %cst_19 {dimension_numbers = #tpu.dot_dimension_numbers<[1], [0], [0], [1], [0, 0, 1, 1], [], []>, precision = #tpu.contract_precision<fp32>} : vector<16x16xf32>, vector<16x64xf32>, vector<16x64xf32> -> vector<16x64xf32>
    %22 = vector.extract_strided_slice %14 {offsets = [48, 0], sizes = [16, 64], strides = [1, 1]} : vector<80x64xf32> to vector<16x64xf32>
    %cst_20 = arith.constant dense<0.000000e+00> : vector<16x64xf32>
    %23 = tpu.matmul %15, %22, %cst_20 {dimension_numbers = #tpu.dot_dimension_numbers<[1], [0], [0], [1], [0, 0, 1, 1], [], []>, precision = #tpu.contract_precision<fp32>} : vector<16x16xf32>, vector<16x64xf32>, vector<16x64xf32> -> vector<16x64xf32>
    %24 = vector.extract_strided_slice %14 {offsets = [64, 0], sizes = [16, 64], strides = [1, 1]} : vector<80x64xf32> to vector<16x64xf32>
    %cst_21 = arith.constant dense<0.000000e+00> : vector<16x64xf32>
    %25 = tpu.matmul %15, %24, %cst_21 {dimension_numbers = #tpu.dot_dimension_numbers<[1], [0], [0], [1], [0, 0, 1, 1], [], []>, precision = #tpu.contract_precision<fp32>} : vector<16x16xf32>, vector<16x64xf32>, vector<16x64xf32> -> vector<16x64xf32>
    %26 = arith.mulf %17, %17 : vector<16x64xf32>
    %27 = arith.mulf %19, %19 : vector<16x64xf32>
    %28 = arith.mulf %17, %19 : vector<16x64xf32>
    %29 = arith.subf %21, %26 : vector<16x64xf32>
    %30 = arith.subf %23, %27 : vector<16x64xf32>
    %31 = arith.subf %25, %28 : vector<16x64xf32>
    %cst_22 = arith.constant 2.000000e+00 : f32
    %32 = vector.broadcast %cst_22 : f32 to vector<16x64xf32>
    %33 = arith.mulf %32, %28 : vector<16x64xf32>
    %cst_23 = arith.constant 9.99999974E-5 : f32
    %34 = vector.broadcast %cst_23 : f32 to vector<16x64xf32>
    %35 = arith.addf %33, %34 : vector<16x64xf32>
    %cst_24 = arith.constant 2.000000e+00 : f32
    %36 = vector.broadcast %cst_24 : f32 to vector<16x64xf32>
    %37 = arith.mulf %36, %31 : vector<16x64xf32>
    %cst_25 = arith.constant 8.99999984E-4 : f32
    %38 = vector.broadcast %cst_25 : f32 to vector<16x64xf32>
    %39 = arith.addf %37, %38 : vector<16x64xf32>
    %40 = arith.mulf %35, %39 : vector<16x64xf32>
    %41 = arith.addf %26, %27 : vector<16x64xf32>
    %cst_26 = arith.constant 9.99999974E-5 : f32
    %42 = vector.broadcast %cst_26 : f32 to vector<16x64xf32>
    %43 = arith.addf %41, %42 : vector<16x64xf32>
    %44 = arith.addf %29, %30 : vector<16x64xf32>
    %cst_27 = arith.constant 8.99999984E-4 : f32
    %45 = vector.broadcast %cst_27 : f32 to vector<16x64xf32>
    %46 = arith.addf %44, %45 : vector<16x64xf32>
    %47 = arith.mulf %43, %46 : vector<16x64xf32>
    %48 = tpu.reciprocal %47 {approx = true} : vector<16x64xf32> -> vector<16x64xf32>
    %49 = arith.mulf %47, %48 : vector<16x64xf32>
    %cst_28 = arith.constant 2.000000e+00 : f32
    %50 = vector.broadcast %cst_28 : f32 to vector<16x64xf32>
    %51 = arith.subf %50, %49 : vector<16x64xf32>
    %52 = arith.mulf %48, %51 : vector<16x64xf32>
    %53 = arith.mulf %40, %52 : vector<16x64xf32>
    %54 = vector.shape_cast %53 : vector<16x64xf32> to vector<1x16x64xf32>
    %cst_29 = arith.constant dense<0.000000e+00> : vector<1xf32>
    %55 = vector.multi_reduction <add>, %54, %cst_29 [1, 2] : vector<1x16x64xf32> to vector<1xf32>
    %56 = vector.shape_cast %55 : vector<1xf32> to vector<1x1x1xf32>
    %57 = vector.extract %56[0, 0, 0] : f32 from vector<1x1x1xf32>
    %58 = vector.broadcast %57 : f32 to vector<1x1x128xf32>
    %c0_30 = arith.constant 0 : index
    %c0_31 = arith.constant 0 : index
    %c0_32 = arith.constant 0 : index
    %59 = vector.load %arg5[%c0_30, %c0_31, %c0_32] : memref<1x1x128xf32, #tpu.memory_space<vmem>>, vector<1x1x128xf32>
    tpu.vector_store %arg5[%c0_30, %c0_31, %c0_32], %58 {strides = array<i32>} : memref<1x1x128xf32, #tpu.memory_space<vmem>>, vector<1x1x128xf32>,
    return
  }
  func.func @transform_0(%arg0: i32) -> (i32, i32, i32) {
    %c0_i32 = arith.constant 0 : i32
    %c0_i32_0 = arith.constant 0 : i32
    %c0_i32_1 = arith.constant 0 : i32
    return %arg0, %c0_i32, %c0_i32_0 : i32, i32, i32
  }
  func.func @transform_1(%arg0: i32) -> (i32, i32, i32) {
    %c0_i32 = arith.constant 0 : i32
    %c0_i32_0 = arith.constant 0 : i32
    %c0_i32_1 = arith.constant 0 : i32
    return %arg0, %c0_i32, %c0_i32_0 : i32, i32, i32
  }
  func.func @transform_2(%arg0: i32) -> (i32, i32) {
    %c0_i32 = arith.constant 0 : i32
    %c0_i32_0 = arith.constant 0 : i32
    %c0_i32_1 = arith.constant 0 : i32
    return %c0_i32, %c0_i32_0 : i32, i32
  }
  func.func @transform_3(%arg0: i32) -> (i32, i32) {
    %c0_i32 = arith.constant 0 : i32
    %c0_i32_0 = arith.constant 0 : i32
    %c0_i32_1 = arith.constant 0 : i32
    return %c0_i32, %c0_i32_0 : i32, i32
  }
  func.func @transform_4(%arg0: i32) -> (i32, i32, i32) {
    %c0_i32 = arith.constant 0 : i32
    %c0_i32_0 = arith.constant 0 : i32
    %c0_i32_1 = arith.constant 0 : i32
    return %arg0, %c0_i32, %c0_i32_0 : i32, i32, i32
  }
}

</mosaic_0001>

<llo_original>
// kernel: ssim_loss.1
$region0: #{ssim_loss.1}
  #allocation0 [shape = 'u32[]', space=smem, size = 0x4, offset = 0x4, fixed_abs, tag = 'smem constant byte address 0x4 - core index']
  #allocation1 [shape = 'u32[144,128]{1,0:T(1,128)}', space=vmem, size = 0x12000, scoped, tag = 'internal scratch']
  #allocation2 [shape = 'f32[80,64]{1,0:T(8,128)}', space=vmem, size = 0xa000, scoped, tag = 'scratch operand']
  %s0 = inlined_call_operand.vmem [shape: f32[2,16,64], index: 0, kind: input, shape index: {}]
  %s1 = inlined_call_operand.vmem [shape: f32[2,16,64], index: 1, kind: input, shape index: {}]
  %s2 = inlined_call_operand.vmem [shape: f32[64,64], index: 2, kind: input, shape index: {}]
  %s3 = inlined_call_operand.vmem [shape: f32[16,16], index: 3, kind: input, shape index: {}]
  %s4 = inlined_call_operand.vmem [shape: f32[2,1,128], index: 4, kind: output, shape index: {}]
  %s5 = sld [smem:[#allocation0]]
  $region49: #{ssim_loss.1} parent=0
    _
  %s7 = ssub.s32 1, %s5
  %s8 = scalar_select 0, %s7, %s5
  loop: start=0, step=1, limit=4
  $region2: #{ssim_loss.1} parent=0 // loop_pre_header
    _
  $region3: #{ssim_loss.1} parent=0 // loop_header
    %s10 = sphi 0, %s14
    %p11 = scmp.ge.s32.totalorder %s10, 4
    %s20 = sphi 0, %s22
    %s23 = sphi 0, %s20
    %s24 = sphi 0, %s23
    %s40 = sphi 0, %s24
    %s46 = sphi 0, %s48
    %s49 = sphi 0, %s46
    %s50 = sphi 0, %s49
    %s66 = sphi 0, %s50
    %s70 = sphi 0, %s70
    %s72 = sphi 0, %s70
    %s73 = sphi 0, %s72
    %s87 = sphi 0, %s73
    %s91 = sphi 0, %s91
    %s93 = sphi 0, %s91
    %s94 = sphi 0, %s93
    %s108 = sphi 0, %s94
    %s114 = sphi 0, %s116
    %s117 = sphi 0, %s114
    %s118 = sphi 0, %s117
    %s134 = sphi 0, %s118
  $region4: #{ssim_loss.1} parent=0 // loop_header_branch
    %13 = sbr.rel (%p11) target = $region8
  $region5: #{ssim_loss.1} parent=0 // loop_body
    %s15 = ssub.s32 %s10, 1
    %s16 = ssub.s32 %s10, 2
    %s17 = sadd.s32 %s10, 1
    %s18 = ssub.s32 %s10, %s17
    %p19 = scmp.eq.s32.totalorder %s18, 0
    %s21 = sadd.s32 %s20, 1
    %s22 = scalar_select %p19, %s20, %s21
    %p25 = pneg %p19
    %p26 = scmp.eq.s32.totalorder %s10, 1
    %p27 = por %p25, %p26
    %p28 = scmp.ne.s32.totalorder %s20, %s23
    %p29 = scmp.eq.s32.totalorder %s10, 0
    %p30 = por %p28, %p29
    %p31 = scmp.ne.s32.totalorder %s20, %s23
    %p32 = scmp.eq.s32.totalorder %s15, 1
    %p33 = por %p31, %p32
    %p34 = scmp.ne.s32.totalorder %s23, %s24
    %p35 = scmp.eq.s32.totalorder %s15, 0
    %p36 = por %p34, %p35
    %p37 = scmp.ne.s32.totalorder %s23, %s24
    %p38 = scmp.eq.s32.totalorder %s16, 1
    %p39 = por %p37, %p38
    %p41 = scmp.ne.s32.totalorder %s24, %s40
    %p42 = scmp.eq.s32.totalorder %s16, 0
    %p43 = por %p41, %p42
    %s44 = ssub.s32 %s10, %s17
    %p45 = scmp.eq.s32.totalorder %s44, 0
    %s47 = sadd.s32 %s46, 1
    %s48 = scalar_select %p45, %s46, %s47
    %p51 = pneg %p45
    %p52 = scmp.eq.s32.totalorder %s10, 1
    %p53 = por %p51, %p52
    %p54 = scmp.ne.s32.totalorder %s46, %s49
    %p55 = scmp.eq.s32.totalorder %s10, 0
    %p56 = por %p54, %p55
    %p57 = scmp.ne.s32.totalorder %s46, %s49
    %p58 = scmp.eq.s32.totalorder %s15, 1
    %p59 = por %p57, %p58
    %p60 = scmp.ne.s32.totalorder %s49, %s50
    %p61 = scmp.eq.s32.totalorder %s15, 0
    %p62 = por %p60, %p61
    %p63 = scmp.ne.s32.totalorder %s49, %s50
    %p64 = scmp.eq.s32.totalorder %s16, 1
    %p65 = por %p63, %p64
    %p67 = scmp.ne.s32.totalorder %s50, %s66
    %p68 = scmp.eq.s32.totalorder %s16, 0
    %p69 = por %p67, %p68
    %s71 = sadd.s32 %s70, 1
    %p74 = scmp.eq.s32.totalorder %s10, 1
    %p75 = scmp.ne.s32.totalorder %s70, %s72
    %p76 = scmp.eq.s32.totalorder %s10, 0
    %p77 = por %p75, %p76
    %p78 = scmp.ne.s32.totalorder %s70, %s72
    %p79 = scmp.eq.s32.totalorder %s15, 1
    %p80 = por %p78, %p79
    %p81 = scmp.ne.s32.totalorder %s72, %s73
    %p82 = scmp.eq.s32.totalorder %s15, 0
    %p83 = por %p81, %p82
    %p84 = scmp.ne.s32.totalorder %s72, %s73
    %p85 = scmp.eq.s32.totalorder %s16, 1
    %p86 = por %p84, %p85
    %p88 = scmp.ne.s32.totalorder %s73, %s87
    %p89 = scmp.eq.s32.totalorder %s16, 0
    %p90 = por %p88, %p89
    %s92 = sadd.s32 %s91, 1
    %p95 = scmp.eq.s32.totalorder %s10, 1
    %p96 = scmp.ne.s32.totalorder %s91, %s93
    %p97 = scmp.eq.s32.totalorder %s10, 0
    %p98 = por %p96, %p97
    %p99 = scmp.ne.s32.totalorder %s91, %s93
    %p100 = scmp.eq.s32.totalorder %s15, 1
    %p101 = por %p99, %p100
    %p102 = scmp.ne.s32.totalorder %s93, %s94
    %p103 = scmp.eq.s32.totalorder %s15, 0
    %p104 = por %p102, %p103
    %p105 = scmp.ne.s32.totalorder %s93, %s94
    %p106 = scmp.eq.s32.totalorder %s16, 1
    %p107 = por %p105, %p106
    %p109 = scmp.ne.s32.totalorder %s94, %s108
    %p110 = scmp.eq.s32.totalorder %s16, 0
    %p111 = por %p109, %p110
    %s112 = ssub.s32 %s10, %s17
    %p113 = scmp.eq.s32.totalorder %s112, 0
    %s115 = sadd.s32 %s114, 1
    %s116 = scalar_select %p113, %s114, %s115
    %p119 = pneg %p113
    %p120 = scmp.eq.s32.totalorder %s10, 1
    %p121 = por %p119, %p120
    %p122 = scmp.ne.s32.totalorder %s114, %s117
    %p123 = scmp.eq.s32.totalorder %s10, 0
    %p124 = por %p122, %p123
    %p125 = scmp.ne.s32.totalorder %s114, %s117
    %p126 = scmp.eq.s32.totalorder %s15, 1
    %p127 = por %p125, %p126
    %p128 = scmp.ne.s32.totalorder %s117, %s118
    %p129 = scmp.eq.s32.totalorder %s15, 0
    %p130 = por %p128, %p129
    %p131 = scmp.ne.s32.totalorder %s117, %s118
    %p132 = scmp.eq.s32.totalorder %s16, 1
    %p133 = por %p131, %p132
    %p135 = scmp.ne.s32.totalorder %s118, %s134
    %p136 = scmp.eq.s32.totalorder %s16, 0
    %p137 = por %p135, %p136
    %p138 = scmp.le.s32.totalorder 1, %s10
    %p139 = scmp.lt.s32.totalorder %s10, 3
    %p140 = pnand %p138, %p139
    %p141 = pneg %p140
    // Predicated region
    $region9: #{ssim_loss.1} parent=5 // pred_check
      _
    $region10: #{ssim_loss.1} parent=5 // pred_check_branch
      %143 = sbr.rel (%p140) target = $region12
    $region11: #{ssim_loss.1} parent=5 // pred_region
      %s144 = ssub.s32 %s10, 1
      // Predicated region
      $region13: #{ssim_loss.1} parent=11 // pred_check
        %p145 = pneg %p83
      $region14: #{ssim_loss.1} parent=11 // pred_check_branch
        %147 = sbr.rel (%p145) target = $region16
      $region15: #{ssim_loss.1} parent=11 // pred_region
        _
      $region16: #{ssim_loss.1} parent=11 // pred_fallthru
        _
      // Predicated region
      $region17: #{ssim_loss.1} parent=11 // pred_check
        %p148 = pneg %p104
      $region18: #{ssim_loss.1} parent=11 // pred_check_branch
        %150 = sbr.rel (%p148) target = $region20
      $region19: #{ssim_loss.1} parent=11 // pred_region
        _
      $region20: #{ssim_loss.1} parent=11 // pred_fallthru
        _
    $region12: #{ssim_loss.1} parent=5 // pred_fallthru
      _
    %p151 = scmp.lt.s32.totalorder %s10, 2
    // Predicated region
    $region21: #{ssim_loss.1} parent=5 // pred_check
      %p152 = pneg %p151
    $region22: #{ssim_loss.1} parent=5 // pred_check_branch
      %154 = sbr.rel (%p152) target = $region24
    $region23: #{ssim_loss.1} parent=5 // pred_region
      // Predicated region
      $region25: #{ssim_loss.1} parent=23 // pred_check
        %p155 = pneg %p30
      $region26: #{ssim_loss.1} parent=23 // pred_check_branch
        %157 = sbr.rel (%p155) target = $region28
      $region27: #{ssim_loss.1} parent=23 // pred_region
        %p158 = scmp.lt.s32.totalorder %s10, 1
        %s159 = scalar_select %p158, %s10, 1
        %s160 = smul.addr %s159, 2
        %s161 = smul.addr %s160, 8
        %s162 = scalar_lea.vmem %s0, %s161
      $region28: #{ssim_loss.1} parent=23 // pred_fallthru
        _
      // Predicated region
      $region29: #{ssim_loss.1} parent=23 // pred_check
        %p163 = pneg %p56
      $region30: #{ssim_loss.1} parent=23 // pred_check_branch
        %165 = sbr.rel (%p163) target = $region32
      $region31: #{ssim_loss.1} parent=23 // pred_region
        %p166 = scmp.lt.s32.totalorder %s10, 1
        %s167 = scalar_select %p166, %s10, 1
        %s168 = smul.addr %s167, 2
        %s169 = smul.addr %s168, 8
        %s170 = scalar_lea.vmem %s1, %s169
      $region32: #{ssim_loss.1} parent=23 // pred_fallthru
        _
    $region24: #{ssim_loss.1} parent=5 // pred_fallthru
      _
    %p171 = scmp.le.s32.totalorder 1, %s10
    %p172 = scmp.lt.s32.totalorder %s10, 3
    %p173 = pnand %p171, %p172
    %p174 = pneg %p173
    // Predicated region
    $region33: #{ssim_loss.1} parent=5 // pred_check
      _
    $region34: #{ssim_loss.1} parent=5 // pred_check_branch
      %176 = sbr.rel (%p173) target = $region36
    $region35: #{ssim_loss.1} parent=5 // pred_region
      %s177 = ssub.s32 %s10, 1
      %p178 = scmp.lt.s32.totalorder %s15, 1
      %s179 = scalar_select %p178, %s15, 1
      %s180 = smul.addr %s179, 2
      %s181 = smul.addr %s180, 8
      %s182 = scalar_lea.vmem %s0, %s181
      %p183 = pneg %p36
      %p184 = pneg %p33
      %p185 = scmp.lt.s32.totalorder %s15, 1
      %s186 = scalar_select %p185, %s15, 1
      %s187 = smul.addr %s186, 2
      %s188 = smul.addr %s187, 8
      %s189 = scalar_lea.vmem %s1, %s188
      %p190 = pneg %p62
      %p191 = pneg %p59
      %p192 = pneg %p83
      %p193 = pneg %p80
      %p194 = pneg %p104
      %p195 = pneg %p101
      %p196 = pneg %p130
      %p197 = pneg %p127
      %p198 = scmp.lt.s32.totalorder %s15, 1
      %s199 = scalar_select %p198, %s15, 1
      %s200 = scalar_lea.vmem %s4, %s199
      %p201 = scmp.lt.s32.totalorder %s15, 1
      %s202 = scalar_select %p201, %s15, 1
      %s203 = smul.addr %s202, 2
      %s204 = smul.addr %s203, 8
      %s205 = scalar_lea.vmem %s0, %s204
      %p206 = scmp.lt.s32.totalorder %s15, 1
      %s207 = scalar_select %p206, %s15, 1
      %s208 = smul.addr %s207, 2
      %s209 = smul.addr %s208, 8
      %s210 = scalar_lea.vmem %s1, %s209
      %p211 = scmp.lt.s32.totalorder %s15, 1
      %s212 = scalar_select %p211, %s15, 1
      %s213 = scalar_lea.vmem %s4, %s212
      %v214 = vld [vmem:[%s205] sm:$0xff]
      %v215 = vld [vmem:[%s205 + $0x8] sm:$0xff]
      %v216 = vld [vmem:[%s210] sm:$0xff]
      %v217 = vld [vmem:[%s210 + $0x8] sm:$0xff]
      %v218 = vmul.f32 %v214, %v214
      %v219 = vmul.f32 %v215, %v215
      %v220 = vmul.f32 %v216, %v216
      %v221 = vmul.f32 %v217, %v217
      %v222 = vmul.f32 %v214, %v216
      %v223 = vmul.f32 %v215, %v217
      %vm224 = vcmask 523264
      %225 = vst.msk [vmem:[#allocation2] sm:$0xff] %vm224, %v214
      %226 = vst.msk [vmem:[#allocation2 + $0x8] sm:$0xff] %vm224, %v215
      %227 = vst.msk [vmem:[#allocation2 + $0x10] sm:$0xff] %vm224, %v216
      %228 = vst.msk [vmem:[#allocation2 + $0x18] sm:$0xff] %vm224, %v217
      %229 = vst.msk [vmem:[#allocation2 + $0x20] sm:$0xff] %vm224, %v218
      %230 = vst.msk [vmem:[#allocation2 + $0x28] sm:$0xff] %vm224, %v219
      %231 = vst.msk [vmem:[#allocation2 + $0x30] sm:$0xff] %vm224, %v220
      %232 = vst.msk [vmem:[#allocation2 + $0x38] sm:$0xff] %vm224, %v221
      %233 = vst.msk [vmem:[#allocation2 + $0x40] sm:$0xff] %vm224, %v222
      %234 = vst.msk [vmem:[#allocation2 + $0x48] sm:$0xff] %vm224, %v223
      %v235 = vld [vmem:[#allocation2] sm:$0xff]
      %v236 = vld [vmem:[#allocation2 + $0x8] sm:$0xff]
      %v237 = vld [vmem:[#allocation2 + $0x10] sm:$0xff]
      %v238 = vld [vmem:[#allocation2 + $0x18] sm:$0xff]
      %v239 = vld [vmem:[#allocation2 + $0x20] sm:$0xff]
      %v240 = vld [vmem:[#allocation2 + $0x28] sm:$0xff]
      %v241 = vld [vmem:[#allocation2 + $0x30] sm:$0xff]
      %v242 = vld [vmem:[#allocation2 + $0x38] sm:$0xff]
      %v243 = vld [vmem:[#allocation2 + $0x40] sm:$0xff]
      %v244 = vld [vmem:[#allocation2 + $0x48] sm:$0xff]
      %v245 = vld [vmem:[%s2] sm:$0xff]
      %v246 = vld [vmem:[%s2 + $0x8] sm:$0xff]
      %v247 = vld [vmem:[%s2 + $0x10] sm:$0xff]
      %v248 = vld [vmem:[%s2 + $0x18] sm:$0xff]
      %v249 = vld [vmem:[%s2 + $0x20] sm:$0xff]
      %v250 = vld [vmem:[%s2 + $0x28] sm:$0xff]
      %v251 = vld [vmem:[%s2 + $0x30] sm:$0xff]
      %v252 = vld [vmem:[%s2 + $0x38] sm:$0xff]
      %v254 = vsel %vm224, %v235, 0
      %v257 = vsel %vm224, %v236, 0
      %v260 = vsel %vm224, %v237, 0
      %v263 = vsel %vm224, %v238, 0
      %v266 = vsel %vm224, %v239, 0
      %v269 = vsel %vm224, %v240, 0
      %v272 = vsel %vm224, %v241, 0
      %v275 = vsel %vm224, %v242, 0
      %v278 = vsel %vm224, %v243, 0
      %v281 = vsel %vm224, %v244, 0
      %283 = vmatprep.subr.mxu0 0.0
      %v284 = vand.u32 %v245, 4294901760
      %285 = vmatpush1.msra.mxu0 %v284
      %286 = vmatprep.subr.mxu0 0.0
      %v287 = vand.u32 %v246, 4294901760
      %288 = vmatpush1.msra.mxu0 %v287
      %289 = vmatprep.subr.mxu0 0.0
      %v290 = vand.u32 %v247, 4294901760
      %291 = vmatpush1.msra.mxu0 %v290
      %292 = vmatprep.subr.mxu0 0.0
      %v293 = vand.u32 %v248, 4294901760
      %294 = vmatpush1.msra.mxu0 %v293
      %295 = vmatprep.subr.mxu0 0.0
      %v296 = vand.u32 %v249, 4294901760
      %297 = vmatpush1.msra.mxu0 %v296
      %298 = vmatprep.subr.mxu0 0.0
      %v299 = vand.u32 %v250, 4294901760
      %300 = vmatpush1.msra.mxu0 %v299
      %301 = vmatprep.subr.mxu0 0.0
      %v302 = vand.u32 %v251, 4294901760
      %303 = vmatpush1.msra.mxu0 %v302
      %304 = vmatprep.subr.mxu0 0.0
      %v305 = vand.u32 %v252, 4294901760
      %306 = vmatpush1.msra.mxu0 %v305
      %307 = vmatprep.subr.mxu0 0.0
      %308 = vmatpush1.msra.mxu0 0.0
      %309 = vmatprep.subr.mxu0 0.0
      %310 = vmatpush1.msra.mxu0 0.0
      %311 = vmatprep.subr.mxu0 0.0
      %312 = vmatpush1.msra.mxu0 0.0
      %313 = vmatprep.subr.mxu0 0.0
      %314 = vmatpush1.msra.mxu0 0.0
      %315 = vmatprep.subr.mxu0 0.0
      %316 = vmatpush1.msra.mxu0 0.0
      %317 = vmatprep.subr.mxu0 0.0
      %318 = vmatpush1.msra.mxu0 0.0
      %319 = vmatprep.subr.mxu0 0.0
      %320 = vmatpush1.msra.mxu0 0.0
      %321 = vmatprep.subr.mxu0 0.0
      %322 = vmatpush1.msra.mxu0 0.0
      %323 = vmatprep.subr.mxu0 0.0
      %324 = vmatpush1.msra.mxu0 0.0
      %325 = vmatprep.subr.mxu0 0.0
      %326 = vmatpush1.msra.mxu0 0.0
      %327 = vmatprep.subr.mxu0 0.0
      %328 = vmatpush1.msra.mxu0 0.0
      %329 = vmatprep.subr.mxu0 0.0
      %330 = vmatpush1.msra.mxu0 0.0
      %331 = vmatprep.subr.mxu0 0.0
      %332 = vmatpush1.msra.mxu0 0.0
      %333 = vmatprep.subr.mxu0 0.0
      %334 = vmatpush1.msra.mxu0 0.0
      %335 = vmatprep.subr.mxu0 0.0
      %336 = vmatpush1.msra.mxu0 0.0
      %337 = vmatprep.subr.mxu0 0.0
      %338 = vmatpush1.msra.mxu0 0.0
      %339 = vmatprep.subr.mxu0 0.0
      %340 = vmatpush1.msra.mxu0 0.0
      %341 = vmatprep.subr.mxu0 0.0
      %342 = vmatpush1.msra.mxu0 0.0
      %343 = vmatprep.subr.mxu0 0.0
      %344 = vmatpush1.msra.mxu0 0.0
      %345 = vmatprep.subr.mxu0 0.0
      %346 = vmatpush1.msra.mxu0 0.0
      %347 = vmatprep.subr.mxu0 0.0
      %348 = vmatpush1.msra.mxu0 0.0
      %349 = vmatprep.subr.mxu0 0.0
      %350 = vmatpush1.msra.mxu0 0.0
      %351 = vmatprep.subr.mxu0 0.0
      %352 = vmatpush1.msra.mxu0 0.0
      %353 = vmatprep.subr.mxu0 0.0
      %354 = vmatpush1.msra.mxu0 0.0
      %355 = vmatprep.mubr.f32.mxu0 0.0
      %v356 = vand.u32 %v254, 4294901760
      %v357 = vsub.f32 %v254, %v356
      %v358 = vand.u32 %v357, 4294901760
      %v359 = vsub.f32 %v357, %v358
      %v360 = vand.u32 %v359, 4294901760
      %361 = vmatmul.mubr.f32.gmra.mrb[0].mxu0 %v360
      %v362 = vpop.f32.mrb[0].mxu0
      %v363 = vadd.f32 0.0, %v362
      %v364 = vpop.f32.mrb[0].mxu0
      %365 = vmatprep.mubr.f32.mxu0 0.0
      %v366 = vand.u32 %v257, 4294901760
      %v367 = vsub.f32 %v257, %v366
      %v368 = vand.u32 %v367, 4294901760
      %v369 = vsub.f32 %v367, %v368
      %v370 = vand.u32 %v369, 4294901760
      %371 = vmatmul.mubr.f32.gmra.mrb[0].mxu0 %v370
      %v372 = vpop.f32.mrb[0].mxu0
      %v373 = vadd.f32 0.0, %v372
      %v374 = vpop.f32.mrb[0].mxu0
      %375 = vmatprep.mubr.f32.mxu0 0.0
      %v376 = vand.u32 %v260, 4294901760
      %v377 = vsub.f32 %v260, %v376
      %v378 = vand.u32 %v377, 4294901760
      %v379 = vsub.f32 %v377, %v378
      %v380 = vand.u32 %v379, 4294901760
      %381 = vmatmul.mubr.f32.gmra.mrb[0].mxu0 %v380
      %v382 = vpop.f32.mrb[0].mxu0
      %v383 = vadd.f32 0.0, %v382
      %v384 = vpop.f32.mrb[0].mxu0
      %385 = vmatprep.mubr.f32.mxu0 0.0
      %v386 = vand.u32 %v263, 4294901760
      %v387 = vsub.f32 %v263, %v386
      %v388 = vand.u32 %v387, 4294901760
      %v389 = vsub.f32 %v387, %v388
      %v390 = vand.u32 %v389, 4294901760
      %391 = vmatmul.mubr.f32.gmra.mrb[0].mxu0 %v390
      %v392 = vpop.f32.mrb[0].mxu0
      %v393 = vadd.f32 0.0, %v392
      %v394 = vpop.f32.mrb[0].mxu0
      %395 = vmatprep.mubr.f32.mxu0 0.0
      %v396 = vand.u32 %v266, 4294901760
      %v397 = vsub.f32 %v266, %v396
      %v398 = vand.u32 %v397, 4294901760
      %v399 = vsub.f32 %v397, %v398
      %v400 = vand.u32 %v399, 4294901760
      %401 = vmatmul.mubr.f32.gmra.mrb[0].mxu0 %v400
      %v402 = vpop.f32.mrb[0].mxu0
      %v403 = vadd.f32 0.0, %v402
      %v404 = vpop.f32.mrb[0].mxu0
      %405 = vmatprep.mubr.f32.mxu0 0.0
      %v406 = vand.u32 %v269, 4294901760
      %v407 = vsub.f32 %v269, %v406
      %v408 = vand.u32 %v407, 4294901760
      %v409 = vsub.f32 %v407, %v408
      %v410 = vand.u32 %v409, 4294901760
      %411 = vmatmul.mubr.f32.gmra.mrb[0].mxu0 %v410
      %v412 = vpop.f32.mrb[0].mxu0
      %v413 = vadd.f32 0.0, %v412
      %v414 = vpop.f32.mrb[0].mxu0
      %415 = vmatprep.mubr.f32.mxu0 0.0
      %v416 = vand.u32 %v272, 4294901760
      %v417 = vsub.f32 %v272, %v416
      %v418 = vand.u32 %v417, 4294901760
      %v419 = vsub.f32 %v417, %v418
      %v420 = vand.u32 %v419, 4294901760
      %421 = vmatmul.mubr.f32.gmra.mrb[0].mxu0 %v420
      %v422 = vpop.f32.mrb[0].mxu0
      %v423 = vadd.f32 0.0, %v422
      %v424 = vpop.f32.mrb[0].mxu0
      %425 = vmatprep.mubr.f32.mxu0 0.0
      %v426 = vand.u32 %v275, 4294901760
      %v427 = vsub.f32 %v275, %v426
      %v428 = vand.u32 %v427, 4294901760
      %v429 = vsub.f32 %v427, %v428
      %v430 = vand.u32 %v429, 4294901760
      %431 = vmatmul.mubr.f32.gmra.mrb[0].mxu0 %v430
      %v432 = vpop.f32.mrb[0].mxu0
      %v433 = vadd.f32 0.0, %v432
      %v434 = vpop.f32.mrb[0].mxu0
      %435 = vmatprep.mubr.f32.mxu0 0.0
      %v436 = vand.u32 %v278, 4294901760
      %v437 = vsub.f32 %v278, %v436
      %v438 = vand.u32 %v437, 4294901760
      %v439 = vsub.f32 %v437, %v438
      %v440 = vand.u32 %v439, 4294901760
      %441 = vmatmul.mubr.f32.gmra.mrb[0].mxu0 %v440
      %v442 = vpop.f32.mrb[0].mxu0
      %v443 = vadd.f32 0.0, %v442
      %v444 = vpop.f32.mrb[0].mxu0
      %445 = vmatprep.mubr.f32.mxu0 0.0
      %v446 = vand.u32 %v281, 4294901760
      %v447 = vsub.f32 %v281, %v446
      %v448 = vand.u32 %v447, 4294901760
      %v449 = vsub.f32 %v447, %v448
      %v450 = vand.u32 %v449, 4294901760
      %451 = vmatmul.mubr.f32.gmra.mrb[0].mxu0 %v450
      %v452 = vpop.f32.mrb[0].mxu0
      %v453 = vadd.f32 0.0, %v452
      %v454 = vpop.f32.mrb[0].mxu0
      %455 = vdwg.mxu0
      %456 = vmatprep.subr.mxu0 0.0
      %v457 = vand.u32 %v245, 4294901760
      %v458 = vsub.f32 %v245, %v457
      %v459 = vand.u32 %v458, 4294901760
      %v460 = vsub.f32 %v458, %v459
      %v461 = vand.u32 %v460, 4294901760
      %462 = vmatpush1.msra.mxu0 %v461
      %463 = vmatprep.subr.mxu0 0.0
      %v464 = vand.u32 %v246, 4294901760
      %v465 = vsub.f32 %v246, %v464
      %v466 = vand.u32 %v465, 4294901760
      %v467 = vsub.f32 %v465, %v466
      %v468 = vand.u32 %v467, 4294901760
      %469 = vmatpush1.msra.mxu0 %v468
      %470 = vmatprep.subr.mxu0 0.0
      %v471 = vand.u32 %v247, 4294901760
      %v472 = vsub.f32 %v247, %v471
      %v473 = vand.u32 %v472, 4294901760
      %v474 = vsub.f32 %v472, %v473
      %v475 = vand.u32 %v474, 4294901760
      %476 = vmatpush1.msra.mxu0 %v475
      %477 = vmatprep.subr.mxu0 0.0
      %v478 = vand.u32 %v248, 4294901760
      %v479 = vsub.f32 %v248, %v478
      %v480 = vand.u32 %v479, 4294901760
      %v481 = vsub.f32 %v479, %v480
      %v482 = vand.u32 %v481, 4294901760
      %483 = vmatpush1.msra.mxu0 %v482
      %484 = vmatprep.subr.mxu0 0.0
      %v485 = vand.u32 %v249, 4294901760
      %v486 = vsub.f32 %v249, %v485
      %v487 = vand.u32 %v486, 4294901760
      %v488 = vsub.f32 %v486, %v487
      %v489 = vand.u32 %v488, 4294901760
      %490 = vmatpush1.msra.mxu0 %v489
      %491 = vmatprep.subr.mxu0 0.0
      %v492 = vand.u32 %v250, 4294901760
      %v493 = vsub.f32 %v250, %v492
      %v494 = vand.u32 %v493, 4294901760
      %v495 = vsub.f32 %v493, %v494
      %v496 = vand.u32 %v495, 4294901760
      %497 = vmatpush1.msra.mxu0 %v496
      %498 = vmatprep.subr.mxu0 0.0
      %v499 = vand.u32 %v251, 4294901760
      %v500 = vsub.f32 %v251, %v499
      %v501 = vand.u32 %v500, 4294901760
      %v502 = vsub.f32 %v500, %v501
      %v503 = vand.u32 %v502, 4294901760
      %504 = vmatpush1.msra.mxu0 %v503
      %505 = vmatprep.subr.mxu0 0.0
      %v506 = vand.u32 %v252, 4294901760
      %v507 = vsub.f32 %v252, %v506
      %v508 = vand.u32 %v507, 4294901760
      %v509 = vsub.f32 %v507, %v508
      %v510 = vand.u32 %v509, 4294901760
      %511 = vmatpush1.msra.mxu0 %v510
      %512 = vmatprep.subr.mxu0 0.0
      %513 = vmatpush1.msra.mxu0 0.0
      %514 = vmatprep.subr.mxu0 0.0
      %515 = vmatpush1.msra.mxu0 0.0
      %516 = vmatprep.subr.mxu0 0.0
      %517 = vmatpush1.msra.mxu0 0.0
      %518 = vmatprep.subr.mxu0 0.0
      %519 = vmatpush1.msra.mxu0 0.0
      %520 = vmatprep.subr.mxu0 0.0
      %521 = vmatpush1.msra.mxu0 0.0
      %522 = vmatprep.subr.mxu0 0.0
      %523 = vmatpush1.msra.mxu0 0.0
      %524 = vmatprep.subr.mxu0 0.0
      %525 = vmatpush1.msra.mxu0 0.0
      %526 = vmatprep.subr.mxu0 0.0
      %527 = vmatpush1.msra.mxu0 0.0
      %528 = vmatprep.subr.mxu0 0.0
      %529 = vmatpush1.msra.mxu0 0.0
      %530 = vmatprep.subr.mxu0 0.0
      %531 = vmatpush1.msra.mxu0 0.0
      %532 = vmatprep.subr.mxu0 0.0
      %533 = vmatpush1.msra.mxu0 0.0
      %534 = vmatprep.subr.mxu0 0.0
      %535 = vmatpush1.msra.mxu0 0.0
      %536 = vmatprep.subr.mxu0 0.0
      %537 = vmatpush1.msra.mxu0 0.0
      %538 = vmatprep.subr.mxu0 0.0
      %539 = vmatpush1.msra.mxu0 0.0
      %540 = vmatprep.subr.mxu0 0.0
      %541 = vmatpush1.msra.mxu0 0.0
      %542 = vmatprep.subr.mxu0 0.0
      %543 = vmatpush1.msra.mxu0 0.0
      %544 = vmatprep.subr.mxu0 0.0
      %545 = vmatpush1.msra.mxu0 0.0
      %546 = vmatprep.subr.mxu0 0.0
      %547 = vmatpush1.msra.mxu0 0.0
      %548 = vmatprep.subr.mxu0 0.0
      %549 = vmatpush1.msra.mxu0 0.0
      %550 = vmatprep.subr.mxu0 0.0
      %551 = vmatpush1.msra.mxu0 0.0
      %552 = vmatprep.subr.mxu0 0.0
      %553 = vmatpush1.msra.mxu0 0.0
      %554 = vmatprep.subr.mxu0 0.0
      %555 = vmatpush1.msra.mxu0 0.0
      %556 = vmatprep.subr.mxu0 0.0
      %557 = vmatpush1.msra.mxu0 0.0
      %558 = vmatprep.subr.mxu0 0.0
      %559 = vmatpush1.msra.mxu0 0.0
      %560 = vmatprep.mubr.f32.mxu0 0.0
      %v561 = vand.u32 %v254, 4294901760
      %562 = vmatmul.mubr.f32.gmra.mrb[0].mxu0 %v561
      %v563 = vpop.f32.mrb[0].mxu0
      %v564 = vadd.f32 %v363, %v563
      %v565 = vpop.f32.mrb[0].mxu0
      %566 = vmatprep.mubr.f32.mxu0 0.0
      %v567 = vand.u32 %v257, 4294901760
      %568 = vmatmul.mubr.f32.gmra.mrb[0].mxu0 %v567
      %v569 = vpop.f32.mrb[0].mxu0
      %v570 = vadd.f32 %v373, %v569
      %v571 = vpop.f32.mrb[0].mxu0
      %572 = vmatprep.mubr.f32.mxu0 0.0
      %v573 = vand.u32 %v260, 4294901760
      %574 = vmatmul.mubr.f32.gmra.mrb[0].mxu0 %v573
      %v575 = vpop.f32.mrb[0].mxu0
      %v576 = vadd.f32 %v383, %v575
      %v577 = vpop.f32.mrb[0].mxu0
      %578 = vmatprep.mubr.f32.mxu0 0.0
      %v579 = vand.u32 %v263, 4294901760
      %580 = vmatmul.mubr.f32.gmra.mrb[0].mxu0 %v579
      %v581 = vpop.f32.mrb[0].mxu0
      %v582 = vadd.f32 %v393, %v581
      %v583 = vpop.f32.mrb[0].mxu0
      %584 = vmatprep.mubr.f32.mxu0 0.0
      %v585 = vand.u32 %v266, 4294901760
      %586 = vmatmul.mubr.f32.gmra.mrb[0].mxu0 %v585
      %v587 = vpop.f32.mrb[0].mxu0
      %v588 = vadd.f32 %v403, %v587
      %v589 = vpop.f32.mrb[0].mxu0
      %590 = vmatprep.mubr.f32.mxu0 0.0
      %v591 = vand.u32 %v269, 4294901760
      %592 = vmatmul.mubr.f32.gmra.mrb[0].mxu0 %v591
      %v593 = vpop.f32.mrb[0].mxu0
      %v594 = vadd.f32 %v413, %v593
      %v595 = vpop.f32.mrb[0].mxu0
      %596 = vmatprep.mubr.f32.mxu0 0.0
      %v597 = vand.u32 %v272, 4294901760
      %598 = vmatmul.mubr.f32.gmra.mrb[0].mxu0 %v597
      %v599 = vpop.f32.mrb[0].mxu0
      %v600 = vadd.f32 %v423, %v599
      %v601 = vpop.f32.mrb[0].mxu0
      %602 = vmatprep.mubr.f32.mxu0 0.0
      %v603 = vand.u32 %v275, 4294901760
      %604 = vmatmul.mubr.f32.gmra.mrb[0].mxu0 %v603
      %v605 = vpop.f32.mrb[0].mxu0
      %v606 = vadd.f32 %v433, %v605
      %v607 = vpop.f32.mrb[0].mxu0
      %608 = vmatprep.mubr.f32.mxu0 0.0
      %v609 = vand.u32 %v278, 4294901760
      %610 = vmatmul.mubr.f32.gmra.mrb[0].mxu0 %v609
      %v611 = vpop.f32.mrb[0].mxu0
      %v612 = vadd.f32 %v443, %v611
      %v613 = vpop.f32.mrb[0].mxu0
      %614 = vmatprep.mubr.f32.mxu0 0.0
      %v615 = vand.u32 %v281, 4294901760
      %616 = vmatmul.mubr.f32.gmra.mrb[0].mxu0 %v615
      %v617 = vpop.f32.mrb[0].mxu0
      %v618 = vadd.f32 %v453, %v617
      %v619 = vpop.f32.mrb[0].mxu0
      %620 = vdwg.mxu0
      %621 = vmatprep.subr.mxu0 0.0
      %v622 = vand.u32 %v245, 4294901760
      %v623 = vsub.f32 %v245, %v622
      %624 = vmatpush1.msra.mxu0 %v623
      %625 = vmatprep.subr.mxu0 0.0
      %v626 = vand.u32 %v246, 4294901760
      %v627 = vsub.f32 %v246, %v626
      %628 = vmatpush1.msra.mxu0 %v627
      %629 = vmatprep.subr.mxu0 0.0
      %v630 = vand.u32 %v247, 4294901760
      %v631 = vsub.f32 %v247, %v630
      %632 = vmatpush1.msra.mxu0 %v631
      %633 = vmatprep.subr.mxu0 0.0
      %v634 = vand.u32 %v248, 4294901760
      %v635 = vsub.f32 %v248, %v634
      %636 = vmatpush1.msra.mxu0 %v635
      %637 = vmatprep.subr.mxu0 0.0
      %v638 = vand.u32 %v249, 4294901760
      %v639 = vsub.f32 %v249, %v638
      %640 = vmatpush1.msra.mxu0 %v639
      %641 = vmatprep.subr.mxu0 0.0
      %v642 = vand.u32 %v250, 4294901760
      %v643 = vsub.f32 %v250, %v642
      %644 = vmatpush1.msra.mxu0 %v643
      %645 = vmatprep.subr.mxu0 0.0
      %v646 = vand.u32 %v251, 4294901760
      %v647 = vsub.f32 %v251, %v646
      %648 = vmatpush1.msra.mxu0 %v647
      %649 = vmatprep.subr.mxu0 0.0
      %v650 = vand.u32 %v252, 4294901760
      %v651 = vsub.f32 %v252, %v650
      %652 = vmatpush1.msra.mxu0 %v651
      %653 = vmatprep.subr.mxu0 0.0
      %654 = vmatpush1.msra.mxu0 0.0
      %655 = vmatprep.subr.mxu0 0.0
      %656 = vmatpush1.msra.mxu0 0.0
      %657 = vmatprep.subr.mxu0 0.0
      %658 = vmatpush1.msra.mxu0 0.0
      %659 = vmatprep.subr.mxu0 0.0
      %660 = vmatpush1.msra.mxu0 0.0
      %661 = vmatprep.subr.mxu0 0.0
      %662 = vmatpush1.msra.mxu0 0.0
      %663 = vmatprep.subr.mxu0 0.0
      %664 = vmatpush1.msra.mxu0 0.0
      %665 = vmatprep.subr.mxu0 0.0
      %666 = vmatpush1.msra.mxu0 0.0
      %667 = vmatprep.subr.mxu0 0.0
      %668 = vmatpush1.msra.mxu0 0.0
      %669 = vmatprep.subr.mxu0 0.0
      %670 = vmatpush1.msra.mxu0 0.0
      %671 = vmatprep.subr.mxu0 0.0
      %672 = vmatpush1.msra.mxu0 0.0
      %673 = vmatprep.subr.mxu0 0.0
      %674 = vmatpush1.msra.mxu0 0.0
      %675 = vmatprep.subr.mxu0 0.0
      %676 = vmatpush1.msra.mxu0 0.0
      %677 = vmatprep.subr.mxu0 0.0
      %678 = vmatpush1.msra.mxu0 0.0
      %679 = vmatprep.subr.mxu0 0.0
      %680 = vmatpush1.msra.mxu0 0.0
      %681 = vmatprep.subr.mxu0 0.0
      %682 = vmatpush1.msra.mxu0 0.0
      %683 = vmatprep.subr.mxu0 0.0
      %684 = vmatpush1.msra.mxu0 0.0
      %685 = vmatprep.subr.mxu0 0.0
      %686 = vmatpush1.msra.mxu0 0.0
      %687 = vmatprep.subr.mxu0 0.0
      %688 = vmatpush1.msra.mxu0 0.0
      %689 = vmatprep.subr.mxu0 0.0
      %690 = vmatpush1.msra.mxu0 0.0
      %691 = vmatprep.subr.mxu0 0.0
      %692 = vmatpush1.msra.mxu0 0.0
      %693 = vmatprep.subr.mxu0 0.0
      %694 = vmatpush1.msra.mxu0 0.0
      %695 = vmatprep.subr.mxu0 0.0
      %696 = vmatpush1.msra.mxu0 0.0
      %697 = vmatprep.subr.mxu0 0.0
      %698 = vmatpush1.msra.mxu0 0.0
      %699 = vmatprep.subr.mxu0 0.0
      %700 = vmatpush1.msra.mxu0 0.0
      %701 = vmatprep.mubr.f32.mxu0 0.0
      %v702 = vand.u32 %v254, 4294901760
      %v703 = vsub.f32 %v254, %v702
      %704 = vmatmul.mubr.f32.gmra.mrb[0].mxu0 %v703
      %v705 = vpop.f32.mrb[0].mxu0
      %v706 = vadd.f32 %v564, %v705
      %v707 = vpop.f32.mrb[0].mxu0
      %708 = vmatprep.mubr.f32.mxu0 0.0
      %v709 = vand.u32 %v257, 4294901760
      %v710 = vsub.f32 %v257, %v709
      %711 = vmatmul.mubr.f32.gmra.mrb[0].mxu0 %v710
      %v712 = vpop.f32.mrb[0].mxu0
      %v713 = vadd.f32 %v570, %v712
      %v714 = vpop.f32.mrb[0].mxu0
      %715 = vmatprep.mubr.f32.mxu0 0.0
      %v716 = vand.u32 %v260, 4294901760
      %v717 = vsub.f32 %v260, %v716
      %718 = vmatmul.mubr.f32.gmra.mrb[0].mxu0 %v717
      %v719 = vpop.f32.mrb[0].mxu0
      %v720 = vadd.f32 %v576, %v719
      %v721 = vpop.f32.mrb[0].mxu0
      %722 = vmatprep.mubr.f32.mxu0 0.0
      %v723 = vand.u32 %v263, 4294901760
      %v724 = vsub.f32 %v263, %v723
      %725 = vmatmul.mubr.f32.gmra.mrb[0].mxu0 %v724
      %v726 = vpop.f32.mrb[0].mxu0
      %v727 = vadd.f32 %v582, %v726
      %v728 = vpop.f32.mrb[0].mxu0
      %729 = vmatprep.mubr.f32.mxu0 0.0
      %v730 = vand.u32 %v266, 4294901760
      %v731 = vsub.f32 %v266, %v730
      %732 = vmatmul.mubr.f32.gmra.mrb[0].mxu0 %v731
      %v733 = vpop.f32.mrb[0].mxu0
      %v734 = vadd.f32 %v588, %v733
      %v735 = vpop.f32.mrb[0].mxu0
      %736 = vmatprep.mubr.f32.mxu0 0.0
      %v737 = vand.u32 %v269, 4294901760
      %v738 = vsub.f32 %v269, %v737
      %739 = vmatmul.mubr.f32.gmra.mrb[0].mxu0 %v738
      %v740 = vpop.f32.mrb[0].mxu0
      %v741 = vadd.f32 %v594, %v740
      %v742 = vpop.f32.mrb[0].mxu0
      %743 = vmatprep.mubr.f32.mxu0 0.0
      %v744 = vand.u32 %v272, 4294901760
      %v745 = vsub.f32 %v272, %v744
      %746 = vmatmul.mubr.f32.gmra.mrb[0].mxu0 %v745
      %v747 = vpop.f32.mrb[0].mxu0
      %v748 = vadd.f32 %v600, %v747
      %v749 = vpop.f32.mrb[0].mxu0
      %750 = vmatprep.mubr.f32.mxu0 0.0
      %v751 = vand.u32 %v275, 4294901760
      %v752 = vsub.f32 %v275, %v751
      %753 = vmatmul.mubr.f32.gmra.mrb[0].mxu0 %v752
      %v754 = vpop.f32.mrb[0].mxu0
      %v755 = vadd.f32 %v606, %v754
      %v756 = vpop.f32.mrb[0].mxu0
      %757 = vmatprep.mubr.f32.mxu0 0.0
      %v758 = vand.u32 %v278, 4294901760
      %v759 = vsub.f32 %v278, %v758
      %760 = vmatmul.mubr.f32.gmra.mrb[0].mxu0 %v759
      %v761 = vpop.f32.mrb[0].mxu0
      %v762 = vadd.f32 %v612, %v761
      %v763 = vpop.f32.mrb[0].mxu0
      %764 = vmatprep.mubr.f32.mxu0 0.0
      %v765 = vand.u32 %v281, 4294901760
      %v766 = vsub.f32 %v281, %v765
      %767 = vmatmul.mubr.f32.gmra.mrb[0].mxu0 %v766
      %v768 = vpop.f32.mrb[0].mxu0
      %v769 = vadd.f32 %v618, %v768
      %v770 = vpop.f32.mrb[0].mxu0
      %771 = vdwg.mxu0
      %772 = vmatprep.subr.mxu0 0.0
      %v773 = vand.u32 %v245, 4294901760
      %774 = vmatpush1.msra.mxu0 %v773
      %775 = vmatprep.subr.mxu0 0.0
      %v776 = vand.u32 %v246, 4294901760
      %777 = vmatpush1.msra.mxu0 %v776
      %778 = vmatprep.subr.mxu0 0.0
      %v779 = vand.u32 %v247, 4294901760
      %780 = vmatpush1.msra.mxu0 %v779
      %781 = vmatprep.subr.mxu0 0.0
      %v782 = vand.u32 %v248, 4294901760
      %783 = vmatpush1.msra.mxu0 %v782
      %784 = vmatprep.subr.mxu0 0.0
      %v785 = vand.u32 %v249, 4294901760
      %786 = vmatpush1.msra.mxu0 %v785
      %787 = vmatprep.subr.mxu0 0.0
      %v788 = vand.u32 %v250, 4294901760
      %789 = vmatpush1.msra.mxu0 %v788
      %790 = vmatprep.subr.mxu0 0.0
      %v791 = vand.u32 %v251, 4294901760
      %792 = vmatpush1.msra.mxu0 %v791
      %793 = vmatprep.subr.mxu0 0.0
      %v794 = vand.u32 %v252, 4294901760
      %795 = vmatpush1.msra.mxu0 %v794
      %796 = vmatprep.subr.mxu0 0.0
      %797 = vmatpush1.msra.mxu0 0.0
      %798 = vmatprep.subr.mxu0 0.0
      %799 = vmatpush1.msra.mxu0 0.0
      %800 = vmatprep.subr.mxu0 0.0
      %801 = vmatpush1.msra.mxu0 0.0
      %802 = vmatprep.subr.mxu0 0.0
      %803 = vmatpush1.msra.mxu0 0.0
      %804 = vmatprep.subr.mxu0 0.0
      %805 = vmatpush1.msra.mxu0 0.0
      %806 = vmatprep.subr.mxu0 0.0
      %807 = vmatpush1.msra.mxu0 0.0
      %808 = vmatprep.subr.mxu0 0.0
      %809 = vmatpush1.msra.mxu0 0.0
      %810 = vmatprep.subr.mxu0 0.0
      %811 = vmatpush1.msra.mxu0 0.0
      %812 = vmatprep.subr.mxu0 0.0
      %813 = vmatpush1.msra.mxu0 0.0
      %814 = vmatprep.subr.mxu0 0.0
      %815 = vmatpush1.msra.mxu0 0.0
      %816 = vmatprep.subr.mxu0 0.0
      %817 = vmatpush1.msra.mxu0 0.0
      %818 = vmatprep.subr.mxu0 0.0
      %819 = vmatpush1.msra.mxu0 0.0
      %820 = vmatprep.subr.mxu0 0.0
      %821 = vmatpush1.msra.mxu0 0.0
      %822 = vmatprep.subr.mxu0 0.0
      %823 = vmatpush1.msra.mxu0 0.0
      %824 = vmatprep.subr.mxu0 0.0
      %825 = vmatpush1.msra.mxu0 0.0
      %826 = vmatprep.subr.mxu0 0.0
      %827 = vmatpush1.msra.mxu0 0.0
      %828 = vmatprep.subr.mxu0 0.0
      %829 = vmatpush1.msra.mxu0 0.0
      %830 = vmatprep.subr.mxu0 0.0
      %831 = vmatpush1.msra.mxu0 0.0
      %832 = vmatprep.subr.mxu0 0.0
      %833 = vmatpush1.msra.mxu0 0.0
      %834 = vmatprep.subr.mxu0 0.0
      %835 = vmatpush1.msra.mxu0 0.0
      %836 = vmatprep.subr.mxu0 0.0
      %837 = vmatpush1.msra.mxu0 0.0
      %838 = vmatprep.subr.mxu0 0.0
      %839 = vmatpush1.msra.mxu0 0.0
      %840 = vmatprep.subr.mxu0 0.0
      %841 = vmatpush1.msra.mxu0 0.0
      %842 = vmatprep.subr.mxu0 0.0
      %843 = vmatpush1.msra.mxu0 0.0
      %844 = vmatprep.mubr.f32.mxu0 0.0
      %v845 = vand.u32 %v254, 4294901760
      %v846 = vsub.f32 %v254, %v845
      %v847 = vand.u32 %v846, 4294901760
      %848 = vmatmul.mubr.f32.gmra.mrb[0].mxu0 %v847
      %v849 = vpop.f32.mrb[0].mxu0
      %v850 = vadd.f32 %v706, %v849
      %v851 = vpop.f32.mrb[0].mxu0
      %852 = vmatprep.mubr.f32.mxu0 0.0
      %v853 = vand.u32 %v257, 4294901760
      %v854 = vsub.f32 %v257, %v853
      %v855 = vand.u32 %v854, 4294901760
      %856 = vmatmul.mubr.f32.gmra.mrb[0].mxu0 %v855
      %v857 = vpop.f32.mrb[0].mxu0
      %v858 = vadd.f32 %v713, %v857
      %v859 = vpop.f32.mrb[0].mxu0
      %860 = vmatprep.mubr.f32.mxu0 0.0
      %v861 = vand.u32 %v260, 4294901760
      %v862 = vsub.f32 %v260, %v861
      %v863 = vand.u32 %v862, 4294901760
      %864 = vmatmul.mubr.f32.gmra.mrb[0].mxu0 %v863
      %v865 = vpop.f32.mrb[0].mxu0
      %v866 = vadd.f32 %v720, %v865
      %v867 = vpop.f32.mrb[0].mxu0
      %868 = vmatprep.mubr.f32.mxu0 0.0
      %v869 = vand.u32 %v263, 4294901760
      %v870 = vsub.f32 %v263, %v869
      %v871 = vand.u32 %v870, 4294901760
      %872 = vmatmul.mubr.f32.gmra.mrb[0].mxu0 %v871
      %v873 = vpop.f32.mrb[0].mxu0
      %v874 = vadd.f32 %v727, %v873
      %v875 = vpop.f32.mrb[0].mxu0
      %876 = vmatprep.mubr.f32.mxu0 0.0
      %v877 = vand.u32 %v266, 4294901760
      %v878 = vsub.f32 %v266, %v877
      %v879 = vand.u32 %v878, 4294901760
      %880 = vmatmul.mubr.f32.gmra.mrb[0].mxu0 %v879
      %v881 = vpop.f32.mrb[0].mxu0
      %v882 = vadd.f32 %v734, %v881
      %v883 = vpop.f32.mrb[0].mxu0
      %884 = vmatprep.mubr.f32.mxu0 0.0
      %v885 = vand.u32 %v269, 4294901760
      %v886 = vsub.f32 %v269, %v885
      %v887 = vand.u32 %v886, 4294901760
      %888 = vmatmul.mubr.f32.gmra.mrb[0].mxu0 %v887
      %v889 = vpop.f32.mrb[0].mxu0
      %v890 = vadd.f32 %v741, %v889
      %v891 = vpop.f32.mrb[0].mxu0
      %892 = vmatprep.mubr.f32.mxu0 0.0
      %v893 = vand.u32 %v272, 4294901760
      %v894 = vsub.f32 %v272, %v893
      %v895 = vand.u32 %v894, 4294901760
      %896 = vmatmul.mubr.f32.gmra.mrb[0].mxu0 %v895
      %v897 = vpop.f32.mrb[0].mxu0
      %v898 = vadd.f32 %v748, %v897
      %v899 = vpop.f32.mrb[0].mxu0
      %900 = vmatprep.mubr.f32.mxu0 0.0
      %v901 = vand.u32 %v275, 4294901760
      %v902 = vsub.f32 %v275, %v901
      %v903 = vand.u32 %v902, 4294901760
      %904 = vmatmul.mubr.f32.gmra.mrb[0].mxu0 %v903
      %v905 = vpop.f32.mrb[0].mxu0
      %v906 = vadd.f32 %v755, %v905
      %v907 = vpop.f32.mrb[0].mxu0
      %908 = vmatprep.mubr.f32.mxu0 0.0
      %v909 = vand.u32 %v278, 4294901760
      %v910 = vsub.f32 %v278, %v909
      %v911 = vand.u32 %v910, 4294901760
      %912 = vmatmul.mubr.f32.gmra.mrb[0].mxu0 %v911
      %v913 = vpop.f32.mrb[0].mxu0
      %v914 = vadd.f32 %v762, %v913
      %v915 = vpop.f32.mrb[0].mxu0
      %916 = vmatprep.mubr.f32.mxu0 0.0
      %v917 = vand.u32 %v281, 4294901760
      %v918 = vsub.f32 %v281, %v917
      %v919 = vand.u32 %v918, 4294901760
      %920 = vmatmul.mubr.f32.gmra.mrb[0].mxu0 %v919
      %v921 = vpop.f32.mrb[0].mxu0
      %v922 = vadd.f32 %v769, %v921
      %v923 = vpop.f32.mrb[0].mxu0
      %924 = vdwg.mxu0
      %925 = vmatprep.subr.mxu0 0.0
      %v926 = vand.u32 %v245, 4294901760
      %v927 = vsub.f32 %v245, %v926
      %v928 = vand.u32 %v927, 4294901760
      %929 = vmatpush1.msra.mxu0 %v928
      %930 = vmatprep.subr.mxu0 0.0
      %v931 = vand.u32 %v246, 4294901760
      %v932 = vsub.f32 %v246, %v931
      %v933 = vand.u32 %v932, 4294901760
      %934 = vmatpush1.msra.mxu0 %v933
      %935 = vmatprep.subr.mxu0 0.0
      %v936 = vand.u32 %v247, 4294901760
      %v937 = vsub.f32 %v247, %v936
      %v938 = vand.u32 %v937, 4294901760
      %939 = vmatpush1.msra.mxu0 %v938
      %940 = vmatprep.subr.mxu0 0.0
      %v941 = vand.u32 %v248, 4294901760
      %v942 = vsub.f32 %v248, %v941
      %v943 = vand.u32 %v942, 4294901760
      %944 = vmatpush1.msra.mxu0 %v943
      %945 = vmatprep.subr.mxu0 0.0
      %v946 = vand.u32 %v249, 4294901760
      %v947 = vsub.f32 %v249, %v946
      %v948 = vand.u32 %v947, 4294901760
      %949 = vmatpush1.msra.mxu0 %v948
      %950 = vmatprep.subr.mxu0 0.0
      %v951 = vand.u32 %v250, 4294901760
      %v952 = vsub.f32 %v250, %v951
      %v953 = vand.u32 %v952, 4294901760
      %954 = vmatpush1.msra.mxu0 %v953
      %955 = vmatprep.subr.mxu0 0.0
      %v956 = vand.u32 %v251, 4294901760
      %v957 = vsub.f32 %v251, %v956
      %v958 = vand.u32 %v957, 4294901760
      %959 = vmatpush1.msra.mxu0 %v958
      %960 = vmatprep.subr.mxu0 0.0
      %v961 = vand.u32 %v252, 4294901760
      %v962 = vsub.f32 %v252, %v961
      %v963 = vand.u32 %v962, 4294901760
      %964 = vmatpush1.msra.mxu0 %v963
      %965 = vmatprep.subr.mxu0 0.0
      %966 = vmatpush1.msra.mxu0 0.0
      %967 = vmatprep.subr.mxu0 0.0
      %968 = vmatpush1.msra.mxu0 0.0
      %969 = vmatprep.subr.mxu0 0.0
      %970 = vmatpush1.msra.mxu0 0.0
      %971 = vmatprep.subr.mxu0 0.0
      %972 = vmatpush1.msra.mxu0 0.0
      %973 = vmatprep.subr.mxu0 0.0
      %974 = vmatpush1.msra.mxu0 0.0
      %975 = vmatprep.subr.mxu0 0.0
      %976 = vmatpush1.msra.mxu0 0.0
      %977 = vmatprep.subr.mxu0 0.0
      %978 = vmatpush1.msra.mxu0 0.0
      %979 = vmatprep.subr.mxu0 0.0
      %980 = vmatpush1.msra.mxu0 0.0
      %981 = vmatprep.subr.mxu0 0.0
      %982 = vmatpush1.msra.mxu0 0.0
      %983 = vmatprep.subr.mxu0 0.0
      %984 = vmatpush1.msra.mxu0 0.0
      %985 = vmatprep.subr.mxu0 0.0
      %986 = vmatpush1.msra.mxu0 0.0
      %987 = vmatprep.subr.mxu0 0.0
      %988 = vmatpush1.msra.mxu0 0.0
      %989 = vmatprep.subr.mxu0 0.0
      %990 = vmatpush1.msra.mxu0 0.0
      %991 = vmatprep.subr.mxu0 0.0
      %992 = vmatpush1.msra.mxu0 0.0
      %993 = vmatprep.subr.mxu0 0.0
      %994 = vmatpush1.msra.mxu0 0.0
      %995 = vmatprep.subr.mxu0 0.0
      %996 = vmatpush1.msra.mxu0 0.0
      %997 = vmatprep.subr.mxu0 0.0
      %998 = vmatpush1.msra.mxu0 0.0
      %999 = vmatprep.subr.mxu0 0.0
      %1000 = vmatpush1.msra.mxu0 0.0
      %1001 = vmatprep.subr.mxu0 0.0
      %1002 = vmatpush1.msra.mxu0 0.0
      %1003 = vmatprep.subr.mxu0 0.0
      %1004 = vmatpush1.msra.mxu0 0.0
      %1005 = vmatprep.subr.mxu0 0.0
      %1006 = vmatpush1.msra.mxu0 0.0
      %1007 = vmatprep.subr.mxu0 0.0
      %1008 = vmatpush1.msra.mxu0 0.0
      %1009 = vmatprep.subr.mxu0 0.0
      %1010 = vmatpush1.msra.mxu0 0.0
      %1011 = vmatprep.subr.mxu0 0.0
      %1012 = vmatpush1.msra.mxu0 0.0
      %1013 = vmatprep.mubr.f32.mxu0 0.0
      %v1014 = vand.u32 %v254, 4294901760
      %1015 = vmatmul.mubr.f32.gmra.mrb[0].mxu0 %v1014
      %v1016 = vpop.f32.mrb[0].mxu0
      %v1017 = vadd.f32 %v850, %v1016
      %v1018 = vpop.f32.mrb[0].mxu0
      %1019 = vmatprep.mubr.f32.mxu0 0.0
      %v1020 = vand.u32 %v257, 4294901760
      %1021 = vmatmul.mubr.f32.gmra.mrb[0].mxu0 %v1020
      %v1022 = vpop.f32.mrb[0].mxu0
      %v1023 = vadd.f32 %v858, %v1022
      %v1024 = vpop.f32.mrb[0].mxu0
      %1025 = vmatprep.mubr.f32.mxu0 0.0
      %v1026 = vand.u32 %v260, 4294901760
      %1027 = vmatmul.mubr.f32.gmra.mrb[0].mxu0 %v1026
      %v1028 = vpop.f32.mrb[0].mxu0
      %v1029 = vadd.f32 %v866, %v1028
      %v1030 = vpop.f32.mrb[0].mxu0
      %1031 = vmatprep.mubr.f32.mxu0 0.0
      %v1032 = vand.u32 %v263, 4294901760
      %1033 = vmatmul.mubr.f32.gmra.mrb[0].mxu0 %v1032
      %v1034 = vpop.f32.mrb[0].mxu0
      %v1035 = vadd.f32 %v874, %v1034
      %v1036 = vpop.f32.mrb[0].mxu0
      %1037 = vmatprep.mubr.f32.mxu0 0.0
      %v1038 = vand.u32 %v266, 4294901760
      %1039 = vmatmul.mubr.f32.gmra.mrb[0].mxu0 %v1038
      %v1040 = vpop.f32.mrb[0].mxu0
      %v1041 = vadd.f32 %v882, %v1040
      %v1042 = vpop.f32.mrb[0].mxu0
      %1043 = vmatprep.mubr.f32.mxu0 0.0
      %v1044 = vand.u32 %v269, 4294901760
      %1045 = vmatmul.mubr.f32.gmra.mrb[0].mxu0 %v1044
      %v1046 = vpop.f32.mrb[0].mxu0
      %v1047 = vadd.f32 %v890, %v1046
      %v1048 = vpop.f32.mrb[0].mxu0
      %1049 = vmatprep.mubr.f32.mxu0 0.0
      %v1050 = vand.u32 %v272, 4294901760
      %1051 = vmatmul.mubr.f32.gmra.mrb[0].mxu0 %v1050
      %v1052 = vpop.f32.mrb[0].mxu0
      %v1053 = vadd.f32 %v898, %v1052
      %v1054 = vpop.f32.mrb[0].mxu0
      %1055 = vmatprep.mubr.f32.mxu0 0.0
      %v1056 = vand.u32 %v275, 4294901760
      %1057 = vmatmul.mubr.f32.gmra.mrb[0].mxu0 %v1056
      %v1058 = vpop.f32.mrb[0].mxu0
      %v1059 = vadd.f32 %v906, %v1058
      %v1060 = vpop.f32.mrb[0].mxu0
      %1061 = vmatprep.mubr.f32.mxu0 0.0
      %v1062 = vand.u32 %v278, 4294901760
      %1063 = vmatmul.mubr.f32.gmra.mrb[0].mxu0 %v1062
      %v1064 = vpop.f32.mrb[0].mxu0
      %v1065 = vadd.f32 %v914, %v1064
      %v1066 = vpop.f32.mrb[0].mxu0
      %1067 = vmatprep.mubr.f32.mxu0 0.0
      %v1068 = vand.u32 %v281, 4294901760
      %1069 = vmatmul.mubr.f32.gmra.mrb[0].mxu0 %v1068
      %v1070 = vpop.f32.mrb[0].mxu0
      %v1071 = vadd.f32 %v922, %v1070
      %v1072 = vpop.f32.mrb[0].mxu0
      %1073 = vdwg.mxu0
      %1074 = vmatprep.subr.mxu0 0.0
      %v1075 = vand.u32 %v245, 4294901760
      %1076 = vmatpush1.msra.mxu0 %v1075
      %1077 = vmatprep.subr.mxu0 0.0
      %v1078 = vand.u32 %v246, 4294901760
      %1079 = vmatpush1.msra.mxu0 %v1078
      %1080 = vmatprep.subr.mxu0 0.0
      %v1081 = vand.u32 %v247, 4294901760
      %1082 = vmatpush1.msra.mxu0 %v1081
      %1083 = vmatprep.subr.mxu0 0.0
      %v1084 = vand.u32 %v248, 4294901760
      %1085 = vmatpush1.msra.mxu0 %v1084
      %1086 = vmatprep.subr.mxu0 0.0
      %v1087 = vand.u32 %v249, 4294901760
      %1088 = vmatpush1.msra.mxu0 %v1087
      %1089 = vmatprep.subr.mxu0 0.0
      %v1090 = vand.u32 %v250, 4294901760
      %1091 = vmatpush1.msra.mxu0 %v1090
      %1092 = vmatprep.subr.mxu0 0.0
      %v1093 = vand.u32 %v251, 4294901760
      %1094 = vmatpush1.msra.mxu0 %v1093
      %1095 = vmatprep.subr.mxu0 0.0
      %v1096 = vand.u32 %v252, 4294901760
      %1097 = vmatpush1.msra.mxu0 %v1096
      %1098 = vmatprep.subr.mxu0 0.0
      %1099 = vmatpush1.msra.mxu0 0.0
      %1100 = vmatprep.subr.mxu0 0.0
      %1101 = vmatpush1.msra.mxu0 0.0
      %1102 = vmatprep.subr.mxu0 0.0
      %1103 = vmatpush1.msra.mxu0 0.0
      %1104 = vmatprep.subr.mxu0 0.0
      %1105 = vmatpush1.msra.mxu0 0.0
      %1106 = vmatprep.subr.mxu0 0.0
      %1107 = vmatpush1.msra.mxu0 0.0
      %1108 = vmatprep.subr.mxu0 0.0
      %1109 = vmatpush1.msra.mxu0 0.0
      %1110 = vmatprep.subr.mxu0 0.0
      %1111 = vmatpush1.msra.mxu0 0.0
      %1112 = vmatprep.subr.mxu0 0.0
      %1113 = vmatpush1.msra.mxu0 0.0
      %1114 = vmatprep.subr.mxu0 0.0
      %1115 = vmatpush1.msra.mxu0 0.0
      %1116 = vmatprep.subr.mxu0 0.0
      %1117 = vmatpush1.msra.mxu0 0.0
      %1118 = vmatprep.subr.mxu0 0.0
      %1119 = vmatpush1.msra.mxu0 0.0
      %1120 = vmatprep.subr.mxu0 0.0
      %1121 = vmatpush1.msra.mxu0 0.0
      %1122 = vmatprep.subr.mxu0 0.0
      %1123 = vmatpush1.msra.mxu0 0.0
      %1124 = vmatprep.subr.mxu0 0.0
      %1125 = vmatpush1.msra.mxu0 0.0
      %1126 = vmatprep.subr.mxu0 0.0
      %1127 = vmatpush1.msra.mxu0 0.0
      %1128 = vmatprep.subr.mxu0 0.0
      %1129 = vmatpush1.msra.mxu0 0.0
      %1130 = vmatprep.subr.mxu0 0.0
      %1131 = vmatpush1.msra.mxu0 0.0
      %1132 = vmatprep.subr.mxu0 0.0
      %1133 = vmatpush1.msra.mxu0 0.0
      %1134 = vmatprep.subr.mxu0 0.0
      %1135 = vmatpush1.msra.mxu0 0.0
      %1136 = vmatprep.subr.mxu0 0.0
      %1137 = vmatpush1.msra.mxu0 0.0
      %1138 = vmatprep.subr.mxu0 0.0
      %1139 = vmatpush1.msra.mxu0 0.0
      %1140 = vmatprep.subr.mxu0 0.0
      %1141 = vmatpush1.msra.mxu0 0.0
      %1142 = vmatprep.subr.mxu0 0.0
      %1143 = vmatpush1.msra.mxu0 0.0
      %1144 = vmatprep.subr.mxu0 0.0
      %1145 = vmatpush1.msra.mxu0 0.0
      %1146 = vmatprep.mubr.f32.mxu0 0.0
      %v1147 = vand.u32 %v254, 4294901760
      %1148 = vmatmul.mubr.f32.gmra.mrb[0].mxu0 %v1147
      %v1149 = vpop.f32.mrb[0].mxu0
      %v1150 = vadd.f32 %v1017, %v1149
      %v1151 = vpop.f32.mrb[0].mxu0
      %1152 = vmatprep.mubr.f32.mxu0 0.0
      %v1153 = vand.u32 %v257, 4294901760
      %1154 = vmatmul.mubr.f32.gmra.mrb[0].mxu0 %v1153
      %v1155 = vpop.f32.mrb[0].mxu0
      %v1156 = vadd.f32 %v1023, %v1155
      %v1157 = vpop.f32.mrb[0].mxu0
      %1158 = vmatprep.mubr.f32.mxu0 0.0
      %v1159 = vand.u32 %v260, 4294901760
      %1160 = vmatmul.mubr.f32.gmra.mrb[0].mxu0 %v1159
      %v1161 = vpop.f32.mrb[0].mxu0
      %v1162 = vadd.f32 %v1029, %v1161
      %v1163 = vpop.f32.mrb[0].mxu0
      %1164 = vmatprep.mubr.f32.mxu0 0.0
      %v1165 = vand.u32 %v263, 4294901760
      %1166 = vmatmul.mubr.f32.gmra.mrb[0].mxu0 %v1165
      %v1167 = vpop.f32.mrb[0].mxu0
      %v1168 = vadd.f32 %v1035, %v1167
      %v1169 = vpop.f32.mrb[0].mxu0
      %1170 = vmatprep.mubr.f32.mxu0 0.0
      %v1171 = vand.u32 %v266, 4294901760
      %1172 = vmatmul.mubr.f32.gmra.mrb[0].mxu0 %v1171
      %v1173 = vpop.f32.mrb[0].mxu0
      %v1174 = vadd.f32 %v1041, %v1173
      %v1175 = vpop.f32.mrb[0].mxu0
      %1176 = vmatprep.mubr.f32.mxu0 0.0
      %v1177 = vand.u32 %v269, 4294901760
      %1178 = vmatmul.mubr.f32.gmra.mrb[0].mxu0 %v1177
      %v1179 = vpop.f32.mrb[0].mxu0
      %v1180 = vadd.f32 %v1047, %v1179
      %v1181 = vpop.f32.mrb[0].mxu0
      %1182 = vmatprep.mubr.f32.mxu0 0.0
      %v1183 = vand.u32 %v272, 4294901760
      %1184 = vmatmul.mubr.f32.gmra.mrb[0].mxu0 %v1183
      %v1185 = vpop.f32.mrb[0].mxu0
      %v1186 = vadd.f32 %v1053, %v1185
      %v1187 = vpop.f32.mrb[0].mxu0
      %1188 = vmatprep.mubr.f32.mxu0 0.0
      %v1189 = vand.u32 %v275, 4294901760
      %1190 = vmatmul.mubr.f32.gmra.mrb[0].mxu0 %v1189
      %v1191 = vpop.f32.mrb[0].mxu0
      %v1192 = vadd.f32 %v1059, %v1191
      %v1193 = vpop.f32.mrb[0].mxu0
      %1194 = vmatprep.mubr.f32.mxu0 0.0
      %v1195 = vand.u32 %v278, 4294901760
      %1196 = vmatmul.mubr.f32.gmra.mrb[0].mxu0 %v1195
      %v1197 = vpop.f32.mrb[0].mxu0
      %v1198 = vadd.f32 %v1065, %v1197
      %v1199 = vpop.f32.mrb[0].mxu0
      %1200 = vmatprep.mubr.f32.mxu0 0.0
      %v1201 = vand.u32 %v281, 4294901760
      %1202 = vmatmul.mubr.f32.gmra.mrb[0].mxu0 %v1201
      %v1203 = vpop.f32.mrb[0].mxu0
      %v1204 = vadd.f32 %v1071, %v1203
      %v1205 = vpop.f32.mrb[0].mxu0
      %1206 = vdwg.mxu0
      %v1207 = vld [vmem:[%s3] sm:$0xff]
      %v1208 = vld [vmem:[%s3 + $0x8] sm:$0xff]
      %vm1209 = vcmask 130048
      %v1211 = vsel %vm1209, %v1207, 0
      %v1214 = vsel %vm1209, %v1208, 0
      %1216 = vmatprep.subr.mxu0 0.0
      %v1217 = vand.u32 %v1150, 4294901760
      %1218 = vmatpush1.msra.mxu0 %v1217
      %1219 = vmatprep.subr.mxu0 0.0
      %v1220 = vand.u32 %v1156, 4294901760
      %1221 = vmatpush1.msra.mxu0 %v1220
      %1222 = vmatprep.subr.mxu0 0.0
      %1223 = vmatpush1.msra.mxu0 0.0
      %1224 = vmatprep.subr.mxu0 0.0
      %1225 = vmatpush1.msra.mxu0 0.0
      %1226 = vmatprep.subr.mxu0 0.0
      %1227 = vmatpush1.msra.mxu0 0.0
      %1228 = vmatprep.subr.mxu0 0.0
      %1229 = vmatpush1.msra.mxu0 0.0
      %1230 = vmatprep.subr.mxu0 0.0
      %1231 = vmatpush1.msra.mxu0 0.0
      %1232 = vmatprep.subr.mxu0 0.0
      %1233 = vmatpush1.msra.mxu0 0.0
      %1234 = vmatprep.subr.mxu0 0.0
      %1235 = vmatpush1.msra.mxu0 0.0
      %1236 = vmatprep.subr.mxu0 0.0
      %1237 = vmatpush1.msra.mxu0 0.0
      %1238 = vmatprep.subr.mxu0 0.0
      %1239 = vmatpush1.msra.mxu0 0.0
      %1240 = vmatprep.subr.mxu0 0.0
      %1241 = vmatpush1.msra.mxu0 0.0
      %1242 = vmatprep.subr.mxu0 0.0
      %1243 = vmatpush1.msra.mxu0 0.0
      %1244 = vmatprep.subr.mxu0 0.0
      %1245 = vmatpush1.msra.mxu0 0.0
      %1246 = vmatprep.subr.mxu0 0.0
      %1247 = vmatpush1.msra.mxu0 0.0
      %1248 = vmatprep.subr.mxu0 0.0
      %1249 = vmatpush1.msra.mxu0 0.0
      %1250 = vmatprep.subr.mxu0 0.0
      %1251 = vmatpush1.msra.mxu0 0.0
      %1252 = vmatprep.subr.mxu0 0.0
      %1253 = vmatpush1.msra.mxu0 0.0
      %1254 = vmatprep.subr.mxu0 0.0
      %1255 = vmatpush1.msra.mxu0 0.0
      %1256 = vmatprep.subr.mxu0 0.0
      %1257 = vmatpush1.msra.mxu0 0.0
      %1258 = vmatprep.subr.mxu0 0.0
      %1259 = vmatpush1.msra.mxu0 0.0
      %1260 = vmatprep.subr.mxu0 0.0
      %1261 = vmatpush1.msra.mxu0 0.0
      %1262 = vmatprep.subr.mxu0 0.0
      %1263 = vmatpush1.msra.mxu0 0.0
      %1264 = vmatprep.subr.mxu0 0.0
      %1265 = vmatpush1.msra.mxu0 0.0
      %1266 = vmatprep.subr.mxu0 0.0
      %1267 = vmatpush1.msra.mxu0 0.0
      %1268 = vmatprep.subr.mxu0 0.0
      %1269 = vmatpush1.msra.mxu0 0.0
      %1270 = vmatprep.subr.mxu0 0.0
      %1271 = vmatpush1.msra.mxu0 0.0
      %1272 = vmatprep.subr.mxu0 0.0
      %1273 = vmatpush1.msra.mxu0 0.0
      %1274 = vmatprep.subr.mxu0 0.0
      %1275 = vmatpush1.msra.mxu0 0.0
      %1276 = vmatprep.subr.mxu0 0.0
      %1277 = vmatpush1.msra.mxu0 0.0
      %1278 = vmatprep.subr.mxu0 0.0
      %1279 = vmatpush1.msra.mxu0 0.0
      %1280 = vmatprep.subr.mxu0 0.0
      %1281 = vmatpush1.msra.mxu0 0.0
      %1282 = vmatprep.mubr.f32.mxu0 0.0
      %v1283 = vand.u32 %v1211, 4294901760
      %v1284 = vsub.f32 %v1211, %v1283
      %v1285 = vand.u32 %v1284, 4294901760
      %v1286 = vsub.f32 %v1284, %v1285
      %v1287 = vand.u32 %v1286, 4294901760
      %1288 = vmatmul.mubr.f32.gmra.mrb[0].mxu0 %v1287
      %v1289 = vpop.f32.mrb[0].mxu0
      %v1290 = vadd.f32 0.0, %v1289
      %v1291 = vpop.f32.mrb[0].mxu0
      %1292 = vmatprep.mubr.f32.mxu0 0.0
      %v1293 = vand.u32 %v1214, 4294901760
      %v1294 = vsub.f32 %v1214, %v1293
      %v1295 = vand.u32 %v1294, 4294901760
      %v1296 = vsub.f32 %v1294, %v1295
      %v1297 = vand.u32 %v1296, 4294901760
      %1298 = vmatmul.mubr.f32.gmra.mrb[0].mxu0 %v1297
      %v1299 = vpop.f32.mrb[0].mxu0
      %v1300 = vadd.f32 0.0, %v1299
      %v1301 = vpop.f32.mrb[0].mxu0
      %1302 = vdwg.mxu0
      %1303 = vmatprep.subr.mxu0 0.0
      %v1304 = vand.u32 %v1150, 4294901760
      %v1305 = vsub.f32 %v1150, %v1304
      %v1306 = vand.u32 %v1305, 4294901760
      %v1307 = vsub.f32 %v1305, %v1306
      %v1308 = vand.u32 %v1307, 4294901760
      %1309 = vmatpush1.msra.mxu0 %v1308
      %1310 = vmatprep.subr.mxu0 0.0
      %v1311 = vand.u32 %v1156, 4294901760
      %v1312 = vsub.f32 %v1156, %v1311
      %v1313 = vand.u32 %v1312, 4294901760
      %v1314 = vsub.f32 %v1312, %v1313
      %v1315 = vand.u32 %v1314, 4294901760
      %1316 = vmatpush1.msra.mxu0 %v1315
      %1317 = vmatprep.subr.mxu0 0.0
      %1318 = vmatpush1.msra.mxu0 0.0
      %1319 = vmatprep.subr.mxu0 0.0
      %1320 = vmatpush1.msra.mxu0 0.0
      %1321 = vmatprep.subr.mxu0 0.0
      %1322 = vmatpush1.msra.mxu0 0.0
      %1323 = vmatprep.subr.mxu0 0.0
      %1324 = vmatpush1.msra.mxu0 0.0
      %1325 = vmatprep.subr.mxu0 0.0
      %1326 = vmatpush1.msra.mxu0 0.0
      %1327 = vmatprep.subr.mxu0 0.0
      %1328 = vmatpush1.msra.mxu0 0.0
      %1329 = vmatprep.subr.mxu0 0.0
      %1330 = vmatpush1.msra.mxu0 0.0
      %1331 = vmatprep.subr.mxu0 0.0
      %1332 = vmatpush1.msra.mxu0 0.0
      %1333 = vmatprep.subr.mxu0 0.0
      %1334 = vmatpush1.msra.mxu0 0.0
      %1335 = vmatprep.subr.mxu0 0.0
      %1336 = vmatpush1.msra.mxu0 0.0
      %1337 = vmatprep.subr.mxu0 0.0
      %1338 = vmatpush1.msra.mxu0 0.0
      %1339 = vmatprep.subr.mxu0 0.0
      %1340 = vmatpush1.msra.mxu0 0.0
      %1341 = vmatprep.subr.mxu0 0.0
      %1342 = vmatpush1.msra.mxu0 0.0
      %1343 = vmatprep.subr.mxu0 0.0
      %1344 = vmatpush1.msra.mxu0 0.0
      %1345 = vmatprep.subr.mxu0 0.0
      %1346 = vmatpush1.msra.mxu0 0.0
      %1347 = vmatprep.subr.mxu0 0.0
      %1348 = vmatpush1.msra.mxu0 0.0
      %1349 = vmatprep.subr.mxu0 0.0
      %1350 = vmatpush1.msra.mxu0 0.0
      %1351 = vmatprep.subr.mxu0 0.0
      %1352 = vmatpush1.msra.mxu0 0.0
      %1353 = vmatprep.subr.mxu0 0.0
      %1354 = vmatpush1.msra.mxu0 0.0
      %1355 = vmatprep.subr.mxu0 0.0
      %1356 = vmatpush1.msra.mxu0 0.0
      %1357 = vmatprep.subr.mxu0 0.0
      %1358 = vmatpush1.msra.mxu0 0.0
      %1359 = vmatprep.subr.mxu0 0.0
      %1360 = vmatpush1.msra.mxu0 0.0
      %1361 = vmatprep.subr.mxu0 0.0
      %1362 = vmatpush1.msra.mxu0 0.0
      %1363 = vmatprep.subr.mxu0 0.0
      %1364 = vmatpush1.msra.mxu0 0.0
      %1365 = vmatprep.subr.mxu0 0.0
      %1366 = vmatpush1.msra.mxu0 0.0
      %1367 = vmatprep.subr.mxu0 0.0
      %1368 = vmatpush1.msra.mxu0 0.0
      %1369 = vmatprep.subr.mxu0 0.0
      %1370 = vmatpush1.msra.mxu0 0.0
      %1371 = vmatprep.subr.mxu0 0.0
      %1372 = vmatpush1.msra.mxu0 0.0
      %1373 = vmatprep.subr.mxu0 0.0
      %1374 = vmatpush1.msra.mxu0 0.0
      %1375 = vmatprep.subr.mxu0 0.0
      %1376 = vmatpush1.msra.mxu0 0.0
      %1377 = vmatprep.mubr.f32.mxu0 0.0
      %v1378 = vand.u32 %v1211, 4294901760
      %1379 = vmatmul.mubr.f32.gmra.mrb[0].mxu0 %v1378
      %v1380 = vpop.f32.mrb[0].mxu0
      %v1381 = vadd.f32 %v1290, %v1380
      %v1382 = vpop.f32.mrb[0].mxu0
      %1383 = vmatprep.mubr.f32.mxu0 0.0
      %v1384 = vand.u32 %v1214, 4294901760
      %1385 = vmatmul.mubr.f32.gmra.mrb[0].mxu0 %v1384
      %v1386 = vpop.f32.mrb[0].mxu0
      %v1387 = vadd.f32 %v1300, %v1386
      %v1388 = vpop.f32.mrb[0].mxu0
      %1389 = vdwg.mxu0
      %1390 = vmatprep.subr.mxu0 0.0
      %v1391 = vand.u32 %v1150, 4294901760
      %v1392 = vsub.f32 %v1150, %v1391
      %1393 = vmatpush1.msra.mxu0 %v1392
      %1394 = vmatprep.subr.mxu0 0.0
      %v1395 = vand.u32 %v1156, 4294901760
      %v1396 = vsub.f32 %v1156, %v1395
      %1397 = vmatpush1.msra.mxu0 %v1396
      %1398 = vmatprep.subr.mxu0 0.0
      %1399 = vmatpush1.msra.mxu0 0.0
      %1400 = vmatprep.subr.mxu0 0.0
      %1401 = vmatpush1.msra.mxu0 0.0
      %1402 = vmatprep.subr.mxu0 0.0
      %1403 = vmatpush1.msra.mxu0 0.0
      %1404 = vmatprep.subr.mxu0 0.0
      %1405 = vmatpush1.msra.mxu0 0.0
      %1406 = vmatprep.subr.mxu0 0.0
      %1407 = vmatpush1.msra.mxu0 0.0
      %1408 = vmatprep.subr.mxu0 0.0
      %1409 = vmatpush1.msra.mxu0 0.0
      %1410 = vmatprep.subr.mxu0 0.0
      %1411 = vmatpush1.msra.mxu0 0.0
      %1412 = vmatprep.subr.mxu0 0.0
      %1413 = vmatpush1.msra.mxu0 0.0
      %1414 = vmatprep.subr.mxu0 0.0
      %1415 = vmatpush1.msra.mxu0 0.0
      %1416 = vmatprep.subr.mxu0 0.0
      %1417 = vmatpush1.msra.mxu0 0.0
      %1418 = vmatprep.subr.mxu0 0.0
      %1419 = vmatpush1.msra.mxu0 0.0
      %1420 = vmatprep.subr.mxu0 0.0
      %1421 = vmatpush1.msra.mxu0 0.0
      %1422 = vmatprep.subr.mxu0 0.0
      %1423 = vmatpush1.msra.mxu0 0.0
      %1424 = vmatprep.subr.mxu0 0.0
      %1425 = vmatpush1.msra.mxu0 0.0
      %1426 = vmatprep.subr.mxu0 0.0
      %1427 = vmatpush1.msra.mxu0 0.0
      %1428 = vmatprep.subr.mxu0 0.0
      %1429 = vmatpush1.msra.mxu0 0.0
      %1430 = vmatprep.subr.mxu0 0.0
      %1431 = vmatpush1.msra.mxu0 0.0
      %1432 = vmatprep.subr.mxu0 0.0
      %1433 = vmatpush1.msra.mxu0 0.0
      %1434 = vmatprep.subr.mxu0 0.0
      %1435 = vmatpush1.msra.mxu0 0.0
      %1436 = vmatprep.subr.mxu0 0.0
      %1437 = vmatpush1.msra.mxu0 0.0
      %1438 = vmatprep.subr.mxu0 0.0
      %1439 = vmatpush1.msra.mxu0 0.0
      %1440 = vmatprep.subr.mxu0 0.0
      %1441 = vmatpush1.msra.mxu0 0.0
      %1442 = vmatprep.subr.mxu0 0.0
      %1443 = vmatpush1.msra.mxu0 0.0
      %1444 = vmatprep.subr.mxu0 0.0
      %1445 = vmatpush1.msra.mxu0 0.0
      %1446 = vmatprep.subr.mxu0 0.0
      %1447 = vmatpush1.msra.mxu0 0.0
      %1448 = vmatprep.subr.mxu0 0.0
      %1449 = vmatpush1.msra.mxu0 0.0
      %1450 = vmatprep.subr.mxu0 0.0
      %1451 = vmatpush1.msra.mxu0 0.0
      %1452 = vmatprep.subr.mxu0 0.0
      %1453 = vmatpush1.msra.mxu0 0.0
      %1454 = vmatprep.subr.mxu0 0.0
      %1455 = vmatpush1.msra.mxu0 0.0
      %1456 = vmatprep.subr.mxu0 0.0
      %1457 = vmatpush1.msra.mxu0 0.0
      %1458 = vmatprep.mubr.f32.mxu0 0.0
      %v1459 = vand.u32 %v1211, 4294901760
      %v1460 = vsub.f32 %v1211, %v1459
      %1461 = vmatmul.mubr.f32.gmra.mrb[0].mxu0 %v1460
      %v1462 = vpop.f32.mrb[0].mxu0
      %v1463 = vadd.f32 %v1381, %v1462
      %v1464 = vpop.f32.mrb[0].mxu0
      %1465 = vmatprep.mubr.f32.mxu0 0.0
      %v1466 = vand.u32 %v1214, 4294901760
      %v1467 = vsub.f32 %v1214, %v1466
      %1468 = vmatmul.mubr.f32.gmra.mrb[0].mxu0 %v1467
      %v1469 = vpop.f32.mrb[0].mxu0
      %v1470 = vadd.f32 %v1387, %v1469
      %v1471 = vpop.f32.mrb[0].mxu0
      %1472 = vdwg.mxu0
      %1473 = vmatprep.subr.mxu0 0.0
      %v1474 = vand.u32 %v1150, 4294901760
      %1475 = vmatpush1.msra.mxu0 %v1474
      %1476 = vmatprep.subr.mxu0 0.0
      %v1477 = vand.u32 %v1156, 4294901760
      %1478 = vmatpush1.msra.mxu0 %v1477
      %1479 = vmatprep.subr.mxu0 0.0
      %1480 = vmatpush1.msra.mxu0 0.0
      %1481 = vmatprep.subr.mxu0 0.0
      %1482 = vmatpush1.msra.mxu0 0.0
      %1483 = vmatprep.subr.mxu0 0.0
      %1484 = vmatpush1.msra.mxu0 0.0
      %1485 = vmatprep.subr.mxu0 0.0
      %1486 = vmatpush1.msra.mxu0 0.0
      %1487 = vmatprep.subr.mxu0 0.0
      %1488 = vmatpush1.msra.mxu0 0.0
      %1489 = vmatprep.subr.mxu0 0.0
      %1490 = vmatpush1.msra.mxu0 0.0
      %1491 = vmatprep.subr.mxu0 0.0
      %1492 = vmatpush1.msra.mxu0 0.0
      %1493 = vmatprep.subr.mxu0 0.0
      %1494 = vmatpush1.msra.mxu0 0.0
      %1495 = vmatprep.subr.mxu0 0.0
      %1496 = vmatpush1.msra.mxu0 0.0
      %1497 = vmatprep.subr.mxu0 0.0
      %1498 = vmatpush1.msra.mxu0 0.0
      %1499 = vmatprep.subr.mxu0 0.0
      %1500 = vmatpush1.msra.mxu0 0.0
      %1501 = vmatprep.subr.mxu0 0.0
      %1502 = vmatpush1.msra.mxu0 0.0
      %1503 = vmatprep.subr.mxu0 0.0
      %1504 = vmatpush1.msra.mxu0 0.0
      %1505 = vmatprep.subr.mxu0 0.0
      %1506 = vmatpush1.msra.mxu0 0.0
      %1507 = vmatprep.subr.mxu0 0.0
      %1508 = vmatpush1.msra.mxu0 0.0
      %1509 = vmatprep.subr.mxu0 0.0
      %1510 = vmatpush1.msra.mxu0 0.0
      %1511 = vmatprep.subr.mxu0 0.0
      %1512 = vmatpush1.msra.mxu0 0.0
      %1513 = vmatprep.subr.mxu0 0.0
      %1514 = vmatpush1.msra.mxu0 0.0
      %1515 = vmatprep.subr.mxu0 0.0
      %1516 = vmatpush1.msra.mxu0 0.0
      %1517 = vmatprep.subr.mxu0 0.0
      %1518 = vmatpush1.msra.mxu0 0.0
      %1519 = vmatprep.subr.mxu0 0.0
      %1520 = vmatpush1.msra.mxu0 0.0
      %1521 = vmatprep.subr.mxu0 0.0
      %1522 = vmatpush1.msra.mxu0 0.0
      %1523 = vmatprep.subr.mxu0 0.0
      %1524 = vmatpush1.msra.mxu0 0.0
      %1525 = vmatprep.subr.mxu0 0.0
      %1526 = vmatpush1.msra.mxu0 0.0
      %1527 = vmatprep.subr.mxu0 0.0
      %1528 = vmatpush1.msra.mxu0 0.0
      %1529 = vmatprep.subr.mxu0 0.0
      %1530 = vmatpush1.msra.mxu0 0.0
      %1531 = vmatprep.subr.mxu0 0.0
      %1532 = vmatpush1.msra.mxu0 0.0
      %1533 = vmatprep.subr.mxu0 0.0
      %1534 = vmatpush1.msra.mxu0 0.0
      %1535 = vmatprep.subr.mxu0 0.0
      %1536 = vmatpush1.msra.mxu0 0.0
      %1537 = vmatprep.subr.mxu0 0.0
      %1538 = vmatpush1.msra.mxu0 0.0
      %1539 = vmatprep.mubr.f32.mxu0 0.0
      %v1540 = vand.u32 %v1211, 4294901760
      %v1541 = vsub.f32 %v1211, %v1540
      %v1542 = vand.u32 %v1541, 4294901760
      %1543 = vmatmul.mubr.f32.gmra.mrb[0].mxu0 %v1542
      %v1544 = vpop.f32.mrb[0].mxu0
      %v1545 = vadd.f32 %v1463, %v1544
      %v1546 = vpop.f32.mrb[0].mxu0
      %1547 = vmatprep.mubr.f32.mxu0 0.0
      %v1548 = vand.u32 %v1214, 4294901760
      %v1549 = vsub.f32 %v1214, %v1548
      %v1550 = vand.u32 %v1549, 4294901760
      %1551 = vmatmul.mubr.f32.gmra.mrb[0].mxu0 %v1550
      %v1552 = vpop.f32.mrb[0].mxu0
      %v1553 = vadd.f32 %v1470, %v1552
      %v1554 = vpop.f32.mrb[0].mxu0
      %1555 = vdwg.mxu0
      %1556 = vmatprep.subr.mxu0 0.0
      %v1557 = vand.u32 %v1150, 4294901760
      %v1558 = vsub.f32 %v1150, %v1557
      %v1559 = vand.u32 %v1558, 4294901760
      %1560 = vmatpush1.msra.mxu0 %v1559
      %1561 = vmatprep.subr.mxu0 0.0
      %v1562 = vand.u32 %v1156, 4294901760
      %v1563 = vsub.f32 %v1156, %v1562
      %v1564 = vand.u32 %v1563, 4294901760
      %1565 = vmatpush1.msra.mxu0 %v1564
      %1566 = vmatprep.subr.mxu0 0.0
      %1567 = vmatpush1.msra.mxu0 0.0
      %1568 = vmatprep.subr.mxu0 0.0
      %1569 = vmatpush1.msra.mxu0 0.0
      %1570 = vmatprep.subr.mxu0 0.0
      %1571 = vmatpush1.msra.mxu0 0.0
      %1572 = vmatprep.subr.mxu0 0.0
      %1573 = vmatpush1.msra.mxu0 0.0
      %1574 = vmatprep.subr.mxu0 0.0
      %1575 = vmatpush1.msra.mxu0 0.0
      %1576 = vmatprep.subr.mxu0 0.0
      %1577 = vmatpush1.msra.mxu0 0.0
      %1578 = vmatprep.subr.mxu0 0.0
      %1579 = vmatpush1.msra.mxu0 0.0
      %1580 = vmatprep.subr.mxu0 0.0
      %1581 = vmatpush1.msra.mxu0 0.0
      %1582 = vmatprep.subr.mxu0 0.0
      %1583 = vmatpush1.msra.mxu0 0.0
      %1584 = vmatprep.subr.mxu0 0.0
      %1585 = vmatpush1.msra.mxu0 0.0
      %1586 = vmatprep.subr.mxu0 0.0
      %1587 = vmatpush1.msra.mxu0 0.0
      %1588 = vmatprep.subr.mxu0 0.0
      %1589 = vmatpush1.msra.mxu0 0.0
      %1590 = vmatprep.subr.mxu0 0.0
      %1591 = vmatpush1.msra.mxu0 0.0
      %1592 = vmatprep.subr.mxu0 0.0
      %1593 = vmatpush1.msra.mxu0 0.0
      %1594 = vmatprep.subr.mxu0 0.0
      %1595 = vmatpush1.msra.mxu0 0.0
      %1596 = vmatprep.subr.mxu0 0.0
      %1597 = vmatpush1.msra.mxu0 0.0
      %1598 = vmatprep.subr.mxu0 0.0
      %1599 = vmatpush1.msra.mxu0 0.0
      %1600 = vmatprep.subr.mxu0 0.0
      %1601 = vmatpush1.msra.mxu0 0.0
      %1602 = vmatprep.subr.mxu0 0.0
      %1603 = vmatpush1.msra.mxu0 0.0
      %1604 = vmatprep.subr.mxu0 0.0
      %1605 = vmatpush1.msra.mxu0 0.0
      %1606 = vmatprep.subr.mxu0 0.0
      %1607 = vmatpush1.msra.mxu0 0.0
      %1608 = vmatprep.subr.mxu0 0.0
      %1609 = vmatpush1.msra.mxu0 0.0
      %1610 = vmatprep.subr.mxu0 0.0
      %1611 = vmatpush1.msra.mxu0 0.0
      %1612 = vmatprep.subr.mxu0 0.0
      %1613 = vmatpush1.msra.mxu0 0.0
      %1614 = vmatprep.subr.mxu0 0.0
      %1615 = vmatpush1.msra.mxu0 0.0
      %1616 = vmatprep.subr.mxu0 0.0
      %1617 = vmatpush1.msra.mxu0 0.0
      %1618 = vmatprep.subr.mxu0 0.0
      %1619 = vmatpush1.msra.mxu0 0.0
      %1620 = vmatprep.subr.mxu0 0.0
      %1621 = vmatpush1.msra.mxu0 0.0
      %1622 = vmatprep.subr.mxu0 0.0
      %1623 = vmatpush1.msra.mxu0 0.0
      %1624 = vmatprep.subr.mxu0 0.0
      %1625 = vmatpush1.msra.mxu0 0.0
      %1626 = vmatprep.mubr.f32.mxu0 0.0
      %v1627 = vand.u32 %v1211, 4294901760
      %1628 = vmatmul.mubr.f32.gmra.mrb[0].mxu0 %v1627
      %v1629 = vpop.f32.mrb[0].mxu0
      %v1630 = vadd.f32 %v1545, %v1629
      %v1631 = vpop.f32.mrb[0].mxu0
      %1632 = vmatprep.mubr.f32.mxu0 0.0
      %v1633 = vand.u32 %v1214, 4294901760
      %1634 = vmatmul.mubr.f32.gmra.mrb[0].mxu0 %v1633
      %v1635 = vpop.f32.mrb[0].mxu0
      %v1636 = vadd.f32 %v1553, %v1635
      %v1637 = vpop.f32.mrb[0].mxu0
      %1638 = vdwg.mxu0
      %1639 = vmatprep.subr.mxu0 0.0
      %v1640 = vand.u32 %v1150, 4294901760
      %1641 = vmatpush1.msra.mxu0 %v1640
      %1642 = vmatprep.subr.mxu0 0.0
      %v1643 = vand.u32 %v1156, 4294901760
      %1644 = vmatpush1.msra.mxu0 %v1643
      %1645 = vmatprep.subr.mxu0 0.0
      %1646 = vmatpush1.msra.mxu0 0.0
      %1647 = vmatprep.subr.mxu0 0.0
      %1648 = vmatpush1.msra.mxu0 0.0
      %1649 = vmatprep.subr.mxu0 0.0
      %1650 = vmatpush1.msra.mxu0 0.0
      %1651 = vmatprep.subr.mxu0 0.0
      %1652 = vmatpush1.msra.mxu0 0.0
      %1653 = vmatprep.subr.mxu0 0.0
      %1654 = vmatpush1.msra.mxu0 0.0
      %1655 = vmatprep.subr.mxu0 0.0
      %1656 = vmatpush1.msra.mxu0 0.0
      %1657 = vmatprep.subr.mxu0 0.0
      %1658 = vmatpush1.msra.mxu0 0.0
      %1659 = vmatprep.subr.mxu0 0.0
      %1660 = vmatpush1.msra.mxu0 0.0
      %1661 = vmatprep.subr.mxu0 0.0
      %1662 = vmatpush1.msra.mxu0 0.0
      %1663 = vmatprep.subr.mxu0 0.0
      %1664 = vmatpush1.msra.mxu0 0.0
      %1665 = vmatprep.subr.mxu0 0.0
      %1666 = vmatpush1.msra.mxu0 0.0
      %1667 = vmatprep.subr.mxu0 0.0
      %1668 = vmatpush1.msra.mxu0 0.0
      %1669 = vmatprep.subr.mxu0 0.0
      %1670 = vmatpush1.msra.mxu0 0.0
      %1671 = vmatprep.subr.mxu0 0.0
      %1672 = vmatpush1.msra.mxu0 0.0
      %1673 = vmatprep.subr.mxu0 0.0
      %1674 = vmatpush1.msra.mxu0 0.0
      %1675 = vmatprep.subr.mxu0 0.0
      %1676 = vmatpush1.msra.mxu0 0.0
      %1677 = vmatprep.subr.mxu0 0.0
      %1678 = vmatpush1.msra.mxu0 0.0
      %1679 = vmatprep.subr.mxu0 0.0
      %1680 = vmatpush1.msra.mxu0 0.0
      %1681 = vmatprep.subr.mxu0 0.0
      %1682 = vmatpush1.msra.mxu0 0.0
      %1683 = vmatprep.subr.mxu0 0.0
      %1684 = vmatpush1.msra.mxu0 0.0
      %1685 = vmatprep.subr.mxu0 0.0
      %1686 = vmatpush1.msra.mxu0 0.0
      %1687 = vmatprep.subr.mxu0 0.0
      %1688 = vmatpush1.msra.mxu0 0.0
      %1689 = vmatprep.subr.mxu0 0.0
      %1690 = vmatpush1.msra.mxu0 0.0
      %1691 = vmatprep.subr.mxu0 0.0
      %1692 = vmatpush1.msra.mxu0 0.0
      %1693 = vmatprep.subr.mxu0 0.0
      %1694 = vmatpush1.msra.mxu0 0.0
      %1695 = vmatprep.subr.mxu0 0.0
      %1696 = vmatpush1.msra.mxu0 0.0
      %1697 = vmatprep.subr.mxu0 0.0
      %1698 = vmatpush1.msra.mxu0 0.0
      %1699 = vmatprep.subr.mxu0 0.0
      %1700 = vmatpush1.msra.mxu0 0.0
      %1701 = vmatprep.subr.mxu0 0.0
      %1702 = vmatpush1.msra.mxu0 0.0
      %1703 = vmatprep.subr.mxu0 0.0
      %1704 = vmatpush1.msra.mxu0 0.0
      %1705 = vmatprep.mubr.f32.mxu0 0.0
      %v1706 = vand.u32 %v1211, 4294901760
      %1707 = vmatmul.mubr.f32.gmra.mrb[0].mxu0 %v1706
      %v1708 = vpop.f32.mrb[0].mxu0
      %v1709 = vadd.f32 %v1630, %v1708
      %v1710 = vpop.f32.mrb[0].mxu0
      %1711 = vmatprep.mubr.f32.mxu0 0.0
      %v1712 = vand.u32 %v1214, 4294901760
      %1713 = vmatmul.mubr.f32.gmra.mrb[0].mxu0 %v1712
      %v1714 = vpop.f32.mrb[0].mxu0
      %v1715 = vadd.f32 %v1636, %v1714
      %v1716 = vpop.f32.mrb[0].mxu0
      %1717 = vdwg.mxu0
      %1718 = vmatprep.subr.mxu0 0.0
      %v1719 = vand.u32 %v1162, 4294901760
      %1720 = vmatpush1.msra.mxu0 %v1719
      %1721 = vmatprep.subr.mxu0 0.0
      %v1722 = vand.u32 %v1168, 4294901760
      %1723 = vmatpush1.msra.mxu0 %v1722
      %1724 = vmatprep.subr.mxu0 0.0
      %1725 = vmatpush1.msra.mxu0 0.0
      %1726 = vmatprep.subr.mxu0 0.0
      %1727 = vmatpush1.msra.mxu0 0.0
      %1728 = vmatprep.subr.mxu0 0.0
      %1729 = vmatpush1.msra.mxu0 0.0
      %1730 = vmatprep.subr.mxu0 0.0
      %1731 = vmatpush1.msra.mxu0 0.0
      %1732 = vmatprep.subr.mxu0 0.0
      %1733 = vmatpush1.msra.mxu0 0.0
      %1734 = vmatprep.subr.mxu0 0.0
      %1735 = vmatpush1.msra.mxu0 0.0
      %1736 = vmatprep.subr.mxu0 0.0
      %1737 = vmatpush1.msra.mxu0 0.0
      %1738 = vmatprep.subr.mxu0 0.0
      %1739 = vmatpush1.msra.mxu0 0.0
      %1740 = vmatprep.subr.mxu0 0.0
      %1741 = vmatpush1.msra.mxu0 0.0
      %1742 = vmatprep.subr.mxu0 0.0
      %1743 = vmatpush1.msra.mxu0 0.0
      %1744 = vmatprep.subr.mxu0 0.0
      %1745 = vmatpush1.msra.mxu0 0.0
      %1746 = vmatprep.subr.mxu0 0.0
      %1747 = vmatpush1.msra.mxu0 0.0
      %1748 = vmatprep.subr.mxu0 0.0
      %1749 = vmatpush1.msra.mxu0 0.0
      %1750 = vmatprep.subr.mxu0 0.0
      %1751 = vmatpush1.msra.mxu0 0.0
      %1752 = vmatprep.subr.mxu0 0.0
      %1753 = vmatpush1.msra.mxu0 0.0
      %1754 = vmatprep.subr.mxu0 0.0
      %1755 = vmatpush1.msra.mxu0 0.0
      %1756 = vmatprep.subr.mxu0 0.0
      %1757 = vmatpush1.msra.mxu0 0.0
      %1758 = vmatprep.subr.mxu0 0.0
      %1759 = vmatpush1.msra.mxu0 0.0
      %1760 = vmatprep.subr.mxu0 0.0
      %1761 = vmatpush1.msra.mxu0 0.0
      %1762 = vmatprep.subr.mxu0 0.0
      %1763 = vmatpush1.msra.mxu0 0.0
      %1764 = vmatprep.subr.mxu0 0.0
      %1765 = vmatpush1.msra.mxu0 0.0
      %1766 = vmatprep.subr.mxu0 0.0
      %1767 = vmatpush1.msra.mxu0 0.0
      %1768 = vmatprep.subr.mxu0 0.0
      %1769 = vmatpush1.msra.mxu0 0.0
      %1770 = vmatprep.subr.mxu0 0.0
      %1771 = vmatpush1.msra.mxu0 0.0
      %1772 = vmatprep.subr.mxu0 0.0
      %1773 = vmatpush1.msra.mxu0 0.0
      %1774 = vmatprep.subr.mxu0 0.0
      %1775 = vmatpush1.msra.mxu0 0.0
      %1776 = vmatprep.subr.mxu0 0.0
      %1777 = vmatpush1.msra.mxu0 0.0
      %1778 = vmatprep.subr.mxu0 0.0
      %1779 = vmatpush1.msra.mxu0 0.0
      %1780 = vmatprep.subr.mxu0 0.0
      %1781 = vmatpush1.msra.mxu0 0.0
      %1782 = vmatprep.subr.mxu0 0.0
      %1783 = vmatpush1.msra.mxu0 0.0
      %1784 = vmatprep.mubr.f32.mxu0 0.0
      %v1785 = vand.u32 %v1211, 4294901760
      %v1786 = vsub.f32 %v1211, %v1785
      %v1787 = vand.u32 %v1786, 4294901760
      %v1788 = vsub.f32 %v1786, %v1787
      %v1789 = vand.u32 %v1788, 4294901760
      %1790 = vmatmul.mubr.f32.gmra.mrb[0].mxu0 %v1789
      %v1791 = vpop.f32.mrb[0].mxu0
      %v1792 = vadd.f32 0.0, %v1791
      %v1793 = vpop.f32.mrb[0].mxu0
      %1794 = vmatprep.mubr.f32.mxu0 0.0
      %v1795 = vand.u32 %v1214, 4294901760
      %v1796 = vsub.f32 %v1214, %v1795
      %v1797 = vand.u32 %v1796, 4294901760
      %v1798 = vsub.f32 %v1796, %v1797
      %v1799 = vand.u32 %v1798, 4294901760
      %1800 = vmatmul.mubr.f32.gmra.mrb[0].mxu0 %v1799
      %v1801 = vpop.f32.mrb[0].mxu0
      %v1802 = vadd.f32 0.0, %v1801
      %v1803 = vpop.f32.mrb[0].mxu0
      %1804 = vdwg.mxu0
      %1805 = vmatprep.subr.mxu0 0.0
      %v1806 = vand.u32 %v1162, 4294901760
      %v1807 = vsub.f32 %v1162, %v1806
      %v1808 = vand.u32 %v1807, 4294901760
      %v1809 = vsub.f32 %v1807, %v1808
      %v1810 = vand.u32 %v1809, 4294901760
      %1811 = vmatpush1.msra.mxu0 %v1810
      %1812 = vmatprep.subr.mxu0 0.0
      %v1813 = vand.u32 %v1168, 4294901760
      %v1814 = vsub.f32 %v1168, %v1813
      %v1815 = vand.u32 %v1814, 4294901760
      %v1816 = vsub.f32 %v1814, %v1815
      %v1817 = vand.u32 %v1816, 4294901760
      %1818 = vmatpush1.msra.mxu0 %v1817
      %1819 = vmatprep.subr.mxu0 0.0
      %1820 = vmatpush1.msra.mxu0 0.0
      %1821 = vmatprep.subr.mxu0 0.0
      %1822 = vmatpush1.msra.mxu0 0.0
      %1823 = vmatprep.subr.mxu0 0.0
      %1824 = vmatpush1.msra.mxu0 0.0
      %1825 = vmatprep.subr.mxu0 0.0
      %1826 = vmatpush1.msra.mxu0 0.0
      %1827 = vmatprep.subr.mxu0 0.0
      %1828 = vmatpush1.msra.mxu0 0.0
      %1829 = vmatprep.subr.mxu0 0.0
      %1830 = vmatpush1.msra.mxu0 0.0
      %1831 = vmatprep.subr.mxu0 0.0
      %1832 = vmatpush1.msra.mxu0 0.0
      %1833 = vmatprep.subr.mxu0 0.0
      %1834 = vmatpush1.msra.mxu0 0.0
      %1835 = vmatprep.subr.mxu0 0.0
      %1836 = vmatpush1.msra.mxu0 0.0
      %1837 = vmatprep.subr.mxu0 0.0
      %1838 = vmatpush1.msra.mxu0 0.0
      %1839 = vmatprep.subr.mxu0 0.0
      %1840 = vmatpush1.msra.mxu0 0.0
      %1841 = vmatprep.subr.mxu0 0.0
      %1842 = vmatpush1.msra.mxu0 0.0
      %1843 = vmatprep.subr.mxu0 0.0
      %1844 = vmatpush1.msra.mxu0 0.0
      %1845 = vmatprep.subr.mxu0 0.0
      %1846 = vmatpush1.msra.mxu0 0.0
      %1847 = vmatprep.subr.mxu0 0.0
      %1848 = vmatpush1.msra.mxu0 0.0
      %1849 = vmatprep.subr.mxu0 0.0
      %1850 = vmatpush1.msra.mxu0 0.0
      %1851 = vmatprep.subr.mxu0 0.0
      %1852 = vmatpush1.msra.mxu0 0.0
      %1853 = vmatprep.subr.mxu0 0.0
      %1854 = vmatpush1.msra.mxu0 0.0
      %1855 = vmatprep.subr.mxu0 0.0
      %1856 = vmatpush1.msra.mxu0 0.0
      %1857 = vmatprep.subr.mxu0 0.0
      %1858 = vmatpush1.msra.mxu0 0.0
      %1859 = vmatprep.subr.mxu0 0.0
      %1860 = vmatpush1.msra.mxu0 0.0
      %1861 = vmatprep.subr.mxu0 0.0
      %1862 = vmatpush1.msra.mxu0 0.0
      %1863 = vmatprep.subr.mxu0 0.0
      %1864 = vmatpush1.msra.mxu0 0.0
      %1865 = vmatprep.subr.mxu0 0.0
      %1866 = vmatpush1.msra.mxu0 0.0
      %1867 = vmatprep.subr.mxu0 0.0
      %1868 = vmatpush1.msra.mxu0 0.0
      %1869 = vmatprep.subr.mxu0 0.0
      %1870 = vmatpush1.msra.mxu0 0.0
      %1871 = vmatprep.subr.mxu0 0.0
      %1872 = vmatpush1.msra.mxu0 0.0
      %1873 = vmatprep.subr.mxu0 0.0
      %1874 = vmatpush1.msra.mxu0 0.0
      %1875 = vmatprep.subr.mxu0 0.0
      %1876 = vmatpush1.msra.mxu0 0.0
      %1877 = vmatprep.subr.mxu0 0.0
      %1878 = vmatpush1.msra.mxu0 0.0
      %1879 = vmatprep.mubr.f32.mxu0 0.0
      %v1880 = vand.u32 %v1211, 4294901760
      %1881 = vmatmul.mubr.f32.gmra.mrb[0].mxu0 %v1880
      %v1882 = vpop.f32.mrb[0].mxu0
      %v1883 = vadd.f32 %v1792, %v1882
      %v1884 = vpop.f32.mrb[0].mxu0
      %1885 = vmatprep.mubr.f32.mxu0 0.0
      %v1886 = vand.u32 %v1214, 4294901760
      %1887 = vmatmul.mubr.f32.gmra.mrb[0].mxu0 %v1886
      %v1888 = vpop.f32.mrb[0].mxu0
      %v1889 = vadd.f32 %v1802, %v1888
      %v1890 = vpop.f32.mrb[0].mxu0
      %1891 = vdwg.mxu0
      %1892 = vmatprep.subr.mxu0 0.0
      %v1893 = vand.u32 %v1162, 4294901760
      %v1894 = vsub.f32 %v1162, %v1893
      %1895 = vmatpush1.msra.mxu0 %v1894
      %1896 = vmatprep.subr.mxu0 0.0
      %v1897 = vand.u32 %v1168, 4294901760
      %v1898 = vsub.f32 %v1168, %v1897
      %1899 = vmatpush1.msra.mxu0 %v1898
      %1900 = vmatprep.subr.mxu0 0.0
      %1901 = vmatpush1.msra.mxu0 0.0
      %1902 = vmatprep.subr.mxu0 0.0
      %1903 = vmatpush1.msra.mxu0 0.0
      %1904 = vmatprep.subr.mxu0 0.0
      %1905 = vmatpush1.msra.mxu0 0.0
      %1906 = vmatprep.subr.mxu0 0.0
      %1907 = vmatpush1.msra.mxu0 0.0
      %1908 = vmatprep.subr.mxu0 0.0
      %1909 = vmatpush1.msra.mxu0 0.0
      %1910 = vmatprep.subr.mxu0 0.0
      %1911 = vmatpush1.msra.mxu0 0.0
      %1912 = vmatprep.subr.mxu0 0.0
      %1913 = vmatpush1.msra.mxu0 0.0
      %1914 = vmatprep.subr.mxu0 0.0
      %1915 = vmatpush1.msra.mxu0 0.0
      %1916 = vmatprep.subr.mxu0 0.0
      %1917 = vmatpush1.msra.mxu0 0.0
      %1918 = vmatprep.subr.mxu0 0.0
      %1919 = vmatpush1.msra.mxu0 0.0
      %1920 = vmatprep.subr.mxu0 0.0
      %1921 = vmatpush1.msra.mxu0 0.0
      %1922 = vmatprep.subr.mxu0 0.0
      %1923 = vmatpush1.msra.mxu0 0.0
      %1924 = vmatprep.subr.mxu0 0.0
      %1925 = vmatpush1.msra.mxu0 0.0
      %1926 = vmatprep.subr.mxu0 0.0
      %1927 = vmatpush1.msra.mxu0 0.0
      %1928 = vmatprep.subr.mxu0 0.0
      %1929 = vmatpush1.msra.mxu0 0.0
      %1930 = vmatprep.subr.mxu0 0.0
      %1931 = vmatpush1.msra.mxu0 0.0
      %1932 = vmatprep.subr.mxu0 0.0
      %1933 = vmatpush1.msra.mxu0 0.0
      %1934 = vmatprep.subr.mxu0 0.0
      %1935 = vmatpush1.msra.mxu0 0.0
      %1936 = vmatprep.subr.mxu0 0.0
      %1937 = vmatpush1.msra.mxu0 0.0
      %1938 = vmatprep.subr.mxu0 0.0
      %1939 = vmatpush1.msra.mxu0 0.0
      %1940 = vmatprep.subr.mxu0 0.0
      %1941 = vmatpush1.msra.mxu0 0.0
      %1942 = vmatprep.subr.mxu0 0.0
      %1943 = vmatpush1.msra.mxu0 0.0
      %1944 = vmatprep.subr.mxu0 0.0
      %1945 = vmatpush1.msra.mxu0 0.0
      %1946 = vmatprep.subr.mxu0 0.0
      %1947 = vmatpush1.msra.mxu0 0.0
      %1948 = vmatprep.subr.mxu0 0.0
      %1949 = vmatpush1.msra.mxu0 0.0
      %1950 = vmatprep.subr.mxu0 0.0
      %1951 = vmatpush1.msra.mxu0 0.0
      %1952 = vmatprep.subr.mxu0 0.0
      %1953 = vmatpush1.msra.mxu0 0.0
      %1954 = vmatprep.subr.mxu0 0.0
      %1955 = vmatpush1.msra.mxu0 0.0
      %1956 = vmatprep.subr.mxu0 0.0
      %1957 = vmatpush1.msra.mxu0 0.0
      %1958 = vmatprep.subr.mxu0 0.0
      %1959 = vmatpush1.msra.mxu0 0.0
      %1960 = vmatprep.mubr.f32.mxu0 0.0
      %v1961 = vand.u32 %v1211, 4294901760
      %v1962 = vsub.f32 %v1211, %v1961
      %1963 = vmatmul.mubr.f32.gmra.mrb[0].mxu0 %v1962
      %v1964 = vpop.f32.mrb[0].mxu0
      %v1965 = vadd.f32 %v1883, %v1964
      %v1966 = vpop.f32.mrb[0].mxu0
      %1967 = vmatprep.mubr.f32.mxu0 0.0
      %v1968 = vand.u32 %v1214, 4294901760
      %v1969 = vsub.f32 %v1214, %v1968
      %1970 = vmatmul.mubr.f32.gmra.mrb[0].mxu0 %v1969
      %v1971 = vpop.f32.mrb[0].mxu0
      %v1972 = vadd.f32 %v1889, %v1971
      %v1973 = vpop.f32.mrb[0].mxu0
      %1974 = vdwg.mxu0
      %1975 = vmatprep.subr.mxu0 0.0
      %v1976 = vand.u32 %v1162, 4294901760
      %1977 = vmatpush1.msra.mxu0 %v1976
      %1978 = vmatprep.subr.mxu0 0.0
      %v1979 = vand.u32 %v1168, 4294901760
      %1980 = vmatpush1.msra.mxu0 %v1979
      %1981 = vmatprep.subr.mxu0 0.0
      %1982 = vmatpush1.msra.mxu0 0.0
      %1983 = vmatprep.subr.mxu0 0.0
      %1984 = vmatpush1.msra.mxu0 0.0
      %1985 = vmatprep.subr.mxu0 0.0
      %1986 = vmatpush1.msra.mxu0 0.0
      %1987 = vmatprep.subr.mxu0 0.0
      %1988 = vmatpush1.msra.mxu0 0.0
      %1989 = vmatprep.subr.mxu0 0.0
      %1990 = vmatpush1.msra.mxu0 0.0
      %1991 = vmatprep.subr.mxu0 0.0
      %1992 = vmatpush1.msra.mxu0 0.0
      %1993 = vmatprep.subr.mxu0 0.0
      %1994 = vmatpush1.msra.mxu0 0.0
      %1995 = vmatprep.subr.mxu0 0.0
      %1996 = vmatpush1.msra.mxu0 0.0
      %1997 = vmatprep.subr.mxu0 0.0
      %1998 = vmatpush1.msra.mxu0 0.0
      %1999 = vmatprep.subr.mxu0 0.0
      %2000 = vmatpush1.msra.mxu0 0.0
      %2001 = vmatprep.subr.mxu0 0.0
      %2002 = vmatpush1.msra.mxu0 0.0
      %2003 = vmatprep.subr.mxu0 0.0
      %2004 = vmatpush1.msra.mxu0 0.0
      %2005 = vmatprep.subr.mxu0 0.0
      %2006 = vmatpush1.msra.mxu0 0.0
      %2007 = vmatprep.subr.mxu0 0.0
      %2008 = vmatpush1.msra.mxu0 0.0
      %2009 = vmatprep.subr.mxu0 0.0
      %2010 = vmatpush1.msra.mxu0 0.0
      %2011 = vmatprep.subr.mxu0 0.0
      %2012 = vmatpush1.msra.mxu0 0.0
      %2013 = vmatprep.subr.mxu0 0.0
      %2014 = vmatpush1.msra.mxu0 0.0
      %2015 = vmatprep.subr.mxu0 0.0
      %2016 = vmatpush1.msra.mxu0 0.0
      %2017 = vmatprep.subr.mxu0 0.0
      %2018 = vmatpush1.msra.mxu0 0.0
      %2019 = vmatprep.subr.mxu0 0.0
      %2020 = vmatpush1.msra.mxu0 0.0
      %2021 = vmatprep.subr.mxu0 0.0
      %2022 = vmatpush1.msra.mxu0 0.0
      %2023 = vmatprep.subr.mxu0 0.0
      %2024 = vmatpush1.msra.mxu0 0.0
      %2025 = vmatprep.subr.mxu0 0.0
      %2026 = vmatpush1.msra.mxu0 0.0
      %2027 = vmatprep.subr.mxu0 0.0
      %2028 = vmatpush1.msra.mxu0 0.0
      %2029 = vmatprep.subr.mxu0 0.0
      %2030 = vmatpush1.msra.mxu0 0.0
      %2031 = vmatprep.subr.mxu0 0.0
      %2032 = vmatpush1.msra.mxu0 0.0
      %2033 = vmatprep.subr.mxu0 0.0
      %2034 = vmatpush1.msra.mxu0 0.0
      %2035 = vmatprep.subr.mxu0 0.0
      %2036 = vmatpush1.msra.mxu0 0.0
      %2037 = vmatprep.subr.mxu0 0.0
      %2038 = vmatpush1.msra.mxu0 0.0
      %2039 = vmatprep.subr.mxu0 0.0
      %2040 = vmatpush1.msra.mxu0 0.0
      %2041 = vmatprep.mubr.f32.mxu0 0.0
      %v2042 = vand.u32 %v1211, 4294901760
      %v2043 = vsub.f32 %v1211, %v2042
      %v2044 = vand.u32 %v2043, 4294901760
      %2045 = vmatmul.mubr.f32.gmra.mrb[0].mxu0 %v2044
      %v2046 = vpop.f32.mrb[0].mxu0
      %v2047 = vadd.f32 %v1965, %v2046
      %v2048 = vpop.f32.mrb[0].mxu0
      %2049 = vmatprep.mubr.f32.mxu0 0.0
      %v2050 = vand.u32 %v1214, 4294901760
      %v2051 = vsub.f32 %v1214, %v2050
      %v2052 = vand.u32 %v2051, 4294901760
      %2053 = vmatmul.mubr.f32.gmra.mrb[0].mxu0 %v2052
      %v2054 = vpop.f32.mrb[0].mxu0
      %v2055 = vadd.f32 %v1972, %v2054
      %v2056 = vpop.f32.mrb[0].mxu0
      %2057 = vdwg.mxu0
      %2058 = vmatprep.subr.mxu0 0.0
      %v2059 = vand.u32 %v1162, 4294901760
      %v2060 = vsub.f32 %v1162, %v2059
      %v2061 = vand.u32 %v2060, 4294901760
      %2062 = vmatpush1.msra.mxu0 %v2061
      %2063 = vmatprep.subr.mxu0 0.0
      %v2064 = vand.u32 %v1168, 4294901760
      %v2065 = vsub.f32 %v1168, %v2064
      %v2066 = vand.u32 %v2065, 4294901760
      %2067 = vmatpush1.msra.mxu0 %v2066
      %2068 = vmatprep.subr.mxu0 0.0
      %2069 = vmatpush1.msra.mxu0 0.0
      %2070 = vmatprep.subr.mxu0 0.0
      %2071 = vmatpush1.msra.mxu0 0.0
      %2072 = vmatprep.subr.mxu0 0.0
      %2073 = vmatpush1.msra.mxu0 0.0
      %2074 = vmatprep.subr.mxu0 0.0
      %2075 = vmatpush1.msra.mxu0 0.0
      %2076 = vmatprep.subr.mxu0 0.0
      %2077 = vmatpush1.msra.mxu0 0.0
      %2078 = vmatprep.subr.mxu0 0.0
      %2079 = vmatpush1.msra.mxu0 0.0
      %2080 = vmatprep.subr.mxu0 0.0
      %2081 = vmatpush1.msra.mxu0 0.0
      %2082 = vmatprep.subr.mxu0 0.0
      %2083 = vmatpush1.msra.mxu0 0.0
      %2084 = vmatprep.subr.mxu0 0.0
      %2085 = vmatpush1.msra.mxu0 0.0
      %2086 = vmatprep.subr.mxu0 0.0
      %2087 = vmatpush1.msra.mxu0 0.0
      %2088 = vmatprep.subr.mxu0 0.0
      %2089 = vmatpush1.msra.mxu0 0.0
      %2090 = vmatprep.subr.mxu0 0.0
      %2091 = vmatpush1.msra.mxu0 0.0
      %2092 = vmatprep.subr.mxu0 0.0
      %2093 = vmatpush1.msra.mxu0 0.0
      %2094 = vmatprep.subr.mxu0 0.0
      %2095 = vmatpush1.msra.mxu0 0.0
      %2096 = vmatprep.subr.mxu0 0.0
      %2097 = vmatpush1.msra.mxu0 0.0
      %2098 = vmatprep.subr.mxu0 0.0
      %2099 = vmatpush1.msra.mxu0 0.0
      %2100 = vmatprep.subr.mxu0 0.0
      %2101 = vmatpush1.msra.mxu0 0.0
      %2102 = vmatprep.subr.mxu0 0.0
      %2103 = vmatpush1.msra.mxu0 0.0
      %2104 = vmatprep.subr.mxu0 0.0
      %2105 = vmatpush1.msra.mxu0 0.0
      %2106 = vmatprep.subr.mxu0 0.0
      %2107 = vmatpush1.msra.mxu0 0.0
      %2108 = vmatprep.subr.mxu0 0.0
      %2109 = vmatpush1.msra.mxu0 0.0
      %2110 = vmatprep.subr.mxu0 0.0
      %2111 = vmatpush1.msra.mxu0 0.0
      %2112 = vmatprep.subr.mxu0 0.0
      %2113 = vmatpush1.msra.mxu0 0.0
      %2114 = vmatprep.subr.mxu0 0.0
      %2115 = vmatpush1.msra.mxu0 0.0
      %2116 = vmatprep.subr.mxu0 0.0
      %2117 = vmatpush1.msra.mxu0 0.0
      %2118 = vmatprep.subr.mxu0 0.0
      %2119 = vmatpush1.msra.mxu0 0.0
      %2120 = vmatprep.subr.mxu0 0.0
      %2121 = vmatpush1.msra.mxu0 0.0
      %2122 = vmatprep.subr.mxu0 0.0
      %2123 = vmatpush1.msra.mxu0 0.0
      %2124 = vmatprep.subr.mxu0 0.0
      %2125 = vmatpush1.msra.mxu0 0.0
      %2126 = vmatprep.subr.mxu0 0.0
      %2127 = vmatpush1.msra.mxu0 0.0
      %2128 = vmatprep.mubr.f32.mxu0 0.0
      %v2129 = vand.u32 %v1211, 4294901760
      %2130 = vmatmul.mubr.f32.gmra.mrb[0].mxu0 %v2129
      %v2131 = vpop.f32.mrb[0].mxu0
      %v2132 = vadd.f32 %v2047, %v2131
      %v2133 = vpop.f32.mrb[0].mxu0
      %2134 = vmatprep.mubr.f32.mxu0 0.0
      %v2135 = vand.u32 %v1214, 4294901760
      %2136 = vmatmul.mubr.f32.gmra.mrb[0].mxu0 %v2135
      %v2137 = vpop.f32.mrb[0].mxu0
      %v2138 = vadd.f32 %v2055, %v2137
      %v2139 = vpop.f32.mrb[0].mxu0
      %2140 = vdwg.mxu0
      %2141 = vmatprep.subr.mxu0 0.0
      %v2142 = vand.u32 %v1162, 4294901760
      %2143 = vmatpush1.msra.mxu0 %v2142
      %2144 = vmatprep.subr.mxu0 0.0
      %v2145 = vand.u32 %v1168, 4294901760
      %2146 = vmatpush1.msra.mxu0 %v2145
      %2147 = vmatprep.subr.mxu0 0.0
      %2148 = vmatpush1.msra.mxu0 0.0
      %2149 = vmatprep.subr.mxu0 0.0
      %2150 = vmatpush1.msra.mxu0 0.0
      %2151 = vmatprep.subr.mxu0 0.0
      %2152 = vmatpush1.msra.mxu0 0.0
      %2153 = vmatprep.subr.mxu0 0.0
      %2154 = vmatpush1.msra.mxu0 0.0
      %2155 = vmatprep.subr.mxu0 0.0
      %2156 = vmatpush1.msra.mxu0 0.0
      %2157 = vmatprep.subr.mxu0 0.0
      %2158 = vmatpush1.msra.mxu0 0.0
      %2159 = vmatprep.subr.mxu0 0.0
      %2160 = vmatpush1.msra.mxu0 0.0
      %2161 = vmatprep.subr.mxu0 0.0
      %2162 = vmatpush1.msra.mxu0 0.0
      %2163 = vmatprep.subr.mxu0 0.0
      %2164 = vmatpush1.msra.mxu0 0.0
      %2165 = vmatprep.subr.mxu0 0.0
      %2166 = vmatpush1.msra.mxu0 0.0
      %2167 = vmatprep.subr.mxu0 0.0
      %2168 = vmatpush1.msra.mxu0 0.0
      %2169 = vmatprep.subr.mxu0 0.0
      %2170 = vmatpush1.msra.mxu0 0.0
      %2171 = vmatprep.subr.mxu0 0.0
      %2172 = vmatpush1.msra.mxu0 0.0
      %2173 = vmatprep.subr.mxu0 0.0
      %2174 = vmatpush1.msra.mxu0 0.0
      %2175 = vmatprep.subr.mxu0 0.0
      %2176 = vmatpush1.msra.mxu0 0.0
      %2177 = vmatprep.subr.mxu0 0.0
      %2178 = vmatpush1.msra.mxu0 0.0
      %2179 = vmatprep.subr.mxu0 0.0
      %2180 = vmatpush1.msra.mxu0 0.0
      %2181 = vmatprep.subr.mxu0 0.0
      %2182 = vmatpush1.msra.mxu0 0.0
      %2183 = vmatprep.subr.mxu0 0.0
      %2184 = vmatpush1.msra.mxu0 0.0
      %2185 = vmatprep.subr.mxu0 0.0
      %2186 = vmatpush1.msra.mxu0 0.0
      %2187 = vmatprep.subr.mxu0 0.0
      %2188 = vmatpush1.msra.mxu0 0.0
      %2189 = vmatprep.subr.mxu0 0.0
      %2190 = vmatpush1.msra.mxu0 0.0
      %2191 = vmatprep.subr.mxu0 0.0
      %2192 = vmatpush1.msra.mxu0 0.0
      %2193 = vmatprep.subr.mxu0 0.0
      %2194 = vmatpush1.msra.mxu0 0.0
      %2195 = vmatprep.subr.mxu0 0.0
      %2196 = vmatpush1.msra.mxu0 0.0
      %2197 = vmatprep.subr.mxu0 0.0
      %2198 = vmatpush1.msra.mxu0 0.0
      %2199 = vmatprep.subr.mxu0 0.0
      %2200 = vmatpush1.msra.mxu0 0.0
      %2201 = vmatprep.subr.mxu0 0.0
      %2202 = vmatpush1.msra.mxu0 0.0
      %2203 = vmatprep.subr.mxu0 0.0
      %2204 = vmatpush1.msra.mxu0 0.0
      %2205 = vmatprep.subr.mxu0 0.0
      %2206 = vmatpush1.msra.mxu0 0.0
      %2207 = vmatprep.mubr.f32.mxu0 0.0
      %v2208 = vand.u32 %v1211, 4294901760
      %2209 = vmatmul.mubr.f32.gmra.mrb[0].mxu0 %v2208
      %v2210 = vpop.f32.mrb[0].mxu0
      %v2211 = vadd.f32 %v2132, %v2210
      %v2212 = vpop.f32.mrb[0].mxu0
      %2213 = vmatprep.mubr.f32.mxu0 0.0
      %v2214 = vand.u32 %v1214, 4294901760
      %2215 = vmatmul.mubr.f32.gmra.mrb[0].mxu0 %v2214
      %v2216 = vpop.f32.mrb[0].mxu0
      %v2217 = vadd.f32 %v2138, %v2216
      %v2218 = vpop.f32.mrb[0].mxu0
      %2219 = vdwg.mxu0
      %2220 = vmatprep.subr.mxu0 0.0
      %v2221 = vand.u32 %v1174, 4294901760
      %2222 = vmatpush1.msra.mxu0 %v2221
      %2223 = vmatprep.subr.mxu0 0.0
      %v2224 = vand.u32 %v1180, 4294901760
      %2225 = vmatpush1.msra.mxu0 %v2224
      %2226 = vmatprep.subr.mxu0 0.0
      %2227 = vmatpush1.msra.mxu0 0.0
      %2228 = vmatprep.subr.mxu0 0.0
      %2229 = vmatpush1.msra.mxu0 0.0
      %2230 = vmatprep.subr.mxu0 0.0
      %2231 = vmatpush1.msra.mxu0 0.0
      %2232 = vmatprep.subr.mxu0 0.0
      %2233 = vmatpush1.msra.mxu0 0.0
      %2234 = vmatprep.subr.mxu0 0.0
      %2235 = vmatpush1.msra.mxu0 0.0
      %2236 = vmatprep.subr.mxu0 0.0
      %2237 = vmatpush1.msra.mxu0 0.0
      %2238 = vmatprep.subr.mxu0 0.0
      %2239 = vmatpush1.msra.mxu0 0.0
      %2240 = vmatprep.subr.mxu0 0.0
      %2241 = vmatpush1.msra.mxu0 0.0
      %2242 = vmatprep.subr.mxu0 0.0
      %2243 = vmatpush1.msra.mxu0 0.0
      %2244 = vmatprep.subr.mxu0 0.0
      %2245 = vmatpush1.msra.mxu0 0.0
      %2246 = vmatprep.subr.mxu0 0.0
      %2247 = vmatpush1.msra.mxu0 0.0
      %2248 = vmatprep.subr.mxu0 0.0
      %2249 = vmatpush1.msra.mxu0 0.0
      %2250 = vmatprep.subr.mxu0 0.0
      %2251 = vmatpush1.msra.mxu0 0.0
      %2252 = vmatprep.subr.mxu0 0.0
      %2253 = vmatpush1.msra.mxu0 0.0
      %2254 = vmatprep.subr.mxu0 0.0
      %2255 = vmatpush1.msra.mxu0 0.0
      %2256 = vmatprep.subr.mxu0 0.0
      %2257 = vmatpush1.msra.mxu0 0.0
      %2258 = vmatprep.subr.mxu0 0.0
      %2259 = vmatpush1.msra.mxu0 0.0
      %2260 = vmatprep.subr.mxu0 0.0
      %2261 = vmatpush1.msra.mxu0 0.0
      %2262 = vmatprep.subr.mxu0 0.0
      %2263 = vmatpush1.msra.mxu0 0.0
      %2264 = vmatprep.subr.mxu0 0.0
      %2265 = vmatpush1.msra.mxu0 0.0
      %2266 = vmatprep.subr.mxu0 0.0
      %2267 = vmatpush1.msra.mxu0 0.0
      %2268 = vmatprep.subr.mxu0 0.0
      %2269 = vmatpush1.msra.mxu0 0.0
      %2270 = vmatprep.subr.mxu0 0.0
      %2271 = vmatpush1.msra.mxu0 0.0
      %2272 = vmatprep.subr.mxu0 0.0
      %2273 = vmatpush1.msra.mxu0 0.0
      %2274 = vmatprep.subr.mxu0 0.0
      %2275 = vmatpush1.msra.mxu0 0.0
      %2276 = vmatprep.subr.mxu0 0.0
      %2277 = vmatpush1.msra.mxu0 0.0
      %2278 = vmatprep.subr.mxu0 0.0
      %2279 = vmatpush1.msra.mxu0 0.0
      %2280 = vmatprep.subr.mxu0 0.0
      %2281 = vmatpush1.msra.mxu0 0.0
      %2282 = vmatprep.subr.mxu0 0.0
      %2283 = vmatpush1.msra.mxu0 0.0
      %2284 = vmatprep.subr.mxu0 0.0
      %2285 = vmatpush1.msra.mxu0 0.0
      %2286 = vmatprep.mubr.f32.mxu0 0.0
      %v2287 = vand.u32 %v1211, 4294901760
      %v2288 = vsub.f32 %v1211, %v2287
      %v2289 = vand.u32 %v2288, 4294901760
      %v2290 = vsub.f32 %v2288, %v2289
      %v2291 = vand.u32 %v2290, 4294901760
      %2292 = vmatmul.mubr.f32.gmra.mrb[0].mxu0 %v2291
      %v2293 = vpop.f32.mrb[0].mxu0
      %v2294 = vadd.f32 0.0, %v2293
      %v2295 = vpop.f32.mrb[0].mxu0
      %2296 = vmatprep.mubr.f32.mxu0 0.0
      %v2297 = vand.u32 %v1214, 4294901760
      %v2298 = vsub.f32 %v1214, %v2297
      %v2299 = vand.u32 %v2298, 4294901760
      %v2300 = vsub.f32 %v2298, %v2299
      %v2301 = vand.u32 %v2300, 4294901760
      %2302 = vmatmul.mubr.f32.gmra.mrb[0].mxu0 %v2301
      %v2303 = vpop.f32.mrb[0].mxu0
      %v2304 = vadd.f32 0.0, %v2303
      %v2305 = vpop.f32.mrb[0].mxu0
      %2306 = vdwg.mxu0
      %2307 = vmatprep.subr.mxu0 0.0
      %v2308 = vand.u32 %v1174, 4294901760
      %v2309 = vsub.f32 %v1174, %v2308
      %v2310 = vand.u32 %v2309, 4294901760
      %v2311 = vsub.f32 %v2309, %v2310
      %v2312 = vand.u32 %v2311, 4294901760
      %2313 = vmatpush1.msra.mxu0 %v2312
      %2314 = vmatprep.subr.mxu0 0.0
      %v2315 = vand.u32 %v1180, 4294901760
      %v2316 = vsub.f32 %v1180, %v2315
      %v2317 = vand.u32 %v2316, 4294901760
      %v2318 = vsub.f32 %v2316, %v2317
      %v2319 = vand.u32 %v2318, 4294901760
      %2320 = vmatpush1.msra.mxu0 %v2319
      %2321 = vmatprep.subr.mxu0 0.0
      %2322 = vmatpush1.msra.mxu0 0.0
      %2323 = vmatprep.subr.mxu0 0.0
      %2324 = vmatpush1.msra.mxu0 0.0
      %2325 = vmatprep.subr.mxu0 0.0
      %2326 = vmatpush1.msra.mxu0 0.0
      %2327 = vmatprep.subr.mxu0 0.0
      %2328 = vmatpush1.msra.mxu0 0.0
      %2329 = vmatprep.subr.mxu0 0.0
      %2330 = vmatpush1.msra.mxu0 0.0
      %2331 = vmatprep.subr.mxu0 0.0
      %2332 = vmatpush1.msra.mxu0 0.0
      %2333 = vmatprep.subr.mxu0 0.0
      %2334 = vmatpush1.msra.mxu0 0.0
      %2335 = vmatprep.subr.mxu0 0.0
      %2336 = vmatpush1.msra.mxu0 0.0
      %2337 = vmatprep.subr.mxu0 0.0
      %2338 = vmatpush1.msra.mxu0 0.0
      %2339 = vmatprep.subr.mxu0 0.0
      %2340 = vmatpush1.msra.mxu0 0.0
      %2341 = vmatprep.subr.mxu0 0.0
      %2342 = vmatpush1.msra.mxu0 0.0
      %2343 = vmatprep.subr.mxu0 0.0
      %2344 = vmatpush1.msra.mxu0 0.0
      %2345 = vmatprep.subr.mxu0 0.0
      %2346 = vmatpush1.msra.mxu0 0.0
      %2347 = vmatprep.subr.mxu0 0.0
      %2348 = vmatpush1.msra.mxu0 0.0
      %2349 = vmatprep.subr.mxu0 0.0
      %2350 = vmatpush1.msra.mxu0 0.0
      %2351 = vmatprep.subr.mxu0 0.0
      %2352 = vmatpush1.msra.mxu0 0.0
      %2353 = vmatprep.subr.mxu0 0.0
      %2354 = vmatpush1.msra.mxu0 0.0
      %2355 = vmatprep.subr.mxu0 0.0
      %2356 = vmatpush1.msra.mxu0 0.0
      %2357 = vmatprep.subr.mxu0 0.0
      %2358 = vmatpush1.msra.mxu0 0.0
      %2359 = vmatprep.subr.mxu0 0.0
      %2360 = vmatpush1.msra.mxu0 0.0
      %2361 = vmatprep.subr.mxu0 0.0
      %2362 = vmatpush1.msra.mxu0 0.0
      %2363 = vmatprep.subr.mxu0 0.0
      %2364 = vmatpush1.msra.mxu0 0.0
      %2365 = vmatprep.subr.mxu0 0.0
      %2366 = vmatpush1.msra.mxu0 0.0
      %2367 = vmatprep.subr.mxu0 0.0
      %2368 = vmatpush1.msra.mxu0 0.0
      %2369 = vmatprep.subr.mxu0 0.0
      %2370 = vmatpush1.msra.mxu0 0.0
      %2371 = vmatprep.subr.mxu0 0.0
      %2372 = vmatpush1.msra.mxu0 0.0
      %2373 = vmatprep.subr.mxu0 0.0
      %2374 = vmatpush1.msra.mxu0 0.0
      %2375 = vmatprep.subr.mxu0 0.0
      %2376 = vmatpush1.msra.mxu0 0.0
      %2377 = vmatprep.subr.mxu0 0.0
      %2378 = vmatpush1.msra.mxu0 0.0
      %2379 = vmatprep.subr.mxu0 0.0
      %2380 = vmatpush1.msra.mxu0 0.0
      %2381 = vmatprep.mubr.f32.mxu0 0.0
      %v2382 = vand.u32 %v1211, 4294901760
      %2383 = vmatmul.mubr.f32.gmra.mrb[0].mxu0 %v2382
      %v2384 = vpop.f32.mrb[0].mxu0
      %v2385 = vadd.f32 %v2294, %v2384
      %v2386 = vpop.f32.mrb[0].mxu0
      %2387 = vmatprep.mubr.f32.mxu0 0.0
      %v2388 = vand.u32 %v1214, 4294901760
      %2389 = vmatmul.mubr.f32.gmra.mrb[0].mxu0 %v2388
      %v2390 = vpop.f32.mrb[0].mxu0
      %v2391 = vadd.f32 %v2304, %v2390
      %v2392 = vpop.f32.mrb[0].mxu0
      %2393 = vdwg.mxu0
      %2394 = vmatprep.subr.mxu0 0.0
      %v2395 = vand.u32 %v1174, 4294901760
      %v2396 = vsub.f32 %v1174, %v2395
      %2397 = vmatpush1.msra.mxu0 %v2396
      %2398 = vmatprep.subr.mxu0 0.0
      %v2399 = vand.u32 %v1180, 4294901760
      %v2400 = vsub.f32 %v1180, %v2399
      %2401 = vmatpush1.msra.mxu0 %v2400
      %2402 = vmatprep.subr.mxu0 0.0
      %2403 = vmatpush1.msra.mxu0 0.0
      %2404 = vmatprep.subr.mxu0 0.0
      %2405 = vmatpush1.msra.mxu0 0.0
      %2406 = vmatprep.subr.mxu0 0.0
      %2407 = vmatpush1.msra.mxu0 0.0
      %2408 = vmatprep.subr.mxu0 0.0
      %2409 = vmatpush1.msra.mxu0 0.0
      %2410 = vmatprep.subr.mxu0 0.0
      %2411 = vmatpush1.msra.mxu0 0.0
      %2412 = vmatprep.subr.mxu0 0.0
      %2413 = vmatpush1.msra.mxu0 0.0
      %2414 = vmatprep.subr.mxu0 0.0
      %2415 = vmatpush1.msra.mxu0 0.0
      %2416 = vmatprep.subr.mxu0 0.0
      %2417 = vmatpush1.msra.mxu0 0.0
      %2418 = vmatprep.subr.mxu0 0.0
      %2419 = vmatpush1.msra.mxu0 0.0
      %2420 = vmatprep.subr.mxu0 0.0
      %2421 = vmatpush1.msra.mxu0 0.0
      %2422 = vmatprep.subr.mxu0 0.0
      %2423 = vmatpush1.msra.mxu0 0.0
      %2424 = vmatprep.subr.mxu0 0.0
      %2425 = vmatpush1.msra.mxu0 0.0
      %2426 = vmatprep.subr.mxu0 0.0
      %2427 = vmatpush1.msra.mxu0 0.0
      %2428 = vmatprep.subr.mxu0 0.0
      %2429 = vmatpush1.msra.mxu0 0.0
      %2430 = vmatprep.subr.mxu0 0.0
      %2431 = vmatpush1.msra.mxu0 0.0
      %2432 = vmatprep.subr.mxu0 0.0
      %2433 = vmatpush1.msra.mxu0 0.0
      %2434 = vmatprep.subr.mxu0 0.0
      %2435 = vmatpush1.msra.mxu0 0.0
      %2436 = vmatprep.subr.mxu0 0.0
      %2437 = vmatpush1.msra.mxu0 0.0
      %2438 = vmatprep.subr.mxu0 0.0
      %2439 = vmatpush1.msra.mxu0 0.0
      %2440 = vmatprep.subr.mxu0 0.0
      %2441 = vmatpush1.msra.mxu0 0.0
      %2442 = vmatprep.subr.mxu0 0.0
      %2443 = vmatpush1.msra.mxu0 0.0
      %2444 = vmatprep.subr.mxu0 0.0
      %2445 = vmatpush1.msra.mxu0 0.0
      %2446 = vmatprep.subr.mxu0 0.0
      %2447 = vmatpush1.msra.mxu0 0.0
      %2448 = vmatprep.subr.mxu0 0.0
      %2449 = vmatpush1.msra.mxu0 0.0
      %2450 = vmatprep.subr.mxu0 0.0
      %2451 = vmatpush1.msra.mxu0 0.0
      %2452 = vmatprep.subr.mxu0 0.0
      %2453 = vmatpush1.msra.mxu0 0.0
      %2454 = vmatprep.subr.mxu0 0.0
      %2455 = vmatpush1.msra.mxu0 0.0
      %2456 = vmatprep.subr.mxu0 0.0
      %2457 = vmatpush1.msra.mxu0 0.0
      %2458 = vmatprep.subr.mxu0 0.0
      %2459 = vmatpush1.msra.mxu0 0.0
      %2460 = vmatprep.subr.mxu0 0.0
      %2461 = vmatpush1.msra.mxu0 0.0
      %2462 = vmatprep.mubr.f32.mxu0 0.0
      %v2463 = vand.u32 %v1211, 4294901760
      %v2464 = vsub.f32 %v1211, %v2463
      %2465 = vmatmul.mubr.f32.gmra.mrb[0].mxu0 %v2464
      %v2466 = vpop.f32.mrb[0].mxu0
      %v2467 = vadd.f32 %v2385, %v2466
      %v2468 = vpop.f32.mrb[0].mxu0
      %2469 = vmatprep.mubr.f32.mxu0 0.0
      %v2470 = vand.u32 %v1214, 4294901760
      %v2471 = vsub.f32 %v1214, %v2470
      %2472 = vmatmul.mubr.f32.gmra.mrb[0].mxu0 %v2471
      %v2473 = vpop.f32.mrb[0].mxu0
      %v2474 = vadd.f32 %v2391, %v2473
      %v2475 = vpop.f32.mrb[0].mxu0
      %2476 = vdwg.mxu0
      %2477 = vmatprep.subr.mxu0 0.0
      %v2478 = vand.u32 %v1174, 4294901760
      %2479 = vmatpush1.msra.mxu0 %v2478
      %2480 = vmatprep.subr.mxu0 0.0
      %v2481 = vand.u32 %v1180, 4294901760
      %2482 = vmatpush1.msra.mxu0 %v2481
      %2483 = vmatprep.subr.mxu0 0.0
      %2484 = vmatpush1.msra.mxu0 0.0
      %2485 = vmatprep.subr.mxu0 0.0
      %2486 = vmatpush1.msra.mxu0 0.0
      %2487 = vmatprep.subr.mxu0 0.0
      %2488 = vmatpush1.msra.mxu0 0.0
      %2489 = vmatprep.subr.mxu0 0.0
      %2490 = vmatpush1.msra.mxu0 0.0
      %2491 = vmatprep.subr.mxu0 0.0
      %2492 = vmatpush1.msra.mxu0 0.0
      %2493 = vmatprep.subr.mxu0 0.0
      %2494 = vmatpush1.msra.mxu0 0.0
      %2495 = vmatprep.subr.mxu0 0.0
      %2496 = vmatpush1.msra.mxu0 0.0
      %2497 = vmatprep.subr.mxu0 0.0
      %2498 = vmatpush1.msra.mxu0 0.0
      %2499 = vmatprep.subr.mxu0 0.0
      %2500 = vmatpush1.msra.mxu0 0.0
      %2501 = vmatprep.subr.mxu0 0.0
      %2502 = vmatpush1.msra.mxu0 0.0
      %2503 = vmatprep.subr.mxu0 0.0
      %2504 = vmatpush1.msra.mxu0 0.0
      %2505 = vmatprep.subr.mxu0 0.0
      %2506 = vmatpush1.msra.mxu0 0.0
      %2507 = vmatprep.subr.mxu0 0.0
      %2508 = vmatpush1.msra.mxu0 0.0
      %2509 = vmatprep.subr.mxu0 0.0
      %2510 = vmatpush1.msra.mxu0 0.0
      %2511 = vmatprep.subr.mxu0 0.0
      %2512 = vmatpush1.msra.mxu0 0.0
      %2513 = vmatprep.subr.mxu0 0.0
      %2514 = vmatpush1.msra.mxu0 0.0
      %2515 = vmatprep.subr.mxu0 0.0
      %2516 = vmatpush1.msra.mxu0 0.0
      %2517 = vmatprep.subr.mxu0 0.0
      %2518 = vmatpush1.msra.mxu0 0.0
      %2519 = vmatprep.subr.mxu0 0.0
      %2520 = vmatpush1.msra.mxu0 0.0
      %2521 = vmatprep.subr.mxu0 0.0
      %2522 = vmatpush1.msra.mxu0 0.0
      %2523 = vmatprep.subr.mxu0 0.0
      %2524 = vmatpush1.msra.mxu0 0.0
      %2525 = vmatprep.subr.mxu0 0.0
      %2526 = vmatpush1.msra.mxu0 0.0
      %2527 = vmatprep.subr.mxu0 0.0
      %2528 = vmatpush1.msra.mxu0 0.0
      %2529 = vmatprep.subr.mxu0 0.0
      %2530 = vmatpush1.msra.mxu0 0.0
      %2531 = vmatprep.subr.mxu0 0.0
      %2532 = vmatpush1.msra.mxu0 0.0
      %2533 = vmatprep.subr.mxu0 0.0
      %2534 = vmatpush1.msra.mxu0 0.0
      %2535 = vmatprep.subr.mxu0 0.0
      %2536 = vmatpush1.msra.mxu0 0.0
      %2537 = vmatprep.subr.mxu0 0.0
      %2538 = vmatpush1.msra.mxu0 0.0
      %2539 = vmatprep.subr.mxu0 0.0
      %2540 = vmatpush1.msra.mxu0 0.0
      %2541 = vmatprep.subr.mxu0 0.0
      %2542 = vmatpush1.msra.mxu0 0.0
      %2543 = vmatprep.mubr.f32.mxu0 0.0
      %v2544 = vand.u32 %v1211, 4294901760
      %v2545 = vsub.f32 %v1211, %v2544
      %v2546 = vand.u32 %v2545, 4294901760
      %2547 = vmatmul.mubr.f32.gmra.mrb[0].mxu0 %v2546
      %v2548 = vpop.f32.mrb[0].mxu0
      %v2549 = vadd.f32 %v2467, %v2548
      %v2550 = vpop.f32.mrb[0].mxu0
      %2551 = vmatprep.mubr.f32.mxu0 0.0
      %v2552 = vand.u32 %v1214, 4294901760
      %v2553 = vsub.f32 %v1214, %v2552
      %v2554 = vand.u32 %v2553, 4294901760
      %2555 = vmatmul.mubr.f32.gmra.mrb[0].mxu0 %v2554
      %v2556 = vpop.f32.mrb[0].mxu0
      %v2557 = vadd.f32 %v2474, %v2556
      %v2558 = vpop.f32.mrb[0].mxu0
      %2559 = vdwg.mxu0
      %2560 = vmatprep.subr.mxu0 0.0
      %v2561 = vand.u32 %v1174, 4294901760
      %v2562 = vsub.f32 %v1174, %v2561
      %v2563 = vand.u32 %v2562, 4294901760
      %2564 = vmatpush1.msra.mxu0 %v2563
      %2565 = vmatprep.subr.mxu0 0.0
      %v2566 = vand.u32 %v1180, 4294901760
      %v2567 = vsub.f32 %v1180, %v2566
      %v2568 = vand.u32 %v2567, 4294901760
      %2569 = vmatpush1.msra.mxu0 %v2568
      %2570 = vmatprep.subr.mxu0 0.0
      %2571 = vmatpush1.msra.mxu0 0.0
      %2572 = vmatprep.subr.mxu0 0.0
      %2573 = vmatpush1.msra.mxu0 0.0
      %2574 = vmatprep.subr.mxu0 0.0
      %2575 = vmatpush1.msra.mxu0 0.0
      %2576 = vmatprep.subr.mxu0 0.0
      %2577 = vmatpush1.msra.mxu0 0.0
      %2578 = vmatprep.subr.mxu0 0.0
      %2579 = vmatpush1.msra.mxu0 0.0
      %2580 = vmatprep.subr.mxu0 0.0
      %2581 = vmatpush1.msra.mxu0 0.0
      %2582 = vmatprep.subr.mxu0 0.0
      %2583 = vmatpush1.msra.mxu0 0.0
      %2584 = vmatprep.subr.mxu0 0.0
      %2585 = vmatpush1.msra.mxu0 0.0
      %2586 = vmatprep.subr.mxu0 0.0
      %2587 = vmatpush1.msra.mxu0 0.0
      %2588 = vmatprep.subr.mxu0 0.0
      %2589 = vmatpush1.msra.mxu0 0.0
      %2590 = vmatprep.subr.mxu0 0.0
      %2591 = vmatpush1.msra.mxu0 0.0
      %2592 = vmatprep.subr.mxu0 0.0
      %2593 = vmatpush1.msra.mxu0 0.0
      %2594 = vmatprep.subr.mxu0 0.0
      %2595 = vmatpush1.msra.mxu0 0.0
      %2596 = vmatprep.subr.mxu0 0.0
      %2597 = vmatpush1.msra.mxu0 0.0
      %2598 = vmatprep.subr.mxu0 0.0
      %2599 = vmatpush1.msra.mxu0 0.0
      %2600 = vmatprep.subr.mxu0 0.0
      %2601 = vmatpush1.msra.mxu0 0.0
      %2602 = vmatprep.subr.mxu0 0.0
      %2603 = vmatpush1.msra.mxu0 0.0
      %2604 = vmatprep.subr.mxu0 0.0
      %2605 = vmatpush1.msra.mxu0 0.0
      %2606 = vmatprep.subr.mxu0 0.0
      %2607 = vmatpush1.msra.mxu0 0.0
      %2608 = vmatprep.subr.mxu0 0.0
      %2609 = vmatpush1.msra.mxu0 0.0
      %2610 = vmatprep.subr.mxu0 0.0
      %2611 = vmatpush1.msra.mxu0 0.0
      %2612 = vmatprep.subr.mxu0 0.0
      %2613 = vmatpush1.msra.mxu0 0.0
      %2614 = vmatprep.subr.mxu0 0.0
      %2615 = vmatpush1.msra.mxu0 0.0
      %2616 = vmatprep.subr.mxu0 0.0
      %2617 = vmatpush1.msra.mxu0 0.0
      %2618 = vmatprep.subr.mxu0 0.0
      %2619 = vmatpush1.msra.mxu0 0.0
      %2620 = vmatprep.subr.mxu0 0.0
      %2621 = vmatpush1.msra.mxu0 0.0
      %2622 = vmatprep.subr.mxu0 0.0
      %2623 = vmatpush1.msra.mxu0 0.0
      %2624 = vmatprep.subr.mxu0 0.0
      %2625 = vmatpush1.msra.mxu0 0.0
      %2626 = vmatprep.subr.mxu0 0.0
      %2627 = vmatpush1.msra.mxu0 0.0
      %2628 = vmatprep.subr.mxu0 0.0
      %2629 = vmatpush1.msra.mxu0 0.0
      %2630 = vmatprep.mubr.f32.mxu0 0.0
      %v2631 = vand.u32 %v1211, 4294901760
      %2632 = vmatmul.mubr.f32.gmra.mrb[0].mxu0 %v2631
      %v2633 = vpop.f32.mrb[0].mxu0
      %v2634 = vadd.f32 %v2549, %v2633
      %v2635 = vpop.f32.mrb[0].mxu0
      %2636 = vmatprep.mubr.f32.mxu0 0.0
      %v2637 = vand.u32 %v1214, 4294901760
      %2638 = vmatmul.mubr.f32.gmra.mrb[0].mxu0 %v2637
      %v2639 = vpop.f32.mrb[0].mxu0
      %v2640 = vadd.f32 %v2557, %v2639
      %v2641 = vpop.f32.mrb[0].mxu0
      %2642 = vdwg.mxu0
      %2643 = vmatprep.subr.mxu0 0.0
      %v2644 = vand.u32 %v1174, 4294901760
      %2645 = vmatpush1.msra.mxu0 %v2644
      %2646 = vmatprep.subr.mxu0 0.0
      %v2647 = vand.u32 %v1180, 4294901760
      %2648 = vmatpush1.msra.mxu0 %v2647
      %2649 = vmatprep.subr.mxu0 0.0
      %2650 = vmatpush1.msra.mxu0 0.0
      %2651 = vmatprep.subr.mxu0 0.0
      %2652 = vmatpush1.msra.mxu0 0.0
      %2653 = vmatprep.subr.mxu0 0.0
      %2654 = vmatpush1.msra.mxu0 0.0
      %2655 = vmatprep.subr.mxu0 0.0
      %2656 = vmatpush1.msra.mxu0 0.0
      %2657 = vmatprep.subr.mxu0 0.0
      %2658 = vmatpush1.msra.mxu0 0.0
      %2659 = vmatprep.subr.mxu0 0.0
      %2660 = vmatpush1.msra.mxu0 0.0
      %2661 = vmatprep.subr.mxu0 0.0
      %2662 = vmatpush1.msra.mxu0 0.0
      %2663 = vmatprep.subr.mxu0 0.0
      %2664 = vmatpush1.msra.mxu0 0.0
      %2665 = vmatprep.subr.mxu0 0.0
      %2666 = vmatpush1.msra.mxu0 0.0
      %2667 = vmatprep.subr.mxu0 0.0
      %2668 = vmatpush1.msra.mxu0 0.0
      %2669 = vmatprep.subr.mxu0 0.0
      %2670 = vmatpush1.msra.mxu0 0.0
      %2671 = vmatprep.subr.mxu0 0.0
      %2672 = vmatpush1.msra.mxu0 0.0
      %2673 = vmatprep.subr.mxu0 0.0
      %2674 = vmatpush1.msra.mxu0 0.0
      %2675 = vmatprep.subr.mxu0 0.0
      %2676 = vmatpush1.msra.mxu0 0.0
      %2677 = vmatprep.subr.mxu0 0.0
      %2678 = vmatpush1.msra.mxu0 0.0
      %2679 = vmatprep.subr.mxu0 0.0
      %2680 = vmatpush1.msra.mxu0 0.0
      %2681 = vmatprep.subr.mxu0 0.0
      %2682 = vmatpush1.msra.mxu0 0.0
      %2683 = vmatprep.subr.mxu0 0.0
      %2684 = vmatpush1.msra.mxu0 0.0
      %2685 = vmatprep.subr.mxu0 0.0
      %2686 = vmatpush1.msra.mxu0 0.0
      %2687 = vmatprep.subr.mxu0 0.0
      %2688 = vmatpush1.msra.mxu0 0.0
      %2689 = vmatprep.subr.mxu0 0.0
      %2690 = vmatpush1.msra.mxu0 0.0
      %2691 = vmatprep.subr.mxu0 0.0
      %2692 = vmatpush1.msra.mxu0 0.0
      %2693 = vmatprep.subr.mxu0 0.0
      %2694 = vmatpush1.msra.mxu0 0.0
      %2695 = vmatprep.subr.mxu0 0.0
      %2696 = vmatpush1.msra.mxu0 0.0
      %2697 = vmatprep.subr.mxu0 0.0
      %2698 = vmatpush1.msra.mxu0 0.0
      %2699 = vmatprep.subr.mxu0 0.0
      %2700 = vmatpush1.msra.mxu0 0.0
      %2701 = vmatprep.subr.mxu0 0.0
      %2702 = vmatpush1.msra.mxu0 0.0
      %2703 = vmatprep.subr.mxu0 0.0
      %2704 = vmatpush1.msra.mxu0 0.0
      %2705 = vmatprep.subr.mxu0 0.0
      %2706 = vmatpush1.msra.mxu0 0.0
      %2707 = vmatprep.subr.mxu0 0.0
      %2708 = vmatpush1.msra.mxu0 0.0
      %2709 = vmatprep.mubr.f32.mxu0 0.0
      %v2710 = vand.u32 %v1211, 4294901760
      %2711 = vmatmul.mubr.f32.gmra.mrb[0].mxu0 %v2710
      %v2712 = vpop.f32.mrb[0].mxu0
      %v2713 = vadd.f32 %v2634, %v2712
      %v2714 = vpop.f32.mrb[0].mxu0
      %2715 = vmatprep.mubr.f32.mxu0 0.0
      %v2716 = vand.u32 %v1214, 4294901760
      %2717 = vmatmul.mubr.f32.gmra.mrb[0].mxu0 %v2716
      %v2718 = vpop.f32.mrb[0].mxu0
      %v2719 = vadd.f32 %v2640, %v2718
      %v2720 = vpop.f32.mrb[0].mxu0
      %2721 = vdwg.mxu0
      %2722 = vmatprep.subr.mxu0 0.0
      %v2723 = vand.u32 %v1186, 4294901760
      %2724 = vmatpush1.msra.mxu0 %v2723
      %2725 = vmatprep.subr.mxu0 0.0
      %v2726 = vand.u32 %v1192, 4294901760
      %2727 = vmatpush1.msra.mxu0 %v2726
      %2728 = vmatprep.subr.mxu0 0.0
      %2729 = vmatpush1.msra.mxu0 0.0
      %2730 = vmatprep.subr.mxu0 0.0
      %2731 = vmatpush1.msra.mxu0 0.0
      %2732 = vmatprep.subr.mxu0 0.0
      %2733 = vmatpush1.msra.mxu0 0.0
      %2734 = vmatprep.subr.mxu0 0.0
      %2735 = vmatpush1.msra.mxu0 0.0
      %2736 = vmatprep.subr.mxu0 0.0
      %2737 = vmatpush1.msra.mxu0 0.0
      %2738 = vmatprep.subr.mxu0 0.0
      %2739 = vmatpush1.msra.mxu0 0.0
      %2740 = vmatprep.subr.mxu0 0.0
      %2741 = vmatpush1.msra.mxu0 0.0
      %2742 = vmatprep.subr.mxu0 0.0
      %2743 = vmatpush1.msra.mxu0 0.0
      %2744 = vmatprep.subr.mxu0 0.0
      %2745 = vmatpush1.msra.mxu0 0.0
      %2746 = vmatprep.subr.mxu0 0.0
      %2747 = vmatpush1.msra.mxu0 0.0
      %2748 = vmatprep.subr.mxu0 0.0
      %2749 = vmatpush1.msra.mxu0 0.0
      %2750 = vmatprep.subr.mxu0 0.0
      %2751 = vmatpush1.msra.mxu0 0.0
      %2752 = vmatprep.subr.mxu0 0.0
      %2753 = vmatpush1.msra.mxu0 0.0
      %2754 = vmatprep.subr.mxu0 0.0
      %2755 = vmatpush1.msra.mxu0 0.0
      %2756 = vmatprep.subr.mxu0 0.0
      %2757 = vmatpush1.msra.mxu0 0.0
      %2758 = vmatprep.subr.mxu0 0.0
      %2759 = vmatpush1.msra.mxu0 0.0
      %2760 = vmatprep.subr.mxu0 0.0
      %2761 = vmatpush1.msra.mxu0 0.0
      %2762 = vmatprep.subr.mxu0 0.0
      %2763 = vmatpush1.msra.mxu0 0.0
      %2764 = vmatprep.subr.mxu0 0.0
      %2765 = vmatpush1.msra.mxu0 0.0
      %2766 = vmatprep.subr.mxu0 0.0
      %2767 = vmatpush1.msra.mxu0 0.0
      %2768 = vmatprep.subr.mxu0 0.0
      %2769 = vmatpush1.msra.mxu0 0.0
      %2770 = vmatprep.subr.mxu0 0.0
      %2771 = vmatpush1.msra.mxu0 0.0
      %2772 = vmatprep.subr.mxu0 0.0
      %2773 = vmatpush1.msra.mxu0 0.0
      %2774 = vmatprep.subr.mxu0 0.0
      %2775 = vmatpush1.msra.mxu0 0.0
      %2776 = vmatprep.subr.mxu0 0.0
      %2777 = vmatpush1.msra.mxu0 0.0
      %2778 = vmatprep.subr.mxu0 0.0
      %2779 = vmatpush1.msra.mxu0 0.0
      %2780 = vmatprep.subr.mxu0 0.0
      %2781 = vmatpush1.msra.mxu0 0.0
      %2782 = vmatprep.subr.mxu0 0.0
      %2783 = vmatpush1.msra.mxu0 0.0
      %2784 = vmatprep.subr.mxu0 0.0
      %2785 = vmatpush1.msra.mxu0 0.0
      %2786 = vmatprep.subr.mxu0 0.0
      %2787 = vmatpush1.msra.mxu0 0.0
      %2788 = vmatprep.mubr.f32.mxu0 0.0
      %v2789 = vand.u32 %v1211, 4294901760
      %v2790 = vsub.f32 %v1211, %v2789
      %v2791 = vand.u32 %v2790, 4294901760
      %v2792 = vsub.f32 %v2790, %v2791
      %v2793 = vand.u32 %v2792, 4294901760
      %2794 = vmatmul.mubr.f32.gmra.mrb[0].mxu0 %v2793
      %v2795 = vpop.f32.mrb[0].mxu0
      %v2796 = vadd.f32 0.0, %v2795
      %v2797 = vpop.f32.mrb[0].mxu0
      %2798 = vmatprep.mubr.f32.mxu0 0.0
      %v2799 = vand.u32 %v1214, 4294901760
      %v2800 = vsub.f32 %v1214, %v2799
      %v2801 = vand.u32 %v2800, 4294901760
      %v2802 = vsub.f32 %v2800, %v2801
      %v2803 = vand.u32 %v2802, 4294901760
      %2804 = vmatmul.mubr.f32.gmra.mrb[0].mxu0 %v2803
      %v2805 = vpop.f32.mrb[0].mxu0
      %v2806 = vadd.f32 0.0, %v2805
      %v2807 = vpop.f32.mrb[0].mxu0
      %2808 = vdwg.mxu0
      %2809 = vmatprep.subr.mxu0 0.0
      %v2810 = vand.u32 %v1186, 4294901760
      %v2811 = vsub.f32 %v1186, %v2810
      %v2812 = vand.u32 %v2811, 4294901760
      %v2813 = vsub.f32 %v2811, %v2812
      %v2814 = vand.u32 %v2813, 4294901760
      %2815 = vmatpush1.msra.mxu0 %v2814
      %2816 = vmatprep.subr.mxu0 0.0
      %v2817 = vand.u32 %v1192, 4294901760
      %v2818 = vsub.f32 %v1192, %v2817
      %v2819 = vand.u32 %v2818, 4294901760
      %v2820 = vsub.f32 %v2818, %v2819
      %v2821 = vand.u32 %v2820, 4294901760
      %2822 = vmatpush1.msra.mxu0 %v2821
      %2823 = vmatprep.subr.mxu0 0.0
      %2824 = vmatpush1.msra.mxu0 0.0
      %2825 = vmatprep.subr.mxu0 0.0
      %2826 = vmatpush1.msra.mxu0 0.0
      %2827 = vmatprep.subr.mxu0 0.0
      %2828 = vmatpush1.msra.mxu0 0.0
      %2829 = vmatprep.subr.mxu0 0.0
      %2830 = vmatpush1.msra.mxu0 0.0
      %2831 = vmatprep.subr.mxu0 0.0
      %2832 = vmatpush1.msra.mxu0 0.0
      %2833 = vmatprep.subr.mxu0 0.0
      %2834 = vmatpush1.msra.mxu0 0.0
      %2835 = vmatprep.subr.mxu0 0.0
      %2836 = vmatpush1.msra.mxu0 0.0
      %2837 = vmatprep.subr.mxu0 0.0
      %2838 = vmatpush1.msra.mxu0 0.0
      %2839 = vmatprep.subr.mxu0 0.0
      %2840 = vmatpush1.msra.mxu0 0.0
      %2841 = vmatprep.subr.mxu0 0.0
      %2842 = vmatpush1.msra.mxu0 0.0
      %2843 = vmatprep.subr.mxu0 0.0
      %2844 = vmatpush1.msra.mxu0 0.0
      %2845 = vmatprep.subr.mxu0 0.0
      %2846 = vmatpush1.msra.mxu0 0.0
      %2847 = vmatprep.subr.mxu0 0.0
      %2848 = vmatpush1.msra.mxu0 0.0
      %2849 = vmatprep.subr.mxu0 0.0
      %2850 = vmatpush1.msra.mxu0 0.0
      %2851 = vmatprep.subr.mxu0 0.0
      %2852 = vmatpush1.msra.mxu0 0.0
      %2853 = vmatprep.subr.mxu0 0.0
      %2854 = vmatpush1.msra.mxu0 0.0
      %2855 = vmatprep.subr.mxu0 0.0
      %2856 = vmatpush1.msra.mxu0 0.0
      %2857 = vmatprep.subr.mxu0 0.0
      %2858 = vmatpush1.msra.mxu0 0.0
      %2859 = vmatprep.subr.mxu0 0.0
      %2860 = vmatpush1.msra.mxu0 0.0
      %2861 = vmatprep.subr.mxu0 0.0
      %2862 = vmatpush1.msra.mxu0 0.0
      %2863 = vmatprep.subr.mxu0 0.0
      %2864 = vmatpush1.msra.mxu0 0.0
      %2865 = vmatprep.subr.mxu0 0.0
      %2866 = vmatpush1.msra.mxu0 0.0
      %2867 = vmatprep.subr.mxu0 0.0
      %2868 = vmatpush1.msra.mxu0 0.0
      %2869 = vmatprep.subr.mxu0 0.0
      %2870 = vmatpush1.msra.mxu0 0.0
      %2871 = vmatprep.subr.mxu0 0.0
      %2872 = vmatpush1.msra.mxu0 0.0
      %2873 = vmatprep.subr.mxu0 0.0
      %2874 = vmatpush1.msra.mxu0 0.0
      %2875 = vmatprep.subr.mxu0 0.0
      %2876 = vmatpush1.msra.mxu0 0.0
      %2877 = vmatprep.subr.mxu0 0.0
      %2878 = vmatpush1.msra.mxu0 0.0
      %2879 = vmatprep.subr.mxu0 0.0
      %2880 = vmatpush1.msra.mxu0 0.0
      %2881 = vmatprep.subr.mxu0 0.0
      %2882 = vmatpush1.msra.mxu0 0.0
      %2883 = vmatprep.mubr.f32.mxu0 0.0
      %v2884 = vand.u32 %v1211, 4294901760
      %2885 = vmatmul.mubr.f32.gmra.mrb[0].mxu0 %v2884
      %v2886 = vpop.f32.mrb[0].mxu0
      %v2887 = vadd.f32 %v2796, %v2886
      %v2888 = vpop.f32.mrb[0].mxu0
      %2889 = vmatprep.mubr.f32.mxu0 0.0
      %v2890 = vand.u32 %v1214, 4294901760
      %2891 = vmatmul.mubr.f32.gmra.mrb[0].mxu0 %v2890
      %v2892 = vpop.f32.mrb[0].mxu0
      %v2893 = vadd.f32 %v2806, %v2892
      %v2894 = vpop.f32.mrb[0].mxu0
      %2895 = vdwg.mxu0
      %2896 = vmatprep.subr.mxu0 0.0
      %v2897 = vand.u32 %v1186, 4294901760
      %v2898 = vsub.f32 %v1186, %v2897
      %2899 = vmatpush1.msra.mxu0 %v2898
      %2900 = vmatprep.subr.mxu0 0.0
      %v2901 = vand.u32 %v1192, 4294901760
      %v2902 = vsub.f32 %v1192, %v2901
      %2903 = vmatpush1.msra.mxu0 %v2902
      %2904 = vmatprep.subr.mxu0 0.0
      %2905 = vmatpush1.msra.mxu0 0.0
      %2906 = vmatprep.subr.mxu0 0.0
      %2907 = vmatpush1.msra.mxu0 0.0
      %2908 = vmatprep.subr.mxu0 0.0
      %2909 = vmatpush1.msra.mxu0 0.0
      %2910 = vmatprep.subr.mxu0 0.0
      %2911 = vmatpush1.msra.mxu0 0.0
      %2912 = vmatprep.subr.mxu0 0.0
      %2913 = vmatpush1.msra.mxu0 0.0
      %2914 = vmatprep.subr.mxu0 0.0
      %2915 = vmatpush1.msra.mxu0 0.0
      %2916 = vmatprep.subr.mxu0 0.0
      %2917 = vmatpush1.msra.mxu0 0.0
      %2918 = vmatprep.subr.mxu0 0.0
      %2919 = vmatpush1.msra.mxu0 0.0
      %2920 = vmatprep.subr.mxu0 0.0
      %2921 = vmatpush1.msra.mxu0 0.0
      %2922 = vmatprep.subr.mxu0 0.0
      %2923 = vmatpush1.msra.mxu0 0.0
      %2924 = vmatprep.subr.mxu0 0.0
      %2925 = vmatpush1.msra.mxu0 0.0
      %2926 = vmatprep.subr.mxu0 0.0
      %2927 = vmatpush1.msra.mxu0 0.0
      %2928 = vmatprep.subr.mxu0 0.0
      %2929 = vmatpush1.msra.mxu0 0.0
      %2930 = vmatprep.subr.mxu0 0.0
      %2931 = vmatpush1.msra.mxu0 0.0
      %2932 = vmatprep.subr.mxu0 0.0
      %2933 = vmatpush1.msra.mxu0 0.0
      %2934 = vmatprep.subr.mxu0 0.0
      %2935 = vmatpush1.msra.mxu0 0.0
      %2936 = vmatprep.subr.mxu0 0.0
      %2937 = vmatpush1.msra.mxu0 0.0
      %2938 = vmatprep.subr.mxu0 0.0
      %2939 = vmatpush1.msra.mxu0 0.0
      %2940 = vmatprep.subr.mxu0 0.0
      %2941 = vmatpush1.msra.mxu0 0.0
      %2942 = vmatprep.subr.mxu0 0.0
      %2943 = vmatpush1.msra.mxu0 0.0
      %2944 = vmatprep.subr.mxu0 0.0
      %2945 = vmatpush1.msra.mxu0 0.0
      %2946 = vmatprep.subr.mxu0 0.0
      %2947 = vmatpush1.msra.mxu0 0.0
      %2948 = vmatprep.subr.mxu0 0.0
      %2949 = vmatpush1.msra.mxu0 0.0
      %2950 = vmatprep.subr.mxu0 0.0
      %2951 = vmatpush1.msra.mxu0 0.0
      %2952 = vmatprep.subr.mxu0 0.0
      %2953 = vmatpush1.msra.mxu0 0.0
      %2954 = vmatprep.subr.mxu0 0.0
      %2955 = vmatpush1.msra.mxu0 0.0
      %2956 = vmatprep.subr.mxu0 0.0
      %2957 = vmatpush1.msra.mxu0 0.0
      %2958 = vmatprep.subr.mxu0 0.0
      %2959 = vmatpush1.msra.mxu0 0.0
      %2960 = vmatprep.subr.mxu0 0.0
      %2961 = vmatpush1.msra.mxu0 0.0
      %2962 = vmatprep.subr.mxu0 0.0
      %2963 = vmatpush1.msra.mxu0 0.0
      %2964 = vmatprep.mubr.f32.mxu0 0.0
      %v2965 = vand.u32 %v1211, 4294901760
      %v2966 = vsub.f32 %v1211, %v2965
      %2967 = vmatmul.mubr.f32.gmra.mrb[0].mxu0 %v2966
      %v2968 = vpop.f32.mrb[0].mxu0
      %v2969 = vadd.f32 %v2887, %v2968
      %v2970 = vpop.f32.mrb[0].mxu0
      %2971 = vmatprep.mubr.f32.mxu0 0.0
      %v2972 = vand.u32 %v1214, 4294901760
      %v2973 = vsub.f32 %v1214, %v2972
      %2974 = vmatmul.mubr.f32.gmra.mrb[0].mxu0 %v2973
      %v2975 = vpop.f32.mrb[0].mxu0
      %v2976 = vadd.f32 %v2893, %v2975
      %v2977 = vpop.f32.mrb[0].mxu0
      %2978 = vdwg.mxu0
      %2979 = vmatprep.subr.mxu0 0.0
      %v2980 = vand.u32 %v1186, 4294901760
      %2981 = vmatpush1.msra.mxu0 %v2980
      %2982 = vmatprep.subr.mxu0 0.0
      %v2983 = vand.u32 %v1192, 4294901760
      %2984 = vmatpush1.msra.mxu0 %v2983
      %2985 = vmatprep.subr.mxu0 0.0
      %2986 = vmatpush1.msra.mxu0 0.0
      %2987 = vmatprep.subr.mxu0 0.0
      %2988 = vmatpush1.msra.mxu0 0.0
      %2989 = vmatprep.subr.mxu0 0.0
      %2990 = vmatpush1.msra.mxu0 0.0
      %2991 = vmatprep.subr.mxu0 0.0
      %2992 = vmatpush1.msra.mxu0 0.0
      %2993 = vmatprep.subr.mxu0 0.0
      %2994 = vmatpush1.msra.mxu0 0.0
      %2995 = vmatprep.subr.mxu0 0.0
      %2996 = vmatpush1.msra.mxu0 0.0
      %2997 = vmatprep.subr.mxu0 0.0
      %2998 = vmatpush1.msra.mxu0 0.0
      %2999 = vmatprep.subr.mxu0 0.0
      %3000 = vmatpush1.msra.mxu0 0.0
      %3001 = vmatprep.subr.mxu0 0.0
      %3002 = vmatpush1.msra.mxu0 0.0
      %3003 = vmatprep.subr.mxu0 0.0
      %3004 = vmatpush1.msra.mxu0 0.0
      %3005 = vmatprep.subr.mxu0 0.0
      %3006 = vmatpush1.msra.mxu0 0.0
      %3007 = vmatprep.subr.mxu0 0.0
      %3008 = vmatpush1.msra.mxu0 0.0
      %3009 = vmatprep.subr.mxu0 0.0
      %3010 = vmatpush1.msra.mxu0 0.0
      %3011 = vmatprep.subr.mxu0 0.0
      %3012 = vmatpush1.msra.mxu0 0.0
      %3013 = vmatprep.subr.mxu0 0.0
      %3014 = vmatpush1.msra.mxu0 0.0
      %3015 = vmatprep.subr.mxu0 0.0
      %3016 = vmatpush1.msra.mxu0 0.0
      %3017 = vmatprep.subr.mxu0 0.0
      %3018 = vmatpush1.msra.mxu0 0.0
      %3019 = vmatprep.subr.mxu0 0.0
      %3020 = vmatpush1.msra.mxu0 0.0
      %3021 = vmatprep.subr.mxu0 0.0
      %3022 = vmatpush1.msra.mxu0 0.0
      %3023 = vmatprep.subr.mxu0 0.0
      %3024 = vmatpush1.msra.mxu0 0.0
      %3025 = vmatprep.subr.mxu0 0.0
      %3026 = vmatpush1.msra.mxu0 0.0
      %3027 = vmatprep.subr.mxu0 0.0
      %3028 = vmatpush1.msra.mxu0 0.0
      %3029 = vmatprep.subr.mxu0 0.0
      %3030 = vmatpush1.msra.mxu0 0.0
      %3031 = vmatprep.subr.mxu0 0.0
      %3032 = vmatpush1.msra.mxu0 0.0
      %3033 = vmatprep.subr.mxu0 0.0
      %3034 = vmatpush1.msra.mxu0 0.0
      %3035 = vmatprep.subr.mxu0 0.0
      %3036 = vmatpush1.msra.mxu0 0.0
      %3037 = vmatprep.subr.mxu0 0.0
      %3038 = vmatpush1.msra.mxu0 0.0
      %3039 = vmatprep.subr.mxu0 0.0
      %3040 = vmatpush1.msra.mxu0 0.0
      %3041 = vmatprep.subr.mxu0 0.0
      %3042 = vmatpush1.msra.mxu0 0.0
      %3043 = vmatprep.subr.mxu0 0.0
      %3044 = vmatpush1.msra.mxu0 0.0
      %3045 = vmatprep.mubr.f32.mxu0 0.0
      %v3046 = vand.u32 %v1211, 4294901760
      %v3047 = vsub.f32 %v1211, %v3046
      %v3048 = vand.u32 %v3047, 4294901760
      %3049 = vmatmul.mubr.f32.gmra.mrb[0].mxu0 %v3048
      %v3050 = vpop.f32.mrb[0].mxu0
      %v3051 = vadd.f32 %v2969, %v3050
      %v3052 = vpop.f32.mrb[0].mxu0
      %3053 = vmatprep.mubr.f32.mxu0 0.0
      %v3054 = vand.u32 %v1214, 4294901760
      %v3055 = vsub.f32 %v1214, %v3054
      %v3056 = vand.u32 %v3055, 4294901760
      %3057 = vmatmul.mubr.f32.gmra.mrb[0].mxu0 %v3056
      %v3058 = vpop.f32.mrb[0].mxu0
      %v3059 = vadd.f32 %v2976, %v3058
      %v3060 = vpop.f32.mrb[0].mxu0
      %3061 = vdwg.mxu0
      %3062 = vmatprep.subr.mxu0 0.0
      %v3063 = vand.u32 %v1186, 4294901760
      %v3064 = vsub.f32 %v1186, %v3063
      %v3065 = vand.u32 %v3064, 4294901760
      %3066 = vmatpush1.msra.mxu0 %v3065
      %3067 = vmatprep.subr.mxu0 0.0
      %v3068 = vand.u32 %v1192, 4294901760
      %v3069 = vsub.f32 %v1192, %v3068
      %v3070 = vand.u32 %v3069, 4294901760
      %3071 = vmatpush1.msra.mxu0 %v3070
      %3072 = vmatprep.subr.mxu0 0.0
      %3073 = vmatpush1.msra.mxu0 0.0
      %3074 = vmatprep.subr.mxu0 0.0
      %3075 = vmatpush1.msra.mxu0 0.0
      %3076 = vmatprep.subr.mxu0 0.0
      %3077 = vmatpush1.msra.mxu0 0.0
      %3078 = vmatprep.subr.mxu0 0.0
      %3079 = vmatpush1.msra.mxu0 0.0
      %3080 = vmatprep.subr.mxu0 0.0
      %3081 = vmatpush1.msra.mxu0 0.0
      %3082 = vmatprep.subr.mxu0 0.0
      %3083 = vmatpush1.msra.mxu0 0.0
      %3084 = vmatprep.subr.mxu0 0.0
      %3085 = vmatpush1.msra.mxu0 0.0
      %3086 = vmatprep.subr.mxu0 0.0
      %3087 = vmatpush1.msra.mxu0 0.0
      %3088 = vmatprep.subr.mxu0 0.0
      %3089 = vmatpush1.msra.mxu0 0.0
      %3090 = vmatprep.subr.mxu0 0.0
      %3091 = vmatpush1.msra.mxu0 0.0
      %3092 = vmatprep.subr.mxu0 0.0
      %3093 = vmatpush1.msra.mxu0 0.0
      %3094 = vmatprep.subr.mxu0 0.0
      %3095 = vmatpush1.msra.mxu0 0.0
      %3096 = vmatprep.subr.mxu0 0.0
      %3097 = vmatpush1.msra.mxu0 0.0
      %3098 = vmatprep.subr.mxu0 0.0
      %3099 = vmatpush1.msra.mxu0 0.0
      %3100 = vmatprep.subr.mxu0 0.0
      %3101 = vmatpush1.msra.mxu0 0.0
      %3102 = vmatprep.subr.mxu0 0.0
      %3103 = vmatpush1.msra.mxu0 0.0
      %3104 = vmatprep.subr.mxu0 0.0
      %3105 = vmatpush1.msra.mxu0 0.0
      %3106 = vmatprep.subr.mxu0 0.0
      %3107 = vmatpush1.msra.mxu0 0.0
      %3108 = vmatprep.subr.mxu0 0.0
      %3109 = vmatpush1.msra.mxu0 0.0
      %3110 = vmatprep.subr.mxu0 0.0
      %3111 = vmatpush1.msra.mxu0 0.0
      %3112 = vmatprep.subr.mxu0 0.0
      %3113 = vmatpush1.msra.mxu0 0.0
      %3114 = vmatprep.subr.mxu0 0.0
      %3115 = vmatpush1.msra.mxu0 0.0
      %3116 = vmatprep.subr.mxu0 0.0
      %3117 = vmatpush1.msra.mxu0 0.0
      %3118 = vmatprep.subr.mxu0 0.0
      %3119 = vmatpush1.msra.mxu0 0.0
      %3120 = vmatprep.subr.mxu0 0.0
      %3121 = vmatpush1.msra.mxu0 0.0
      %3122 = vmatprep.subr.mxu0 0.0
      %3123 = vmatpush1.msra.mxu0 0.0
      %3124 = vmatprep.subr.mxu0 0.0
      %3125 = vmatpush1.msra.mxu0 0.0
      %3126 = vmatprep.subr.mxu0 0.0
      %3127 = vmatpush1.msra.mxu0 0.0
      %3128 = vmatprep.subr.mxu0 0.0
      %3129 = vmatpush1.msra.mxu0 0.0
      %3130 = vmatprep.subr.mxu0 0.0
      %3131 = vmatpush1.msra.mxu0 0.0
      %3132 = vmatprep.mubr.f32.mxu0 0.0
      %v3133 = vand.u32 %v1211, 4294901760
      %3134 = vmatmul.mubr.f32.gmra.mrb[0].mxu0 %v3133
      %v3135 = vpop.f32.mrb[0].mxu0
      %v3136 = vadd.f32 %v3051, %v3135
      %v3137 = vpop.f32.mrb[0].mxu0
      %3138 = vmatprep.mubr.f32.mxu0 0.0
      %v3139 = vand.u32 %v1214, 4294901760
      %3140 = vmatmul.mubr.f32.gmra.mrb[0].mxu0 %v3139
      %v3141 = vpop.f32.mrb[0].mxu0
      %v3142 = vadd.f32 %v3059, %v3141
      %v3143 = vpop.f32.mrb[0].mxu0
      %3144 = vdwg.mxu0
      %3145 = vmatprep.subr.mxu0 0.0
      %v3146 = vand.u32 %v1186, 4294901760
      %3147 = vmatpush1.msra.mxu0 %v3146
      %3148 = vmatprep.subr.mxu0 0.0
      %v3149 = vand.u32 %v1192, 4294901760
      %3150 = vmatpush1.msra.mxu0 %v3149
      %3151 = vmatprep.subr.mxu0 0.0
      %3152 = vmatpush1.msra.mxu0 0.0
      %3153 = vmatprep.subr.mxu0 0.0
      %3154 = vmatpush1.msra.mxu0 0.0
      %3155 = vmatprep.subr.mxu0 0.0
      %3156 = vmatpush1.msra.mxu0 0.0
      %3157 = vmatprep.subr.mxu0 0.0
      %3158 = vmatpush1.msra.mxu0 0.0
      %3159 = vmatprep.subr.mxu0 0.0
      %3160 = vmatpush1.msra.mxu0 0.0
      %3161 = vmatprep.subr.mxu0 0.0
      %3162 = vmatpush1.msra.mxu0 0.0
      %3163 = vmatprep.subr.mxu0 0.0
      %3164 = vmatpush1.msra.mxu0 0.0
      %3165 = vmatprep.subr.mxu0 0.0
      %3166 = vmatpush1.msra.mxu0 0.0
      %3167 = vmatprep.subr.mxu0 0.0
      %3168 = vmatpush1.msra.mxu0 0.0
      %3169 = vmatprep.subr.mxu0 0.0
      %3170 = vmatpush1.msra.mxu0 0.0
      %3171 = vmatprep.subr.mxu0 0.0
      %3172 = vmatpush1.msra.mxu0 0.0
      %3173 = vmatprep.subr.mxu0 0.0
      %3174 = vmatpush1.msra.mxu0 0.0
      %3175 = vmatprep.subr.mxu0 0.0
      %3176 = vmatpush1.msra.mxu0 0.0
      %3177 = vmatprep.subr.mxu0 0.0
      %3178 = vmatpush1.msra.mxu0 0.0
      %3179 = vmatprep.subr.mxu0 0.0
      %3180 = vmatpush1.msra.mxu0 0.0
      %3181 = vmatprep.subr.mxu0 0.0
      %3182 = vmatpush1.msra.mxu0 0.0
      %3183 = vmatprep.subr.mxu0 0.0
      %3184 = vmatpush1.msra.mxu0 0.0
      %3185 = vmatprep.subr.mxu0 0.0
      %3186 = vmatpush1.msra.mxu0 0.0
      %3187 = vmatprep.subr.mxu0 0.0
      %3188 = vmatpush1.msra.mxu0 0.0
      %3189 = vmatprep.subr.mxu0 0.0
      %3190 = vmatpush1.msra.mxu0 0.0
      %3191 = vmatprep.subr.mxu0 0.0
      %3192 = vmatpush1.msra.mxu0 0.0
      %3193 = vmatprep.subr.mxu0 0.0
      %3194 = vmatpush1.msra.mxu0 0.0
      %3195 = vmatprep.subr.mxu0 0.0
      %3196 = vmatpush1.msra.mxu0 0.0
      %3197 = vmatprep.subr.mxu0 0.0
      %3198 = vmatpush1.msra.mxu0 0.0
      %3199 = vmatprep.subr.mxu0 0.0
      %3200 = vmatpush1.msra.mxu0 0.0
      %3201 = vmatprep.subr.mxu0 0.0
      %3202 = vmatpush1.msra.mxu0 0.0
      %3203 = vmatprep.subr.mxu0 0.0
      %3204 = vmatpush1.msra.mxu0 0.0
      %3205 = vmatprep.subr.mxu0 0.0
      %3206 = vmatpush1.msra.mxu0 0.0
      %3207 = vmatprep.subr.mxu0 0.0
      %3208 = vmatpush1.msra.mxu0 0.0
      %3209 = vmatprep.subr.mxu0 0.0
      %3210 = vmatpush1.msra.mxu0 0.0
      %3211 = vmatprep.mubr.f32.mxu0 0.0
      %v3212 = vand.u32 %v1211, 4294901760
      %3213 = vmatmul.mubr.f32.gmra.mrb[0].mxu0 %v3212
      %v3214 = vpop.f32.mrb[0].mxu0
      %v3215 = vadd.f32 %v3136, %v3214
      %v3216 = vpop.f32.mrb[0].mxu0
      %3217 = vmatprep.mubr.f32.mxu0 0.0
      %v3218 = vand.u32 %v1214, 4294901760
      %3219 = vmatmul.mubr.f32.gmra.mrb[0].mxu0 %v3218
      %v3220 = vpop.f32.mrb[0].mxu0
      %v3221 = vadd.f32 %v3142, %v3220
      %v3222 = vpop.f32.mrb[0].mxu0
      %3223 = vdwg.mxu0
      %3224 = vmatprep.subr.mxu0 0.0
      %v3225 = vand.u32 %v1198, 4294901760
      %3226 = vmatpush1.msra.mxu0 %v3225
      %3227 = vmatprep.subr.mxu0 0.0
      %v3228 = vand.u32 %v1204, 4294901760
      %3229 = vmatpush1.msra.mxu0 %v3228
      %3230 = vmatprep.subr.mxu0 0.0
      %3231 = vmatpush1.msra.mxu0 0.0
      %3232 = vmatprep.subr.mxu0 0.0
      %3233 = vmatpush1.msra.mxu0 0.0
      %3234 = vmatprep.subr.mxu0 0.0
      %3235 = vmatpush1.msra.mxu0 0.0
      %3236 = vmatprep.subr.mxu0 0.0
      %3237 = vmatpush1.msra.mxu0 0.0
      %3238 = vmatprep.subr.mxu0 0.0
      %3239 = vmatpush1.msra.mxu0 0.0
      %3240 = vmatprep.subr.mxu0 0.0
      %3241 = vmatpush1.msra.mxu0 0.0
      %3242 = vmatprep.subr.mxu0 0.0
      %3243 = vmatpush1.msra.mxu0 0.0
      %3244 = vmatprep.subr.mxu0 0.0
      %3245 = vmatpush1.msra.mxu0 0.0
      %3246 = vmatprep.subr.mxu0 0.0
      %3247 = vmatpush1.msra.mxu0 0.0
      %3248 = vmatprep.subr.mxu0 0.0
      %3249 = vmatpush1.msra.mxu0 0.0
      %3250 = vmatprep.subr.mxu0 0.0
      %3251 = vmatpush1.msra.mxu0 0.0
      %3252 = vmatprep.subr.mxu0 0.0
      %3253 = vmatpush1.msra.mxu0 0.0
      %3254 = vmatprep.subr.mxu0 0.0
      %3255 = vmatpush1.msra.mxu0 0.0
      %3256 = vmatprep.subr.mxu0 0.0
      %3257 = vmatpush1.msra.mxu0 0.0
      %3258 = vmatprep.subr.mxu0 0.0
      %3259 = vmatpush1.msra.mxu0 0.0
      %3260 = vmatprep.subr.mxu0 0.0
      %3261 = vmatpush1.msra.mxu0 0.0
      %3262 = vmatprep.subr.mxu0 0.0
      %3263 = vmatpush1.msra.mxu0 0.0
      %3264 = vmatprep.subr.mxu0 0.0
      %3265 = vmatpush1.msra.mxu0 0.0
      %3266 = vmatprep.subr.mxu0 0.0
      %3267 = vmatpush1.msra.mxu0 0.0
      %3268 = vmatprep.subr.mxu0 0.0
      %3269 = vmatpush1.msra.mxu0 0.0
      %3270 = vmatprep.subr.mxu0 0.0
      %3271 = vmatpush1.msra.mxu0 0.0
      %3272 = vmatprep.subr.mxu0 0.0
      %3273 = vmatpush1.msra.mxu0 0.0
      %3274 = vmatprep.subr.mxu0 0.0
      %3275 = vmatpush1.msra.mxu0 0.0
      %3276 = vmatprep.subr.mxu0 0.0
      %3277 = vmatpush1.msra.mxu0 0.0
      %3278 = vmatprep.subr.mxu0 0.0
      %3279 = vmatpush1.msra.mxu0 0.0
      %3280 = vmatprep.subr.mxu0 0.0
      %3281 = vmatpush1.msra.mxu0 0.0
      %3282 = vmatprep.subr.mxu0 0.0
      %3283 = vmatpush1.msra.mxu0 0.0
      %3284 = vmatprep.subr.mxu0 0.0
      %3285 = vmatpush1.msra.mxu0 0.0
      %3286 = vmatprep.subr.mxu0 0.0
      %3287 = vmatpush1.msra.mxu0 0.0
      %3288 = vmatprep.subr.mxu0 0.0
      %3289 = vmatpush1.msra.mxu0 0.0
      %3290 = vmatprep.mubr.f32.mxu0 0.0
      %v3291 = vand.u32 %v1211, 4294901760
      %v3292 = vsub.f32 %v1211, %v3291
      %v3293 = vand.u32 %v3292, 4294901760
      %v3294 = vsub.f32 %v3292, %v3293
      %v3295 = vand.u32 %v3294, 4294901760
      %3296 = vmatmul.mubr.f32.gmra.mrb[0].mxu0 %v3295
      %v3297 = vpop.f32.mrb[0].mxu0
      %v3298 = vadd.f32 0.0, %v3297
      %v3299 = vpop.f32.mrb[0].mxu0
      %3300 = vmatprep.mubr.f32.mxu0 0.0
      %v3301 = vand.u32 %v1214, 4294901760
      %v3302 = vsub.f32 %v1214, %v3301
      %v3303 = vand.u32 %v3302, 4294901760
      %v3304 = vsub.f32 %v3302, %v3303
      %v3305 = vand.u32 %v3304, 4294901760
      %3306 = vmatmul.mubr.f32.gmra.mrb[0].mxu0 %v3305
      %v3307 = vpop.f32.mrb[0].mxu0
      %v3308 = vadd.f32 0.0, %v3307
      %v3309 = vpop.f32.mrb[0].mxu0
      %3310 = vdwg.mxu0
      %3311 = vmatprep.subr.mxu0 0.0
      %v3312 = vand.u32 %v1198, 4294901760
      %v3313 = vsub.f32 %v1198, %v3312
      %v3314 = vand.u32 %v3313, 4294901760
      %v3315 = vsub.f32 %v3313, %v3314
      %v3316 = vand.u32 %v3315, 4294901760
      %3317 = vmatpush1.msra.mxu0 %v3316
      %3318 = vmatprep.subr.mxu0 0.0
      %v3319 = vand.u32 %v1204, 4294901760
      %v3320 = vsub.f32 %v1204, %v3319
      %v3321 = vand.u32 %v3320, 4294901760
      %v3322 = vsub.f32 %v3320, %v3321
      %v3323 = vand.u32 %v3322, 4294901760
      %3324 = vmatpush1.msra.mxu0 %v3323
      %3325 = vmatprep.subr.mxu0 0.0
      %3326 = vmatpush1.msra.mxu0 0.0
      %3327 = vmatprep.subr.mxu0 0.0
      %3328 = vmatpush1.msra.mxu0 0.0
      %3329 = vmatprep.subr.mxu0 0.0
      %3330 = vmatpush1.msra.mxu0 0.0
      %3331 = vmatprep.subr.mxu0 0.0
      %3332 = vmatpush1.msra.mxu0 0.0
      %3333 = vmatprep.subr.mxu0 0.0
      %3334 = vmatpush1.msra.mxu0 0.0
      %3335 = vmatprep.subr.mxu0 0.0
      %3336 = vmatpush1.msra.mxu0 0.0
      %3337 = vmatprep.subr.mxu0 0.0
      %3338 = vmatpush1.msra.mxu0 0.0
      %3339 = vmatprep.subr.mxu0 0.0
      %3340 = vmatpush1.msra.mxu0 0.0
      %3341 = vmatprep.subr.mxu0 0.0
      %3342 = vmatpush1.msra.mxu0 0.0
      %3343 = vmatprep.subr.mxu0 0.0
      %3344 = vmatpush1.msra.mxu0 0.0
      %3345 = vmatprep.subr.mxu0 0.0
      %3346 = vmatpush1.msra.mxu0 0.0
      %3347 = vmatprep.subr.mxu0 0.0
      %3348 = vmatpush1.msra.mxu0 0.0
      %3349 = vmatprep.subr.mxu0 0.0
      %3350 = vmatpush1.msra.mxu0 0.0
      %3351 = vmatprep.subr.mxu0 0.0
      %3352 = vmatpush1.msra.mxu0 0.0
      %3353 = vmatprep.subr.mxu0 0.0
      %3354 = vmatpush1.msra.mxu0 0.0
      %3355 = vmatprep.subr.mxu0 0.0
      %3356 = vmatpush1.msra.mxu0 0.0
      %3357 = vmatprep.subr.mxu0 0.0
      %3358 = vmatpush1.msra.mxu0 0.0
      %3359 = vmatprep.subr.mxu0 0.0
      %3360 = vmatpush1.msra.mxu0 0.0
      %3361 = vmatprep.subr.mxu0 0.0
      %3362 = vmatpush1.msra.mxu0 0.0
      %3363 = vmatprep.subr.mxu0 0.0
      %3364 = vmatpush1.msra.mxu0 0.0
      %3365 = vmatprep.subr.mxu0 0.0
      %3366 = vmatpush1.msra.mxu0 0.0
      %3367 = vmatprep.subr.mxu0 0.0
      %3368 = vmatpush1.msra.mxu0 0.0
      %3369 = vmatprep.subr.mxu0 0.0
      %3370 = vmatpush1.msra.mxu0 0.0
      %3371 = vmatprep.subr.mxu0 0.0
      %3372 = vmatpush1.msra.mxu0 0.0
      %3373 = vmatprep.subr.mxu0 0.0
      %3374 = vmatpush1.msra.mxu0 0.0
      %3375 = vmatprep.subr.mxu0 0.0
      %3376 = vmatpush1.msra.mxu0 0.0
      %3377 = vmatprep.subr.mxu0 0.0
      %3378 = vmatpush1.msra.mxu0 0.0
      %3379 = vmatprep.subr.mxu0 0.0
      %3380 = vmatpush1.msra.mxu0 0.0
      %3381 = vmatprep.subr.mxu0 0.0
      %3382 = vmatpush1.msra.mxu0 0.0
      %3383 = vmatprep.subr.mxu0 0.0
      %3384 = vmatpush1.msra.mxu0 0.0
      %3385 = vmatprep.mubr.f32.mxu0 0.0
      %v3386 = vand.u32 %v1211, 4294901760
      %3387 = vmatmul.mubr.f32.gmra.mrb[0].mxu0 %v3386
      %v3388 = vpop.f32.mrb[0].mxu0
      %v3389 = vadd.f32 %v3298, %v3388
      %v3390 = vpop.f32.mrb[0].mxu0
      %3391 = vmatprep.mubr.f32.mxu0 0.0
      %v3392 = vand.u32 %v1214, 4294901760
      %3393 = vmatmul.mubr.f32.gmra.mrb[0].mxu0 %v3392
      %v3394 = vpop.f32.mrb[0].mxu0
      %v3395 = vadd.f32 %v3308, %v3394
      %v3396 = vpop.f32.mrb[0].mxu0
      %3397 = vdwg.mxu0
      %3398 = vmatprep.subr.mxu0 0.0
      %v3399 = vand.u32 %v1198, 4294901760
      %v3400 = vsub.f32 %v1198, %v3399
      %3401 = vmatpush1.msra.mxu0 %v3400
      %3402 = vmatprep.subr.mxu0 0.0
      %v3403 = vand.u32 %v1204, 4294901760
      %v3404 = vsub.f32 %v1204, %v3403
      %3405 = vmatpush1.msra.mxu0 %v3404
      %3406 = vmatprep.subr.mxu0 0.0
      %3407 = vmatpush1.msra.mxu0 0.0
      %3408 = vmatprep.subr.mxu0 0.0
      %3409 = vmatpush1.msra.mxu0 0.0
      %3410 = vmatprep.subr.mxu0 0.0
      %3411 = vmatpush1.msra.mxu0 0.0
      %3412 = vmatprep.subr.mxu0 0.0
      %3413 = vmatpush1.msra.mxu0 0.0
      %3414 = vmatprep.subr.mxu0 0.0
      %3415 = vmatpush1.msra.mxu0 0.0
      %3416 = vmatprep.subr.mxu0 0.0
      %3417 = vmatpush1.msra.mxu0 0.0
      %3418 = vmatprep.subr.mxu0 0.0
      %3419 = vmatpush1.msra.mxu0 0.0
      %3420 = vmatprep.subr.mxu0 0.0
      %3421 = vmatpush1.msra.mxu0 0.0
      %3422 = vmatprep.subr.mxu0 0.0
      %3423 = vmatpush1.msra.mxu0 0.0
      %3424 = vmatprep.subr.mxu0 0.0
      %3425 = vmatpush1.msra.mxu0 0.0
      %3426 = vmatprep.subr.mxu0 0.0
      %3427 = vmatpush1.msra.mxu0 0.0
      %3428 = vmatprep.subr.mxu0 0.0
      %3429 = vmatpush1.msra.mxu0 0.0
      %3430 = vmatprep.subr.mxu0 0.0
      %3431 = vmatpush1.msra.mxu0 0.0
      %3432 = vmatprep.subr.mxu0 0.0
      %3433 = vmatpush1.msra.mxu0 0.0
      %3434 = vmatprep.subr.mxu0 0.0
      %3435 = vmatpush1.msra.mxu0 0.0
      %3436 = vmatprep.subr.mxu0 0.0
      %3437 = vmatpush1.msra.mxu0 0.0
      %3438 = vmatprep.subr.mxu0 0.0
      %3439 = vmatpush1.msra.mxu0 0.0
      %3440 = vmatprep.subr.mxu0 0.0
      %3441 = vmatpush1.msra.mxu0 0.0
      %3442 = vmatprep.subr.mxu0 0.0
      %3443 = vmatpush1.msra.mxu0 0.0
      %3444 = vmatprep.subr.mxu0 0.0
      %3445 = vmatpush1.msra.mxu0 0.0
      %3446 = vmatprep.subr.mxu0 0.0
      %3447 = vmatpush1.msra.mxu0 0.0
      %3448 = vmatprep.subr.mxu0 0.0
      %3449 = vmatpush1.msra.mxu0 0.0
      %3450 = vmatprep.subr.mxu0 0.0
      %3451 = vmatpush1.msra.mxu0 0.0
      %3452 = vmatprep.subr.mxu0 0.0
      %3453 = vmatpush1.msra.mxu0 0.0
      %3454 = vmatprep.subr.mxu0 0.0
      %3455 = vmatpush1.msra.mxu0 0.0
      %3456 = vmatprep.subr.mxu0 0.0
      %3457 = vmatpush1.msra.mxu0 0.0
      %3458 = vmatprep.subr.mxu0 0.0
      %3459 = vmatpush1.msra.mxu0 0.0
      %3460 = vmatprep.subr.mxu0 0.0
      %3461 = vmatpush1.msra.mxu0 0.0
      %3462 = vmatprep.subr.mxu0 0.0
      %3463 = vmatpush1.msra.mxu0 0.0
      %3464 = vmatprep.subr.mxu0 0.0
      %3465 = vmatpush1.msra.mxu0 0.0
      %3466 = vmatprep.mubr.f32.mxu0 0.0
      %v3467 = vand.u32 %v1211, 4294901760
      %v3468 = vsub.f32 %v1211, %v3467
      %3469 = vmatmul.mubr.f32.gmra.mrb[0].mxu0 %v3468
      %v3470 = vpop.f32.mrb[0].mxu0
      %v3471 = vadd.f32 %v3389, %v3470
      %v3472 = vpop.f32.mrb[0].mxu0
      %3473 = vmatprep.mubr.f32.mxu0 0.0
      %v3474 = vand.u32 %v1214, 4294901760
      %v3475 = vsub.f32 %v1214, %v3474
      %3476 = vmatmul.mubr.f32.gmra.mrb[0].mxu0 %v3475
      %v3477 = vpop.f32.mrb[0].mxu0
      %v3478 = vadd.f32 %v3395, %v3477
      %v3479 = vpop.f32.mrb[0].mxu0
      %3480 = vdwg.mxu0
      %3481 = vmatprep.subr.mxu0 0.0
      %v3482 = vand.u32 %v1198, 4294901760
      %3483 = vmatpush1.msra.mxu0 %v3482
      %3484 = vmatprep.subr.mxu0 0.0
      %v3485 = vand.u32 %v1204, 4294901760
      %3486 = vmatpush1.msra.mxu0 %v3485
      %3487 = vmatprep.subr.mxu0 0.0
      %3488 = vmatpush1.msra.mxu0 0.0
      %3489 = vmatprep.subr.mxu0 0.0
      %3490 = vmatpush1.msra.mxu0 0.0
      %3491 = vmatprep.subr.mxu0 0.0
      %3492 = vmatpush1.msra.mxu0 0.0
      %3493 = vmatprep.subr.mxu0 0.0
      %3494 = vmatpush1.msra.mxu0 0.0
      %3495 = vmatprep.subr.mxu0 0.0
      %3496 = vmatpush1.msra.mxu0 0.0
      %3497 = vmatprep.subr.mxu0 0.0
      %3498 = vmatpush1.msra.mxu0 0.0
      %3499 = vmatprep.subr.mxu0 0.0
      %3500 = vmatpush1.msra.mxu0 0.0
      %3501 = vmatprep.subr.mxu0 0.0
      %3502 = vmatpush1.msra.mxu0 0.0
      %3503 = vmatprep.subr.mxu0 0.0
      %3504 = vmatpush1.msra.mxu0 0.0
      %3505 = vmatprep.subr.mxu0 0.0
      %3506 = vmatpush1.msra.mxu0 0.0
      %3507 = vmatprep.subr.mxu0 0.0
      %3508 = vmatpush1.msra.mxu0 0.0
      %3509 = vmatprep.subr.mxu0 0.0
      %3510 = vmatpush1.msra.mxu0 0.0
      %3511 = vmatprep.subr.mxu0 0.0
      %3512 = vmatpush1.msra.mxu0 0.0
      %3513 = vmatprep.subr.mxu0 0.0
      %3514 = vmatpush1.msra.mxu0 0.0
      %3515 = vmatprep.subr.mxu0 0.0
      %3516 = vmatpush1.msra.mxu0 0.0
      %3517 = vmatprep.subr.mxu0 0.0
      %3518 = vmatpush1.msra.mxu0 0.0
      %3519 = vmatprep.subr.mxu0 0.0
      %3520 = vmatpush1.msra.mxu0 0.0
      %3521 = vmatprep.subr.mxu0 0.0
      %3522 = vmatpush1.msra.mxu0 0.0
      %3523 = vmatprep.subr.mxu0 0.0
      %3524 = vmatpush1.msra.mxu0 0.0
      %3525 = vmatprep.subr.mxu0 0.0
      %3526 = vmatpush1.msra.mxu0 0.0
      %3527 = vmatprep.subr.mxu0 0.0
      %3528 = vmatpush1.msra.mxu0 0.0
      %3529 = vmatprep.subr.mxu0 0.0
      %3530 = vmatpush1.msra.mxu0 0.0
      %3531 = vmatprep.subr.mxu0 0.0
      %3532 = vmatpush1.msra.mxu0 0.0
      %3533 = vmatprep.subr.mxu0 0.0
      %3534 = vmatpush1.msra.mxu0 0.0
      %3535 = vmatprep.subr.mxu0 0.0
      %3536 = vmatpush1.msra.mxu0 0.0
      %3537 = vmatprep.subr.mxu0 0.0
      %3538 = vmatpush1.msra.mxu0 0.0
      %3539 = vmatprep.subr.mxu0 0.0
      %3540 = vmatpush1.msra.mxu0 0.0
      %3541 = vmatprep.subr.mxu0 0.0
      %3542 = vmatpush1.msra.mxu0 0.0
      %3543 = vmatprep.subr.mxu0 0.0
      %3544 = vmatpush1.msra.mxu0 0.0
      %3545 = vmatprep.subr.mxu0 0.0
      %3546 = vmatpush1.msra.mxu0 0.0
      %3547 = vmatprep.mubr.f32.mxu0 0.0
      %v3548 = vand.u32 %v1211, 4294901760
      %v3549 = vsub.f32 %v1211, %v3548
      %v3550 = vand.u32 %v3549, 4294901760
      %3551 = vmatmul.mubr.f32.gmra.mrb[0].mxu0 %v3550
      %v3552 = vpop.f32.mrb[0].mxu0
      %v3553 = vadd.f32 %v3471, %v3552
      %v3554 = vpop.f32.mrb[0].mxu0
      %3555 = vmatprep.mubr.f32.mxu0 0.0
      %v3556 = vand.u32 %v1214, 4294901760
      %v3557 = vsub.f32 %v1214, %v3556
      %v3558 = vand.u32 %v3557, 4294901760
      %3559 = vmatmul.mubr.f32.gmra.mrb[0].mxu0 %v3558
      %v3560 = vpop.f32.mrb[0].mxu0
      %v3561 = vadd.f32 %v3478, %v3560
      %v3562 = vpop.f32.mrb[0].mxu0
      %3563 = vdwg.mxu0
      %3564 = vmatprep.subr.mxu0 0.0
      %v3565 = vand.u32 %v1198, 4294901760
      %v3566 = vsub.f32 %v1198, %v3565
      %v3567 = vand.u32 %v3566, 4294901760
      %3568 = vmatpush1.msra.mxu0 %v3567
      %3569 = vmatprep.subr.mxu0 0.0
      %v3570 = vand.u32 %v1204, 4294901760
      %v3571 = vsub.f32 %v1204, %v3570
      %v3572 = vand.u32 %v3571, 4294901760
      %3573 = vmatpush1.msra.mxu0 %v3572
      %3574 = vmatprep.subr.mxu0 0.0
      %3575 = vmatpush1.msra.mxu0 0.0
      %3576 = vmatprep.subr.mxu0 0.0
      %3577 = vmatpush1.msra.mxu0 0.0
      %3578 = vmatprep.subr.mxu0 0.0
      %3579 = vmatpush1.msra.mxu0 0.0
      %3580 = vmatprep.subr.mxu0 0.0
      %3581 = vmatpush1.msra.mxu0 0.0
      %3582 = vmatprep.subr.mxu0 0.0
      %3583 = vmatpush1.msra.mxu0 0.0
      %3584 = vmatprep.subr.mxu0 0.0
      %3585 = vmatpush1.msra.mxu0 0.0
      %3586 = vmatprep.subr.mxu0 0.0
      %3587 = vmatpush1.msra.mxu0 0.0
      %3588 = vmatprep.subr.mxu0 0.0
      %3589 = vmatpush1.msra.mxu0 0.0
      %3590 = vmatprep.subr.mxu0 0.0
      %3591 = vmatpush1.msra.mxu0 0.0
      %3592 = vmatprep.subr.mxu0 0.0
      %3593 = vmatpush1.msra.mxu0 0.0
      %3594 = vmatprep.subr.mxu0 0.0
      %3595 = vmatpush1.msra.mxu0 0.0
      %3596 = vmatprep.subr.mxu0 0.0
      %3597 = vmatpush1.msra.mxu0 0.0
      %3598 = vmatprep.subr.mxu0 0.0
      %3599 = vmatpush1.msra.mxu0 0.0
      %3600 = vmatprep.subr.mxu0 0.0
      %3601 = vmatpush1.msra.mxu0 0.0
      %3602 = vmatprep.subr.mxu0 0.0
      %3603 = vmatpush1.msra.mxu0 0.0
      %3604 = vmatprep.subr.mxu0 0.0
      %3605 = vmatpush1.msra.mxu0 0.0
      %3606 = vmatprep.subr.mxu0 0.0
      %3607 = vmatpush1.msra.mxu0 0.0
      %3608 = vmatprep.subr.mxu0 0.0
      %3609 = vmatpush1.msra.mxu0 0.0
      %3610 = vmatprep.subr.mxu0 0.0
      %3611 = vmatpush1.msra.mxu0 0.0
      %3612 = vmatprep.subr.mxu0 0.0
      %3613 = vmatpush1.msra.mxu0 0.0
      %3614 = vmatprep.subr.mxu0 0.0
      %3615 = vmatpush1.msra.mxu0 0.0
      %3616 = vmatprep.subr.mxu0 0.0
      %3617 = vmatpush1.msra.mxu0 0.0
      %3618 = vmatprep.subr.mxu0 0.0
      %3619 = vmatpush1.msra.mxu0 0.0
      %3620 = vmatprep.subr.mxu0 0.0
      %3621 = vmatpush1.msra.mxu0 0.0
      %3622 = vmatprep.subr.mxu0 0.0
      %3623 = vmatpush1.msra.mxu0 0.0
      %3624 = vmatprep.subr.mxu0 0.0
      %3625 = vmatpush1.msra.mxu0 0.0
      %3626 = vmatprep.subr.mxu0 0.0
      %3627 = vmatpush1.msra.mxu0 0.0
      %3628 = vmatprep.subr.mxu0 0.0
      %3629 = vmatpush1.msra.mxu0 0.0
      %3630 = vmatprep.subr.mxu0 0.0
      %3631 = vmatpush1.msra.mxu0 0.0
      %3632 = vmatprep.subr.mxu0 0.0
      %3633 = vmatpush1.msra.mxu0 0.0
      %3634 = vmatprep.mubr.f32.mxu0 0.0
      %v3635 = vand.u32 %v1211, 4294901760
      %3636 = vmatmul.mubr.f32.gmra.mrb[0].mxu0 %v3635
      %v3637 = vpop.f32.mrb[0].mxu0
      %v3638 = vadd.f32 %v3553, %v3637
      %v3639 = vpop.f32.mrb[0].mxu0
      %3640 = vmatprep.mubr.f32.mxu0 0.0
      %v3641 = vand.u32 %v1214, 4294901760
      %3642 = vmatmul.mubr.f32.gmra.mrb[0].mxu0 %v3641
      %v3643 = vpop.f32.mrb[0].mxu0
      %v3644 = vadd.f32 %v3561, %v3643
      %v3645 = vpop.f32.mrb[0].mxu0
      %3646 = vdwg.mxu0
      %3647 = vmatprep.subr.mxu0 0.0
      %v3648 = vand.u32 %v1198, 4294901760
      %3649 = vmatpush1.msra.mxu0 %v3648
      %3650 = vmatprep.subr.mxu0 0.0
      %v3651 = vand.u32 %v1204, 4294901760
      %3652 = vmatpush1.msra.mxu0 %v3651
      %3653 = vmatprep.subr.mxu0 0.0
      %3654 = vmatpush1.msra.mxu0 0.0
      %3655 = vmatprep.subr.mxu0 0.0
      %3656 = vmatpush1.msra.mxu0 0.0
      %3657 = vmatprep.subr.mxu0 0.0
      %3658 = vmatpush1.msra.mxu0 0.0
      %3659 = vmatprep.subr.mxu0 0.0
      %3660 = vmatpush1.msra.mxu0 0.0
      %3661 = vmatprep.subr.mxu0 0.0
      %3662 = vmatpush1.msra.mxu0 0.0
      %3663 = vmatprep.subr.mxu0 0.0
      %3664 = vmatpush1.msra.mxu0 0.0
      %3665 = vmatprep.subr.mxu0 0.0
      %3666 = vmatpush1.msra.mxu0 0.0
      %3667 = vmatprep.subr.mxu0 0.0
      %3668 = vmatpush1.msra.mxu0 0.0
      %3669 = vmatprep.subr.mxu0 0.0
      %3670 = vmatpush1.msra.mxu0 0.0
      %3671 = vmatprep.subr.mxu0 0.0
      %3672 = vmatpush1.msra.mxu0 0.0
      %3673 = vmatprep.subr.mxu0 0.0
      %3674 = vmatpush1.msra.mxu0 0.0
      %3675 = vmatprep.subr.mxu0 0.0
      %3676 = vmatpush1.msra.mxu0 0.0
      %3677 = vmatprep.subr.mxu0 0.0
      %3678 = vmatpush1.msra.mxu0 0.0
      %3679 = vmatprep.subr.mxu0 0.0
      %3680 = vmatpush1.msra.mxu0 0.0
      %3681 = vmatprep.subr.mxu0 0.0
      %3682 = vmatpush1.msra.mxu0 0.0
      %3683 = vmatprep.subr.mxu0 0.0
      %3684 = vmatpush1.msra.mxu0 0.0
      %3685 = vmatprep.subr.mxu0 0.0
      %3686 = vmatpush1.msra.mxu0 0.0
      %3687 = vmatprep.subr.mxu0 0.0
      %3688 = vmatpush1.msra.mxu0 0.0
      %3689 = vmatprep.subr.mxu0 0.0
      %3690 = vmatpush1.msra.mxu0 0.0
      %3691 = vmatprep.subr.mxu0 0.0
      %3692 = vmatpush1.msra.mxu0 0.0
      %3693 = vmatprep.subr.mxu0 0.0
      %3694 = vmatpush1.msra.mxu0 0.0
      %3695 = vmatprep.subr.mxu0 0.0
      %3696 = vmatpush1.msra.mxu0 0.0
      %3697 = vmatprep.subr.mxu0 0.0
      %3698 = vmatpush1.msra.mxu0 0.0
      %3699 = vmatprep.subr.mxu0 0.0
      %3700 = vmatpush1.msra.mxu0 0.0
      %3701 = vmatprep.subr.mxu0 0.0
      %3702 = vmatpush1.msra.mxu0 0.0
      %3703 = vmatprep.subr.mxu0 0.0
      %3704 = vmatpush1.msra.mxu0 0.0
      %3705 = vmatprep.subr.mxu0 0.0
      %3706 = vmatpush1.msra.mxu0 0.0
      %3707 = vmatprep.subr.mxu0 0.0
      %3708 = vmatpush1.msra.mxu0 0.0
      %3709 = vmatprep.subr.mxu0 0.0
      %3710 = vmatpush1.msra.mxu0 0.0
      %3711 = vmatprep.subr.mxu0 0.0
      %3712 = vmatpush1.msra.mxu0 0.0
      %3713 = vmatprep.mubr.f32.mxu0 0.0
      %v3714 = vand.u32 %v1211, 4294901760
      %3715 = vmatmul.mubr.f32.gmra.mrb[0].mxu0 %v3714
      %v3716 = vpop.f32.mrb[0].mxu0
      %v3717 = vadd.f32 %v3638, %v3716
      %v3718 = vpop.f32.mrb[0].mxu0
      %3719 = vmatprep.mubr.f32.mxu0 0.0
      %v3720 = vand.u32 %v1214, 4294901760
      %3721 = vmatmul.mubr.f32.gmra.mrb[0].mxu0 %v3720
      %v3722 = vpop.f32.mrb[0].mxu0
      %v3723 = vadd.f32 %v3644, %v3722
      %v3724 = vpop.f32.mrb[0].mxu0
      %3725 = vdwg.mxu0
      %v3726 = vmul.f32 %v1709, %v1709
      %v3727 = vmul.f32 %v1715, %v1715
      %v3728 = vmul.f32 %v2211, %v2211
      %v3729 = vmul.f32 %v2217, %v2217
      %v3730 = vmul.f32 %v1709, %v2211
      %v3731 = vmul.f32 %v1715, %v2217
      %v3732 = vsub.f32 %v2713, %v3726
      %v3733 = vsub.f32 %v2719, %v3727
      %v3734 = vsub.f32 %v3215, %v3728
      %v3735 = vsub.f32 %v3221, %v3729
      %v3736 = vsub.f32 %v3717, %v3730
      %v3737 = vsub.f32 %v3723, %v3731
      %v3738 = vmul.f32 %v3730, 2.0
      %v3739 = vmul.f32 %v3731, 2.0
      %v3740 = vadd.f32 %v3738, 0.0001
      %v3741 = vadd.f32 %v3739, 0.0001
      %v3742 = vmul.f32 %v3736, 2.0
      %v3743 = vmul.f32 %v3737, 2.0
      %v3744 = vadd.f32 %v3742, 0.0009
      %v3745 = vadd.f32 %v3743, 0.0009
      %v3746 = vmul.f32 %v3740, %v3744
      %v3747 = vmul.f32 %v3741, %v3745
      %v3748 = vadd.f32 %v3726, %v3728
      %v3749 = vadd.f32 %v3727, %v3729
      %v3750 = vadd.f32 %v3748, 0.0001
      %v3751 = vadd.f32 %v3749, 0.0001
      %v3752 = vadd.f32 %v3732, %v3734
      %v3753 = vadd.f32 %v3733, %v3735
      %v3754 = vadd.f32 %v3752, 0.0009
      %v3755 = vadd.f32 %v3753, 0.0009
      %v3756 = vmul.f32 %v3750, %v3754
      %v3757 = vmul.f32 %v3751, %v3755
      %v3758 = vrcp.pop %v3756
      %v3759 = vrcp.pop %v3757
      %v3760 = vmul.f32 %v3756, %v3758
      %v3761 = vmul.f32 %v3757, %v3759
      %v3762 = vsub.f32 2.0, %v3760
      %v3763 = vsub.f32 2.0, %v3761
      %v3764 = vmul.f32 %v3758, %v3762
      %v3765 = vmul.f32 %v3759, %v3763
      %v3766 = vmul.f32 %v3746, %v3764
      %v3767 = vmul.f32 %v3747, %v3765
      %v3768 = vsel %vm224, %v3766, 0.0
      %v3769 = vsel %vm224, %v3767, 0.0
      %v3770 = vadd.f32 %v3768, %v3769
      %3771 = vadd.xlane.f32.xlu0 %v3770
      %v3772 = vpop.xlane.xlu0 %3771
      %v3773 = vrot.slane %v3772, 4
      %v3774 = vadd.f32 %v3772, %v3773
      %v3775 = vrot.slane %v3774, 2
      %v3776 = vadd.f32 %v3774, %v3775
      %v3777 = vrot.slane %v3776, 1
      %v3778 = vadd.f32 %v3776, %v3777
      %s3779 = vtos %v3778
      %v3780 = vstv %s3779
      %3781 = vst [vmem:[%s213] sm:$0x1] %v3780
      %p3782 = scmp.lt.s32.totalorder %s15, 1
      %s3783 = scalar_select %p3782, %s15, 1
      %s3784 = scalar_lea.vmem %s4, %s3783
      // Predicated region
      $region37: #{ssim_loss.1} parent=35 // pred_check
        %p3785 = pneg %p127
      $region38: #{ssim_loss.1} parent=35 // pred_check_branch
        %3787 = sbr.rel (%p3785) target = $region40
      $region39: #{ssim_loss.1} parent=35 // pred_region
        _
      $region40: #{ssim_loss.1} parent=35 // pred_fallthru
        _
    $region36: #{ssim_loss.1} parent=5 // pred_fallthru
      _
    %p3788 = scmp.le.s32.totalorder 2, %s10
    // Predicated region
    $region41: #{ssim_loss.1} parent=5 // pred_check
      %p3789 = pneg %p3788
    $region42: #{ssim_loss.1} parent=5 // pred_check_branch
      %3791 = sbr.rel (%p3789) target = $region44
    $region43: #{ssim_loss.1} parent=5 // pred_region
      %s3792 = ssub.s32 %s10, 2
      // Predicated region
      $region45: #{ssim_loss.1} parent=43 // pred_check
        %p3793 = pneg %p133
      $region46: #{ssim_loss.1} parent=43 // pred_check_branch
        %3795 = sbr.rel (%p3793) target = $region48
      $region47: #{ssim_loss.1} parent=43 // pred_region
        %p3796 = scmp.lt.s32.totalorder %s16, 1
        %s3797 = scalar_select %p3796, %s16, 1
        %s3798 = scalar_lea.vmem %s4, %s3797
      $region48: #{ssim_loss.1} parent=43 // pred_fallthru
        _
    $region44: #{ssim_loss.1} parent=5 // pred_fallthru
      _
  $region6: #{ssim_loss.1} parent=0 // loop_footer
    %s14 = sadd.s32 1, %s10
  $region7: #{ssim_loss.1} parent=0 // loop_footer_branch
    %9 = sbr.rel target = $region3
  $region8: #{ssim_loss.1} parent=0 // loop_exit
    _

</llo_original>
